<compile_context>
chip_gen: v7x
topology: tpu7x:2x2x1
jax: 0.10.0
libtpu: 0.0.40
codegen_flags: <defaults>
</compile_context>

<pallas_src>
import functools

import jax
import jax.numpy as jnp
import numpy as np
from jax.experimental import pallas as pl
from jax.experimental.pallas import tpu as pltpu

_HIGHEST = jax.lax.Precision.HIGHEST

# ----- module hyper-parameters (small, consistent with the module) -----------
IN_CH = 4        # Grapher in_channels
K_NBR = 4        # neighbors per vertex (k)
GROUPS = 4       # BasicConv grouped 1x1 conv
BATCH = 2
H_SP = 4         # H * W = 16 graph vertices
W_SP = 4
BN_EPS = 1e-5


def grapher_kernel(x_ref, p_ref, o_ref, *, k):
    """Fused Grapher forward for one batch element (channel-major layout).

    x_ref : (C, N)      f32  original input (also the residual shortcut)
    p_ref : (4C, 2C+1)  f32  packed parameters:
              rows [0 , C )  : [ W1_eff | b1_eff | pad ]  fc1  (BN folded)
              rows [C , 3C)  : [ Wg_x  Wg_d | b_g ]       graph conv
              rows [3C, 4C)  : [ W2_eff     | b2_eff ]    fc2  (BN folded)
    o_ref : (C, N)      f32  Grapher output
    """
    x = x_ref[...]
    C, N = x.shape
    Cg = 2 * C
    P = p_ref[...]

    W1 = P[0:C, 0:C]
    b1 = P[0:C, C:C + 1]
    Wg = P[C:C + Cg, 0:Cg]
    bg = P[C:C + Cg, Cg:Cg + 1]
    W2 = P[C + Cg:2 * C + Cg, 0:Cg]
    b2 = P[C + Cg:2 * C + Cg, Cg:Cg + 1]

    # --- fc1: 1x1 conv + BN (scale/shift folded host-side) ------------------
    y = jnp.dot(W1, x, preferred_element_type=jnp.float32,
                precision=_HIGHEST) + b1                          # (C, N)

    # --- DenseDilatedKnnGraph: L2-normalize + pairwise distance -------------
    sq_y = jnp.sum(y * y, axis=0, keepdims=True)                  # (1, N)
    yn = y * jax.lax.rsqrt(jnp.maximum(sq_y, 1e-24))              # F.normalize
    ynT = yn.T                                                    # (N, C)
    inner = jnp.dot(ynT, yn, preferred_element_type=jnp.float32,
                    precision=_HIGHEST)                           # (N, N)
    sq_row = jnp.sum(ynT * ynT, axis=1, keepdims=True)            # (N, 1)
    sq_col = jnp.sum(yn * yn, axis=0, keepdims=True)              # (1, N)
    dist = sq_row - 2.0 * inner + sq_col                          # dist[j, m]

    # --- MRConv2d: iterative top-k selection fused with the running max -----
    # Each step: one-hot(argmin column distance) -> exact MXU gather of x_j ->
    # running max of (x_j - x_i).  Exact distance ties (measure-zero for
    # continuous inputs) would gather a sum of the tied neighbors.
    d = jnp.full((C, N), -jnp.inf, dtype=jnp.float32)
    for _ in range(k):
        nearest = dist == jnp.min(dist, axis=0, keepdims=True)    # (N, N) one-hot columns
        xj = jnp.dot(y, nearest.astype(jnp.float32),
                     preferred_element_type=jnp.float32,
                     precision=_HIGHEST)                          # (C, N) exact gather
        d = jnp.maximum(d, xj - y)
        dist = jnp.where(nearest, jnp.float32(1e30), dist)        # exclude selected

    # --- graph-conv grouped 1x1 conv + bias + ReLU (single fused matmul) ----
    feat = jnp.concatenate([y, d], axis=0)                        # (2C, N)
    g = jnp.dot(Wg, feat, preferred_element_type=jnp.float32,
                precision=_HIGHEST) + bg                          # (2C, N)
    g = jnp.maximum(g, 0.0)                                       # act_cfg ReLU

    # --- fc2: 1x1 conv + BN (folded) + residual ------------------------------
    z = jnp.dot(W2, g, preferred_element_type=jnp.float32,
                precision=_HIGHEST) + b2                          # (C, N)
    o_ref[...] = z + x                                            # drop_path = Identity


# ---------------- one-time host-side preparation (out of the call path) ------

def prepare_params(w_fc1, b_fc1, bn1, w_g, b_g, w_fc2, b_fc2, bn2,
                   groups=GROUPS, eps=BN_EPS):
    """Fold eval-mode BN into fc1/fc2, expand the grouped graph-conv weight to
    dense and split the interleaved [x, max_rel] input channels, then pack
    everything into ONE (4C, 2C+1) f32 slab (single parameter DMA).  Pure
    numpy, runs once at module init."""
    w1 = np.asarray(w_fc1, np.float32)[:, :, 0, 0]       # (C, C)
    wg = np.asarray(w_g, np.float32)[:, :, 0, 0]         # (2C, 2C/groups)
    w2 = np.asarray(w_fc2, np.float32)[:, :, 0, 0]       # (C, 2C)
    b1 = np.asarray(b_fc1, np.float32)
    bg = np.asarray(b_g, np.float32)
    b2 = np.asarray(b_fc2, np.float32)
    g1, be1, m1, v1 = (np.asarray(a, np.float32) for a in bn1)
    g2, be2, m2, v2 = (np.asarray(a, np.float32) for a in bn2)

    C = w1.shape[0]
    Cg = wg.shape[0]                                      # == 2C in Grapher

    s1 = g1 / np.sqrt(v1 + eps)
    W1_eff = s1[:, None] * w1
    b1_eff = s1 * (b1 - m1) + be1
    s2 = g2 / np.sqrt(v2 + eps)
    W2_eff = s2[:, None] * w2
    b2_eff = s2 * (b2 - m2) + be2

    icg = 2 * C // groups
    ocg = Cg // groups
    w_full = np.zeros((Cg, 2 * C), np.float32)
    for g in range(groups):
        w_full[g * ocg:(g + 1) * ocg, g * icg:(g + 1) * icg] = wg[g * ocg:(g + 1) * ocg]
    # interleaved input channels [x0, d0, x1, d1, ...] -> fused [Wg_x | Wg_d]
    Wg_fused = np.concatenate([w_full[:, 0::2], w_full[:, 1::2]], axis=1)  # (2C, 2C)

    rows = 2 * C + Cg
    slab = np.zeros((rows, 2 * C + 1), np.float32)
    slab[0:C, 0:C] = W1_eff
    slab[0:C, C] = b1_eff
    slab[C:C + Cg, 0:2 * C] = Wg_fused
    slab[C:C + Cg, 2 * C] = bg
    slab[C + Cg:rows, 0:2 * C] = W2_eff
    slab[C + Cg:rows, 2 * C] = b2_eff
    return jnp.asarray(slab)


# ---------------- thin call-path wrapper --------------------------------------

@functools.partial(jax.jit, static_argnames=("k",))
def grapher_forward(x, params, *, k=K_NBR):
    """x: (B, C, H, W) f32; params: packed (4C, 2C+1) slab.  Returns (B, C, H, W)."""
    B, C, H, W = x.shape
    N = H * W
    x3 = x.reshape(B, C, N).astype(jnp.float32)           # free metadata reshape
    out = pl.pallas_call(
        functools.partial(grapher_kernel, k=k),
        grid=(B,),
        in_specs=[pl.BlockSpec((None, C, N), lambda b: (b, 0, 0)),
                  pl.BlockSpec(params.shape, lambda b: (0, 0))],
        out_specs=pl.BlockSpec((None, C, N), lambda b: (b, 0, 0)),
        out_shape=jax.ShapeDtypeStruct((B, C, N), jnp.float32),
        compiler_params=pltpu.CompilerParams(
            dimension_semantics=("parallel",)),
    )(x3, params)
    return out.reshape(B, C, H, W)


# ---------------- pure-JAX reference (mirrors the PyTorch forward) ------------

def grapher_reference(x, raw, *, k=K_NBR, groups=GROUPS, eps=BN_EPS):
    """Eval-mode Grapher: fc1+BN -> KNN graph -> MRConv2d (grouped conv + ReLU)
    -> fc2+BN -> + shortcut.  (r=1, dilation=1, relative_pos=None, drop_path=0)."""
    B, C, H, W = x.shape
    N = H * W
    shortcut = x

    def bn(t, g, b, m, v):
        return ((t - m[None, :, None, None])
                * (g / jnp.sqrt(v + eps))[None, :, None, None]
                + b[None, :, None, None])

    # fc1
    y = jnp.einsum('oc,bchw->bohw', raw['w1'][:, :, 0, 0], x,
                   precision=_HIGHEST) + raw['b1'][None, :, None, None]
    y = bn(y, *raw['bn1'])

    # DyGraphConv2d (r=1 branch): dilated KNN on L2-normalized features
    xs = y.reshape(B, C, N)
    norm = jnp.sqrt(jnp.sum(xs * xs, axis=1, keepdims=True))
    xn = xs / jnp.maximum(norm, 1e-12)
    xt = jnp.transpose(xn, (0, 2, 1))                              # (B, N, C)
    inner = -2.0 * jnp.einsum('bmc,bnc->bmn', xt, xt, precision=_HIGHEST)
    sq = jnp.sum(xt * xt, axis=-1, keepdims=True)
    dist = sq + inner + jnp.transpose(sq, (0, 2, 1))
    _, nn_idx = jax.lax.top_k(-dist, k)                            # (B, N, K)

    # MRConv2d: max-relative aggregation + channel interleave
    x_j = jax.vmap(lambda xb, ib: xb[:, ib])(xs, nn_idx)           # (B, C, N, K)
    d = jnp.max(x_j - xs[..., None], axis=-1)                      # (B, C, N)
    feat = jnp.stack([xs, d], axis=2).reshape(B, 2 * C, N)

    # grouped 1x1 conv + bias + ReLU
    wg = raw['wg'][:, :, 0, 0]
    Cg = wg.shape[0]
    icg = 2 * C // groups
    ocg = Cg // groups
    parts = [jnp.einsum('oc,bcn->bon', wg[g * ocg:(g + 1) * ocg],
                        feat[:, g * icg:(g + 1) * icg], precision=_HIGHEST)
             for g in range(groups)]
    g_out = jnp.concatenate(parts, axis=1) + raw['bg'][None, :, None]
    g_out = jnp.maximum(g_out, 0.0).reshape(B, Cg, H, W)

    # fc2 + BN + residual
    z = jnp.einsum('oc,bchw->bohw', raw['w2'][:, :, 0, 0], g_out,
                   precision=_HIGHEST) + raw['b2'][None, :, None, None]
    z = bn(z, *raw['bn2'])
    return z + shortcut


if __name__ == "__main__":
    key = jax.random.PRNGKey(0)
    ks = jax.random.split(key, 16)
    C, Cg = IN_CH, 2 * IN_CH

    x = jax.random.normal(ks[0], (BATCH, C, H_SP, W_SP), dtype=jnp.float32)

    # fc1: Conv2d(C, C, 1, bias=True) + BN(C)   (eval-mode running stats)
    w1 = 0.4 * jax.random.normal(ks[1], (C, C, 1, 1), jnp.float32)
    b1 = 0.1 * jax.random.normal(ks[2], (C,), jnp.float32)
    bn1 = (1.0 + 0.1 * jax.random.normal(ks[3], (C,), jnp.float32),
           0.1 * jax.random.normal(ks[4], (C,), jnp.float32),
           0.1 * jax.random.normal(ks[5], (C,), jnp.float32),
           0.5 + jax.random.uniform(ks[6], (C,), jnp.float32))

    # graph conv: Conv2d(2C, 2C, 1, bias=True, groups=4) + ReLU
    wg = 0.3 * jax.random.normal(ks[7], (Cg, 2 * C // GROUPS, 1, 1), jnp.float32)
    bg = 0.1 * jax.random.normal(ks[8], (Cg,), jnp.float32)

    # fc2: Conv2d(2C, C, 1, bias=True) + BN(C)
    w2 = 0.3 * jax.random.normal(ks[9], (C, Cg, 1, 1), jnp.float32)
    b2 = 0.1 * jax.random.normal(ks[10], (C,), jnp.float32)
    bn2 = (1.0 + 0.1 * jax.random.normal(ks[11], (C,), jnp.float32),
           0.1 * jax.random.normal(ks[12], (C,), jnp.float32),
           0.1 * jax.random.normal(ks[13], (C,), jnp.float32),
           0.5 + jax.random.uniform(ks[14], (C,), jnp.float32))

    # one-time preprocessing (module init side)
    params = prepare_params(w1, b1, bn1, wg, bg, w2, b2, bn2)

    out = grapher_forward(x, params, k=K_NBR)
    out = jax.block_until_ready(out)

    raw = dict(w1=w1, b1=b1, bn1=bn1, wg=wg, bg=bg, w2=w2, b2=b2, bn2=bn2)
    ref = jax.block_until_ready(grapher_reference(x, raw, k=K_NBR))

    np.testing.assert_allclose(np.asarray(out), np.asarray(ref),
                               rtol=1e-5, atol=1e-5)
    print("KERNEL_OK")
</pallas_src>

<mosaic_0001>
module attributes {stable_mosaic.version = 11 : i64} {
  func.func @grapher_kernel(%arg0: i32, %arg1: memref<1x4x16xf32, #tpu.memory_space<vmem>>, %arg2: memref<16x9xf32, #tpu.memory_space<vmem>>, %arg3: memref<1x4x16xf32, #tpu.memory_space<vmem>>) attributes {dimension_semantics = [#tpu.dimension_semantics<parallel>], iteration_bounds = array<i64: 2>, scalar_prefetch = 0 : i64, scratch_operands = 0 : i64, tpu.core_type = #tpu.core_type<tc>, window_params = [{transform_indices = @transform_0, window_bounds = array<i64: 1, 4, 16>}, {pipeline_mode = #tpu.pipeline_mode<synchronous>, transform_indices = @transform_1, window_bounds = array<i64: 16, 9>}, {transform_indices = @transform_2, window_bounds = array<i64: 1, 4, 16>}]} {
    %c0 = arith.constant 0 : index
    %c0_0 = arith.constant 0 : index
    %c0_1 = arith.constant 0 : index
    %0 = vector.load %arg1[%c0, %c0_0, %c0_1] : memref<1x4x16xf32, #tpu.memory_space<vmem>>, vector<1x4x16xf32>
    %1 = vector.shape_cast %0 : vector<1x4x16xf32> to vector<4x16xf32>
    %c0_2 = arith.constant 0 : index
    %c0_3 = arith.constant 0 : index
    %2 = vector.load %arg2[%c0_2, %c0_3] : memref<16x9xf32, #tpu.memory_space<vmem>>, vector<16x9xf32>
    %3 = vector.extract_strided_slice %2 {offsets = [0, 0], sizes = [4, 4], strides = [1, 1]} : vector<16x9xf32> to vector<4x4xf32>
    %4 = vector.extract_strided_slice %2 {offsets = [0, 4], sizes = [4, 1], strides = [1, 1]} : vector<16x9xf32> to vector<4x1xf32>
    %5 = vector.extract_strided_slice %2 {offsets = [4, 0], sizes = [8, 8], strides = [1, 1]} : vector<16x9xf32> to vector<8x8xf32>
    %6 = vector.extract_strided_slice %2 {offsets = [4, 8], sizes = [8, 1], strides = [1, 1]} : vector<16x9xf32> to vector<8x1xf32>
    %7 = vector.extract_strided_slice %2 {offsets = [12, 0], sizes = [4, 8], strides = [1, 1]} : vector<16x9xf32> to vector<4x8xf32>
    %8 = vector.extract_strided_slice %2 {offsets = [12, 8], sizes = [4, 1], strides = [1, 1]} : vector<16x9xf32> to vector<4x1xf32>
    %cst = arith.constant dense<0.000000e+00> : vector<4x16xf32>
    %9 = tpu.matmul %3, %1, %cst {dimension_numbers = #tpu.dot_dimension_numbers<[1], [0], [0], [1], [0, 0, 1, 1], [], []>, precision = #tpu.contract_precision<fp32>} : vector<4x4xf32>, vector<4x16xf32>, vector<4x16xf32> -> vector<4x16xf32>
    %10 = vector.broadcast %4 : vector<4x1xf32> to vector<4x16xf32>
    %11 = arith.addf %9, %10 : vector<4x16xf32>
    %12 = arith.mulf %11, %11 : vector<4x16xf32>
    %cst_4 = arith.constant dense<0.000000e+00> : vector<16xf32>
    %13 = vector.multi_reduction <add>, %12, %cst_4 [0] : vector<4x16xf32> to vector<16xf32>
    %14 = vector.shape_cast %13 : vector<16xf32> to vector<1x16xf32>
    %cst_5 = arith.constant 1.000000e-24 : f32
    %15 = vector.broadcast %cst_5 : f32 to vector<1x16xf32>
    %16 = arith.maximumf %14, %15 : vector<1x16xf32>
    %17 = math.rsqrt %16 : vector<1x16xf32>
    %18 = vector.broadcast %17 : vector<1x16xf32> to vector<4x16xf32>
    %19 = arith.mulf %11, %18 : vector<4x16xf32>
    %20 = tpu.transpose %19, [1, 0] : vector<4x16xf32> -> vector<16x4xf32>
    %cst_6 = arith.constant dense<0.000000e+00> : vector<16x16xf32>
    %21 = tpu.matmul %20, %19, %cst_6 {dimension_numbers = #tpu.dot_dimension_numbers<[1], [0], [0], [1], [0, 0, 1, 1], [], []>, precision = #tpu.contract_precision<fp32>} : vector<16x4xf32>, vector<4x16xf32>, vector<16x16xf32> -> vector<16x16xf32>
    %22 = arith.mulf %20, %20 : vector<16x4xf32>
    %cst_7 = arith.constant dense<0.000000e+00> : vector<16xf32>
    %23 = vector.multi_reduction <add>, %22, %cst_7 [1] : vector<16x4xf32> to vector<16xf32>
    %24 = vector.shape_cast %23 : vector<16xf32> to vector<16x1xf32>
    %25 = arith.mulf %19, %19 : vector<4x16xf32>
    %cst_8 = arith.constant dense<0.000000e+00> : vector<16xf32>
    %26 = vector.multi_reduction <add>, %25, %cst_8 [0] : vector<4x16xf32> to vector<16xf32>
    %27 = vector.shape_cast %26 : vector<16xf32> to vector<1x16xf32>
    %cst_9 = arith.constant 2.000000e+00 : f32
    %28 = vector.broadcast %cst_9 : f32 to vector<16x16xf32>
    %29 = arith.mulf %28, %21 : vector<16x16xf32>
    %30 = vector.broadcast %24 : vector<16x1xf32> to vector<16x16xf32>
    %31 = arith.subf %30, %29 : vector<16x16xf32>
    %32 = vector.broadcast %27 : vector<1x16xf32> to vector<16x16xf32>
    %33 = arith.addf %31, %32 : vector<16x16xf32>
    %cst_10 = arith.constant 0xFF800000 : f32
    %34 = vector.broadcast %cst_10 : f32 to vector<4x16xf32>
    %cst_11 = arith.constant dense<0x7F800000> : vector<16xf32>
    %35 = vector.multi_reduction <minimumf>, %33, %cst_11 [0] : vector<16x16xf32> to vector<16xf32>
    %36 = vector.shape_cast %35 : vector<16xf32> to vector<1x16xf32>
    %37 = vector.broadcast %36 : vector<1x16xf32> to vector<16x16xf32>
    %38 = arith.cmpf oeq, %33, %37 : vector<16x16xf32>
    %39 = arith.extui %38 : vector<16x16xi1> to vector<16x16xi32>
    %40 = arith.sitofp %39 : vector<16x16xi32> to vector<16x16xf32>
    %cst_12 = arith.constant dense<0.000000e+00> : vector<4x16xf32>
    %41 = tpu.matmul %11, %40, %cst_12 {dimension_numbers = #tpu.dot_dimension_numbers<[1], [0], [0], [1], [0, 0, 1, 1], [], []>, precision = #tpu.contract_precision<fp32>} : vector<4x16xf32>, vector<16x16xf32>, vector<4x16xf32> -> vector<4x16xf32>
    %42 = arith.subf %41, %11 : vector<4x16xf32>
    %43 = arith.maximumf %34, %42 : vector<4x16xf32>
    %cst_13 = arith.constant 1.000000e+30 : f32
    %44 = vector.broadcast %cst_13 : f32 to vector<16x16xf32>
    %45 = arith.select %38, %44, %33 : vector<16x16xi1>, vector<16x16xf32>
    %cst_14 = arith.constant dense<0x7F800000> : vector<16xf32>
    %46 = vector.multi_reduction <minimumf>, %45, %cst_14 [0] : vector<16x16xf32> to vector<16xf32>
    %47 = vector.shape_cast %46 : vector<16xf32> to vector<1x16xf32>
    %48 = vector.broadcast %47 : vector<1x16xf32> to vector<16x16xf32>
    %49 = arith.cmpf oeq, %45, %48 : vector<16x16xf32>
    %50 = arith.extui %49 : vector<16x16xi1> to vector<16x16xi32>
    %51 = arith.sitofp %50 : vector<16x16xi32> to vector<16x16xf32>
    %cst_15 = arith.constant dense<0.000000e+00> : vector<4x16xf32>
    %52 = tpu.matmul %11, %51, %cst_15 {dimension_numbers = #tpu.dot_dimension_numbers<[1], [0], [0], [1], [0, 0, 1, 1], [], []>, precision = #tpu.contract_precision<fp32>} : vector<4x16xf32>, vector<16x16xf32>, vector<4x16xf32> -> vector<4x16xf32>
    %53 = arith.subf %52, %11 : vector<4x16xf32>
    %54 = arith.maximumf %43, %53 : vector<4x16xf32>
    %cst_16 = arith.constant 1.000000e+30 : f32
    %55 = vector.broadcast %cst_16 : f32 to vector<16x16xf32>
    %56 = arith.select %49, %55, %45 : vector<16x16xi1>, vector<16x16xf32>
    %cst_17 = arith.constant dense<0x7F800000> : vector<16xf32>
    %57 = vector.multi_reduction <minimumf>, %56, %cst_17 [0] : vector<16x16xf32> to vector<16xf32>
    %58 = vector.shape_cast %57 : vector<16xf32> to vector<1x16xf32>
    %59 = vector.broadcast %58 : vector<1x16xf32> to vector<16x16xf32>
    %60 = arith.cmpf oeq, %56, %59 : vector<16x16xf32>
    %61 = arith.extui %60 : vector<16x16xi1> to vector<16x16xi32>
    %62 = arith.sitofp %61 : vector<16x16xi32> to vector<16x16xf32>
    %cst_18 = arith.constant dense<0.000000e+00> : vector<4x16xf32>
    %63 = tpu.matmul %11, %62, %cst_18 {dimension_numbers = #tpu.dot_dimension_numbers<[1], [0], [0], [1], [0, 0, 1, 1], [], []>, precision = #tpu.contract_precision<fp32>} : vector<4x16xf32>, vector<16x16xf32>, vector<4x16xf32> -> vector<4x16xf32>
    %64 = arith.subf %63, %11 : vector<4x16xf32>
    %65 = arith.maximumf %54, %64 : vector<4x16xf32>
    %cst_19 = arith.constant 1.000000e+30 : f32
    %66 = vector.broadcast %cst_19 : f32 to vector<16x16xf32>
    %67 = arith.select %60, %66, %56 : vector<16x16xi1>, vector<16x16xf32>
    %cst_20 = arith.constant dense<0x7F800000> : vector<16xf32>
    %68 = vector.multi_reduction <minimumf>, %67, %cst_20 [0] : vector<16x16xf32> to vector<16xf32>
    %69 = vector.shape_cast %68 : vector<16xf32> to vector<1x16xf32>
    %70 = vector.broadcast %69 : vector<1x16xf32> to vector<16x16xf32>
    %71 = arith.cmpf oeq, %67, %70 : vector<16x16xf32>
    %72 = arith.extui %71 : vector<16x16xi1> to vector<16x16xi32>
    %73 = arith.sitofp %72 : vector<16x16xi32> to vector<16x16xf32>
    %cst_21 = arith.constant dense<0.000000e+00> : vector<4x16xf32>
    %74 = tpu.matmul %11, %73, %cst_21 {dimension_numbers = #tpu.dot_dimension_numbers<[1], [0], [0], [1], [0, 0, 1, 1], [], []>, precision = #tpu.contract_precision<fp32>} : vector<4x16xf32>, vector<16x16xf32>, vector<4x16xf32> -> vector<4x16xf32>
    %75 = arith.subf %74, %11 : vector<4x16xf32>
    %76 = arith.maximumf %65, %75 : vector<4x16xf32>
    %77 = tpu.concatenate %11, %76 in 0 : vector<4x16xf32>, vector<4x16xf32> -> vector<8x16xf32>
    %cst_22 = arith.constant dense<0.000000e+00> : vector<8x16xf32>
    %78 = tpu.matmul %5, %77, %cst_22 {dimension_numbers = #tpu.dot_dimension_numbers<[1], [0], [0], [1], [0, 0, 1, 1], [], []>, precision = #tpu.contract_precision<fp32>} : vector<8x8xf32>, vector<8x16xf32>, vector<8x16xf32> -> vector<8x16xf32>
    %79 = vector.broadcast %6 : vector<8x1xf32> to vector<8x16xf32>
    %80 = arith.addf %78, %79 : vector<8x16xf32>
    %cst_23 = arith.constant 0.000000e+00 : f32
    %81 = vector.broadcast %cst_23 : f32 to vector<8x16xf32>
    %82 = arith.maximumf %80, %81 : vector<8x16xf32>
    %cst_24 = arith.constant dense<0.000000e+00> : vector<4x16xf32>
    %83 = tpu.matmul %7, %82, %cst_24 {dimension_numbers = #tpu.dot_dimension_numbers<[1], [0], [0], [1], [0, 0, 1, 1], [], []>, precision = #tpu.contract_precision<fp32>} : vector<4x8xf32>, vector<8x16xf32>, vector<4x16xf32> -> vector<4x16xf32>
    %84 = vector.broadcast %8 : vector<4x1xf32> to vector<4x16xf32>
    %85 = arith.addf %83, %84 : vector<4x16xf32>
    %86 = arith.addf %85, %1 : vector<4x16xf32>
    %c0_25 = arith.constant 0 : index
    %c0_26 = arith.constant 0 : index
    %c0_27 = arith.constant 0 : index
    %87 = vector.load %arg3[%c0_25, %c0_26, %c0_27] : memref<1x4x16xf32, #tpu.memory_space<vmem>>, vector<1x4x16xf32>
    %88 = vector.shape_cast %87 : vector<1x4x16xf32> to vector<4x16xf32>
    %89 = vector.shape_cast %86 : vector<4x16xf32> to vector<1x4x16xf32>
    tpu.vector_store %arg3[%c0_25, %c0_26, %c0_27], %89 {strides = array<i32>} : memref<1x4x16xf32, #tpu.memory_space<vmem>>, vector<1x4x16xf32>,
    return
  }
  func.func @transform_0(%arg0: i32) -> (i32, i32, i32) {
    %c0_i32 = arith.constant 0 : i32
    %c0_i32_0 = arith.constant 0 : i32
    %c0_i32_1 = arith.constant 0 : i32
    return %arg0, %c0_i32, %c0_i32_0 : i32, i32, i32
  }
  func.func @transform_1(%arg0: i32) -> (i32, i32) {
    %c0_i32 = arith.constant 0 : i32
    %c0_i32_0 = arith.constant 0 : i32
    %c0_i32_1 = arith.constant 0 : i32
    return %c0_i32, %c0_i32_0 : i32, i32
  }
  func.func @transform_2(%arg0: i32) -> (i32, i32, i32) {
    %c0_i32 = arith.constant 0 : i32
    %c0_i32_0 = arith.constant 0 : i32
    %c0_i32_1 = arith.constant 0 : i32
    return %arg0, %c0_i32, %c0_i32_0 : i32, i32, i32
  }
}

</mosaic_0001>

<llo_original>
// kernel: grapher_forward.1
$region0: #{grapher_forward.1}
  #allocation0 [shape = 'u32[]', space=smem, size = 0x4, offset = 0x4, fixed_abs, tag = 'smem constant byte address 0x4 - core index']
  #allocation1 [shape = 'u32[144,128]{1,0:T(1,128)}', space=vmem, size = 0x12000, scoped, tag = 'internal scratch']
  %s0 = inlined_call_operand.vmem [shape: f32[2,4,16], index: 0, kind: input, shape index: {}]
  %s1 = inlined_call_operand.vmem [shape: f32[16,9], index: 1, kind: input, shape index: {}]
  %s2 = inlined_call_operand.vmem [shape: f32[2,4,16], index: 2, kind: output, shape index: {}]
  %s3 = sld [smem:[#allocation0]]
  $region41: #{grapher_forward.1} parent=0
    _
  %s5 = ssub.s32 1, %s3
  %s6 = scalar_select 0, %s5, %s3
  loop: start=0, step=1, limit=4
  $region2: #{grapher_forward.1} parent=0 // loop_pre_header
    _
  $region3: #{grapher_forward.1} parent=0 // loop_header
    %s8 = sphi 0, %s12
    %p9 = scmp.ge.s32.totalorder %s8, 4
    %s18 = sphi 0, %s20
    %s21 = sphi 0, %s18
    %s22 = sphi 0, %s21
    %s38 = sphi 0, %s22
    %s42 = sphi 0, %s42
    %s44 = sphi 0, %s42
    %s45 = sphi 0, %s44
    %s59 = sphi 0, %s45
    %s65 = sphi 0, %s67
    %s68 = sphi 0, %s65
    %s69 = sphi 0, %s68
    %s85 = sphi 0, %s69
  $region4: #{grapher_forward.1} parent=0 // loop_header_branch
    %11 = sbr.rel (%p9) target = $region8
  $region5: #{grapher_forward.1} parent=0 // loop_body
    %s13 = ssub.s32 %s8, 1
    %s14 = ssub.s32 %s8, 2
    %s15 = sadd.s32 %s8, 1
    %s16 = ssub.s32 %s8, %s15
    %p17 = scmp.eq.s32.totalorder %s16, 0
    %s19 = sadd.s32 %s18, 1
    %s20 = scalar_select %p17, %s18, %s19
    %p23 = pneg %p17
    %p24 = scmp.eq.s32.totalorder %s8, 1
    %p25 = por %p23, %p24
    %p26 = scmp.ne.s32.totalorder %s18, %s21
    %p27 = scmp.eq.s32.totalorder %s8, 0
    %p28 = por %p26, %p27
    %p29 = scmp.ne.s32.totalorder %s18, %s21
    %p30 = scmp.eq.s32.totalorder %s13, 1
    %p31 = por %p29, %p30
    %p32 = scmp.ne.s32.totalorder %s21, %s22
    %p33 = scmp.eq.s32.totalorder %s13, 0
    %p34 = por %p32, %p33
    %p35 = scmp.ne.s32.totalorder %s21, %s22
    %p36 = scmp.eq.s32.totalorder %s14, 1
    %p37 = por %p35, %p36
    %p39 = scmp.ne.s32.totalorder %s22, %s38
    %p40 = scmp.eq.s32.totalorder %s14, 0
    %p41 = por %p39, %p40
    %s43 = sadd.s32 %s42, 1
    %p46 = scmp.eq.s32.totalorder %s8, 1
    %p47 = scmp.ne.s32.totalorder %s42, %s44
    %p48 = scmp.eq.s32.totalorder %s8, 0
    %p49 = por %p47, %p48
    %p50 = scmp.ne.s32.totalorder %s42, %s44
    %p51 = scmp.eq.s32.totalorder %s13, 1
    %p52 = por %p50, %p51
    %p53 = scmp.ne.s32.totalorder %s44, %s45
    %p54 = scmp.eq.s32.totalorder %s13, 0
    %p55 = por %p53, %p54
    %p56 = scmp.ne.s32.totalorder %s44, %s45
    %p57 = scmp.eq.s32.totalorder %s14, 1
    %p58 = por %p56, %p57
    %p60 = scmp.ne.s32.totalorder %s45, %s59
    %p61 = scmp.eq.s32.totalorder %s14, 0
    %p62 = por %p60, %p61
    %s63 = ssub.s32 %s8, %s15
    %p64 = scmp.eq.s32.totalorder %s63, 0
    %s66 = sadd.s32 %s65, 1
    %s67 = scalar_select %p64, %s65, %s66
    %p70 = pneg %p64
    %p71 = scmp.eq.s32.totalorder %s8, 1
    %p72 = por %p70, %p71
    %p73 = scmp.ne.s32.totalorder %s65, %s68
    %p74 = scmp.eq.s32.totalorder %s8, 0
    %p75 = por %p73, %p74
    %p76 = scmp.ne.s32.totalorder %s65, %s68
    %p77 = scmp.eq.s32.totalorder %s13, 1
    %p78 = por %p76, %p77
    %p79 = scmp.ne.s32.totalorder %s68, %s69
    %p80 = scmp.eq.s32.totalorder %s13, 0
    %p81 = por %p79, %p80
    %p82 = scmp.ne.s32.totalorder %s68, %s69
    %p83 = scmp.eq.s32.totalorder %s14, 1
    %p84 = por %p82, %p83
    %p86 = scmp.ne.s32.totalorder %s69, %s85
    %p87 = scmp.eq.s32.totalorder %s14, 0
    %p88 = por %p86, %p87
    %p89 = scmp.le.s32.totalorder 1, %s8
    %p90 = scmp.lt.s32.totalorder %s8, 3
    %p91 = pnand %p89, %p90
    %p92 = pneg %p91
    // Predicated region
    $region9: #{grapher_forward.1} parent=5 // pred_check
      _
    $region10: #{grapher_forward.1} parent=5 // pred_check_branch
      %94 = sbr.rel (%p91) target = $region12
    $region11: #{grapher_forward.1} parent=5 // pred_region
      %s95 = ssub.s32 %s8, 1
      // Predicated region
      $region13: #{grapher_forward.1} parent=11 // pred_check
        %p96 = pneg %p55
      $region14: #{grapher_forward.1} parent=11 // pred_check_branch
        %98 = sbr.rel (%p96) target = $region16
      $region15: #{grapher_forward.1} parent=11 // pred_region
        _
      $region16: #{grapher_forward.1} parent=11 // pred_fallthru
        _
    $region12: #{grapher_forward.1} parent=5 // pred_fallthru
      _
    %p99 = scmp.lt.s32.totalorder %s8, 2
    // Predicated region
    $region17: #{grapher_forward.1} parent=5 // pred_check
      %p100 = pneg %p99
    $region18: #{grapher_forward.1} parent=5 // pred_check_branch
      %102 = sbr.rel (%p100) target = $region20
    $region19: #{grapher_forward.1} parent=5 // pred_region
      // Predicated region
      $region21: #{grapher_forward.1} parent=19 // pred_check
        %p103 = pneg %p28
      $region22: #{grapher_forward.1} parent=19 // pred_check_branch
        %105 = sbr.rel (%p103) target = $region24
      $region23: #{grapher_forward.1} parent=19 // pred_region
        %p106 = scmp.lt.s32.totalorder %s8, 1
        %s107 = scalar_select %p106, %s8, 1
        %s108 = smul.addr %s107, 4
        %s109 = scalar_lea.vmem %s0, %s108
      $region24: #{grapher_forward.1} parent=19 // pred_fallthru
        _
    $region20: #{grapher_forward.1} parent=5 // pred_fallthru
      _
    %p110 = scmp.le.s32.totalorder 1, %s8
    %p111 = scmp.lt.s32.totalorder %s8, 3
    %p112 = pnand %p110, %p111
    %p113 = pneg %p112
    // Predicated region
    $region25: #{grapher_forward.1} parent=5 // pred_check
      _
    $region26: #{grapher_forward.1} parent=5 // pred_check_branch
      %115 = sbr.rel (%p112) target = $region28
    $region27: #{grapher_forward.1} parent=5 // pred_region
      %s116 = ssub.s32 %s8, 1
      %p117 = scmp.lt.s32.totalorder %s13, 1
      %s118 = scalar_select %p117, %s13, 1
      %s119 = smul.addr %s118, 4
      %s120 = scalar_lea.vmem %s0, %s119
      %p121 = pneg %p34
      %p122 = pneg %p31
      %p123 = pneg %p55
      %p124 = pneg %p52
      %p125 = pneg %p81
      %p126 = pneg %p78
      %p127 = scmp.lt.s32.totalorder %s13, 1
      %s128 = scalar_select %p127, %s13, 1
      %s129 = smul.addr %s128, 4
      %s130 = scalar_lea.vmem %s2, %s129
      %p131 = scmp.lt.s32.totalorder %s13, 1
      %s132 = scalar_select %p131, %s13, 1
      %s133 = smul.addr %s132, 4
      %s134 = scalar_lea.vmem %s0, %s133
      %p135 = scmp.lt.s32.totalorder %s13, 1
      %s136 = scalar_select %p135, %s13, 1
      %s137 = smul.addr %s136, 4
      %s138 = scalar_lea.vmem %s2, %s137
      %v139 = vld [vmem:[%s134] sm:$0xf]
      %v140 = vld [vmem:[%s1] sm:$0xff]
      %v141 = vld [vmem:[%s1 + $0x8] sm:$0xff]
      %143 = vset.pattern.permute.xlu0 4
      %144 = vperm.xlu0 %143, %v140
      %v145 = vpop.permute.xlu0 %144
      %vm147 = vcmask 31744
      %v148 = vsel %vm147, %v140, 0
      %vm150 = vcmask 1043456
      %v152 = vsel %vm150, %v139, 0
      %154 = vmatprep.subr.mxu0 0.0
      %v155 = vand.u32 %v152, 4294901760
      %156 = vmatpush1.msra.mxu0 %v155
      %157 = vmatprep.subr.mxu0 0.0
      %158 = vmatpush1.msra.mxu0 0.0
      %159 = vmatprep.subr.mxu0 0.0
      %160 = vmatpush1.msra.mxu0 0.0
      %161 = vmatprep.subr.mxu0 0.0
      %162 = vmatpush1.msra.mxu0 0.0
      %163 = vmatprep.subr.mxu0 0.0
      %164 = vmatpush1.msra.mxu0 0.0
      %165 = vmatprep.subr.mxu0 0.0
      %166 = vmatpush1.msra.mxu0 0.0
      %167 = vmatprep.subr.mxu0 0.0
      %168 = vmatpush1.msra.mxu0 0.0
      %169 = vmatprep.subr.mxu0 0.0
      %170 = vmatpush1.msra.mxu0 0.0
      %171 = vmatprep.subr.mxu0 0.0
      %172 = vmatpush1.msra.mxu0 0.0
      %173 = vmatprep.subr.mxu0 0.0
      %174 = vmatpush1.msra.mxu0 0.0
      %175 = vmatprep.subr.mxu0 0.0
      %176 = vmatpush1.msra.mxu0 0.0
      %177 = vmatprep.subr.mxu0 0.0
      %178 = vmatpush1.msra.mxu0 0.0
      %179 = vmatprep.subr.mxu0 0.0
      %180 = vmatpush1.msra.mxu0 0.0
      %181 = vmatprep.subr.mxu0 0.0
      %182 = vmatpush1.msra.mxu0 0.0
      %183 = vmatprep.subr.mxu0 0.0
      %184 = vmatpush1.msra.mxu0 0.0
      %185 = vmatprep.subr.mxu0 0.0
      %186 = vmatpush1.msra.mxu0 0.0
      %187 = vmatprep.subr.mxu0 0.0
      %188 = vmatpush1.msra.mxu0 0.0
      %189 = vmatprep.subr.mxu0 0.0
      %190 = vmatpush1.msra.mxu0 0.0
      %191 = vmatprep.subr.mxu0 0.0
      %192 = vmatpush1.msra.mxu0 0.0
      %193 = vmatprep.subr.mxu0 0.0
      %194 = vmatpush1.msra.mxu0 0.0
      %195 = vmatprep.subr.mxu0 0.0
      %196 = vmatpush1.msra.mxu0 0.0
      %197 = vmatprep.subr.mxu0 0.0
      %198 = vmatpush1.msra.mxu0 0.0
      %199 = vmatprep.subr.mxu0 0.0
      %200 = vmatpush1.msra.mxu0 0.0
      %201 = vmatprep.subr.mxu0 0.0
      %202 = vmatpush1.msra.mxu0 0.0
      %203 = vmatprep.subr.mxu0 0.0
      %204 = vmatpush1.msra.mxu0 0.0
      %205 = vmatprep.subr.mxu0 0.0
      %206 = vmatpush1.msra.mxu0 0.0
      %207 = vmatprep.subr.mxu0 0.0
      %208 = vmatpush1.msra.mxu0 0.0
      %209 = vmatprep.subr.mxu0 0.0
      %210 = vmatpush1.msra.mxu0 0.0
      %211 = vmatprep.subr.mxu0 0.0
      %212 = vmatpush1.msra.mxu0 0.0
      %213 = vmatprep.subr.mxu0 0.0
      %214 = vmatpush1.msra.mxu0 0.0
      %215 = vmatprep.subr.mxu0 0.0
      %216 = vmatpush1.msra.mxu0 0.0
      %217 = vmatprep.subr.mxu0 0.0
      %218 = vmatpush1.msra.mxu0 0.0
      %219 = vmatprep.mubr.f32.mxu0 0.0
      %v220 = vand.u32 %v148, 4294901760
      %v221 = vsub.f32 %v148, %v220
      %v222 = vand.u32 %v221, 4294901760
      %v223 = vsub.f32 %v221, %v222
      %v224 = vand.u32 %v223, 4294901760
      %225 = vmatmul.mubr.f32.gmra.mrb[0].mxu0 %v224
      %v226 = vpop.f32.mrb[0].mxu0
      %v227 = vadd.f32 %v145, %v226
      %v228 = vpop.f32.mrb[0].mxu0
      %229 = vdwg.mxu0
      %230 = vmatprep.subr.mxu0 0.0
      %v231 = vand.u32 %v152, 4294901760
      %v232 = vsub.f32 %v152, %v231
      %v233 = vand.u32 %v232, 4294901760
      %v234 = vsub.f32 %v232, %v233
      %v235 = vand.u32 %v234, 4294901760
      %236 = vmatpush1.msra.mxu0 %v235
      %237 = vmatprep.subr.mxu0 0.0
      %238 = vmatpush1.msra.mxu0 0.0
      %239 = vmatprep.subr.mxu0 0.0
      %240 = vmatpush1.msra.mxu0 0.0
      %241 = vmatprep.subr.mxu0 0.0
      %242 = vmatpush1.msra.mxu0 0.0
      %243 = vmatprep.subr.mxu0 0.0
      %244 = vmatpush1.msra.mxu0 0.0
      %245 = vmatprep.subr.mxu0 0.0
      %246 = vmatpush1.msra.mxu0 0.0
      %247 = vmatprep.subr.mxu0 0.0
      %248 = vmatpush1.msra.mxu0 0.0
      %249 = vmatprep.subr.mxu0 0.0
      %250 = vmatpush1.msra.mxu0 0.0
      %251 = vmatprep.subr.mxu0 0.0
      %252 = vmatpush1.msra.mxu0 0.0
      %253 = vmatprep.subr.mxu0 0.0
      %254 = vmatpush1.msra.mxu0 0.0
      %255 = vmatprep.subr.mxu0 0.0
      %256 = vmatpush1.msra.mxu0 0.0
      %257 = vmatprep.subr.mxu0 0.0
      %258 = vmatpush1.msra.mxu0 0.0
      %259 = vmatprep.subr.mxu0 0.0
      %260 = vmatpush1.msra.mxu0 0.0
      %261 = vmatprep.subr.mxu0 0.0
      %262 = vmatpush1.msra.mxu0 0.0
      %263 = vmatprep.subr.mxu0 0.0
      %264 = vmatpush1.msra.mxu0 0.0
      %265 = vmatprep.subr.mxu0 0.0
      %266 = vmatpush1.msra.mxu0 0.0
      %267 = vmatprep.subr.mxu0 0.0
      %268 = vmatpush1.msra.mxu0 0.0
      %269 = vmatprep.subr.mxu0 0.0
      %270 = vmatpush1.msra.mxu0 0.0
      %271 = vmatprep.subr.mxu0 0.0
      %272 = vmatpush1.msra.mxu0 0.0
      %273 = vmatprep.subr.mxu0 0.0
      %274 = vmatpush1.msra.mxu0 0.0
      %275 = vmatprep.subr.mxu0 0.0
      %276 = vmatpush1.msra.mxu0 0.0
      %277 = vmatprep.subr.mxu0 0.0
      %278 = vmatpush1.msra.mxu0 0.0
      %279 = vmatprep.subr.mxu0 0.0
      %280 = vmatpush1.msra.mxu0 0.0
      %281 = vmatprep.subr.mxu0 0.0
      %282 = vmatpush1.msra.mxu0 0.0
      %283 = vmatprep.subr.mxu0 0.0
      %284 = vmatpush1.msra.mxu0 0.0
      %285 = vmatprep.subr.mxu0 0.0
      %286 = vmatpush1.msra.mxu0 0.0
      %287 = vmatprep.subr.mxu0 0.0
      %288 = vmatpush1.msra.mxu0 0.0
      %289 = vmatprep.subr.mxu0 0.0
      %290 = vmatpush1.msra.mxu0 0.0
      %291 = vmatprep.subr.mxu0 0.0
      %292 = vmatpush1.msra.mxu0 0.0
      %293 = vmatprep.subr.mxu0 0.0
      %294 = vmatpush1.msra.mxu0 0.0
      %295 = vmatprep.subr.mxu0 0.0
      %296 = vmatpush1.msra.mxu0 0.0
      %297 = vmatprep.subr.mxu0 0.0
      %298 = vmatpush1.msra.mxu0 0.0
      %299 = vmatprep.mubr.f32.mxu0 0.0
      %v300 = vand.u32 %v148, 4294901760
      %301 = vmatmul.mubr.f32.gmra.mrb[0].mxu0 %v300
      %v302 = vpop.f32.mrb[0].mxu0
      %v303 = vadd.f32 %v227, %v302
      %v304 = vpop.f32.mrb[0].mxu0
      %305 = vdwg.mxu0
      %306 = vmatprep.subr.mxu0 0.0
      %v307 = vand.u32 %v152, 4294901760
      %v308 = vsub.f32 %v152, %v307
      %309 = vmatpush1.msra.mxu0 %v308
      %310 = vmatprep.subr.mxu0 0.0
      %311 = vmatpush1.msra.mxu0 0.0
      %312 = vmatprep.subr.mxu0 0.0
      %313 = vmatpush1.msra.mxu0 0.0
      %314 = vmatprep.subr.mxu0 0.0
      %315 = vmatpush1.msra.mxu0 0.0
      %316 = vmatprep.subr.mxu0 0.0
      %317 = vmatpush1.msra.mxu0 0.0
      %318 = vmatprep.subr.mxu0 0.0
      %319 = vmatpush1.msra.mxu0 0.0
      %320 = vmatprep.subr.mxu0 0.0
      %321 = vmatpush1.msra.mxu0 0.0
      %322 = vmatprep.subr.mxu0 0.0
      %323 = vmatpush1.msra.mxu0 0.0
      %324 = vmatprep.subr.mxu0 0.0
      %325 = vmatpush1.msra.mxu0 0.0
      %326 = vmatprep.subr.mxu0 0.0
      %327 = vmatpush1.msra.mxu0 0.0
      %328 = vmatprep.subr.mxu0 0.0
      %329 = vmatpush1.msra.mxu0 0.0
      %330 = vmatprep.subr.mxu0 0.0
      %331 = vmatpush1.msra.mxu0 0.0
      %332 = vmatprep.subr.mxu0 0.0
      %333 = vmatpush1.msra.mxu0 0.0
      %334 = vmatprep.subr.mxu0 0.0
      %335 = vmatpush1.msra.mxu0 0.0
      %336 = vmatprep.subr.mxu0 0.0
      %337 = vmatpush1.msra.mxu0 0.0
      %338 = vmatprep.subr.mxu0 0.0
      %339 = vmatpush1.msra.mxu0 0.0
      %340 = vmatprep.subr.mxu0 0.0
      %341 = vmatpush1.msra.mxu0 0.0
      %342 = vmatprep.subr.mxu0 0.0
      %343 = vmatpush1.msra.mxu0 0.0
      %344 = vmatprep.subr.mxu0 0.0
      %345 = vmatpush1.msra.mxu0 0.0
      %346 = vmatprep.subr.mxu0 0.0
      %347 = vmatpush1.msra.mxu0 0.0
      %348 = vmatprep.subr.mxu0 0.0
      %349 = vmatpush1.msra.mxu0 0.0
      %350 = vmatprep.subr.mxu0 0.0
      %351 = vmatpush1.msra.mxu0 0.0
      %352 = vmatprep.subr.mxu0 0.0
      %353 = vmatpush1.msra.mxu0 0.0
      %354 = vmatprep.subr.mxu0 0.0
      %355 = vmatpush1.msra.mxu0 0.0
      %356 = vmatprep.subr.mxu0 0.0
      %357 = vmatpush1.msra.mxu0 0.0
      %358 = vmatprep.subr.mxu0 0.0
      %359 = vmatpush1.msra.mxu0 0.0
      %360 = vmatprep.subr.mxu0 0.0
      %361 = vmatpush1.msra.mxu0 0.0
      %362 = vmatprep.subr.mxu0 0.0
      %363 = vmatpush1.msra.mxu0 0.0
      %364 = vmatprep.subr.mxu0 0.0
      %365 = vmatpush1.msra.mxu0 0.0
      %366 = vmatprep.subr.mxu0 0.0
      %367 = vmatpush1.msra.mxu0 0.0
      %368 = vmatprep.subr.mxu0 0.0
      %369 = vmatpush1.msra.mxu0 0.0
      %370 = vmatprep.subr.mxu0 0.0
      %371 = vmatpush1.msra.mxu0 0.0
      %372 = vmatprep.mubr.f32.mxu0 0.0
      %v373 = vand.u32 %v148, 4294901760
      %v374 = vsub.f32 %v148, %v373
      %375 = vmatmul.mubr.f32.gmra.mrb[0].mxu0 %v374
      %v376 = vpop.f32.mrb[0].mxu0
      %v377 = vadd.f32 %v303, %v376
      %v378 = vpop.f32.mrb[0].mxu0
      %379 = vdwg.mxu0
      %380 = vmatprep.subr.mxu0 0.0
      %v381 = vand.u32 %v152, 4294901760
      %382 = vmatpush1.msra.mxu0 %v381
      %383 = vmatprep.subr.mxu0 0.0
      %384 = vmatpush1.msra.mxu0 0.0
      %385 = vmatprep.subr.mxu0 0.0
      %386 = vmatpush1.msra.mxu0 0.0
      %387 = vmatprep.subr.mxu0 0.0
      %388 = vmatpush1.msra.mxu0 0.0
      %389 = vmatprep.subr.mxu0 0.0
      %390 = vmatpush1.msra.mxu0 0.0
      %391 = vmatprep.subr.mxu0 0.0
      %392 = vmatpush1.msra.mxu0 0.0
      %393 = vmatprep.subr.mxu0 0.0
      %394 = vmatpush1.msra.mxu0 0.0
      %395 = vmatprep.subr.mxu0 0.0
      %396 = vmatpush1.msra.mxu0 0.0
      %397 = vmatprep.subr.mxu0 0.0
      %398 = vmatpush1.msra.mxu0 0.0
      %399 = vmatprep.subr.mxu0 0.0
      %400 = vmatpush1.msra.mxu0 0.0
      %401 = vmatprep.subr.mxu0 0.0
      %402 = vmatpush1.msra.mxu0 0.0
      %403 = vmatprep.subr.mxu0 0.0
      %404 = vmatpush1.msra.mxu0 0.0
      %405 = vmatprep.subr.mxu0 0.0
      %406 = vmatpush1.msra.mxu0 0.0
      %407 = vmatprep.subr.mxu0 0.0
      %408 = vmatpush1.msra.mxu0 0.0
      %409 = vmatprep.subr.mxu0 0.0
      %410 = vmatpush1.msra.mxu0 0.0
      %411 = vmatprep.subr.mxu0 0.0
      %412 = vmatpush1.msra.mxu0 0.0
      %413 = vmatprep.subr.mxu0 0.0
      %414 = vmatpush1.msra.mxu0 0.0
      %415 = vmatprep.subr.mxu0 0.0
      %416 = vmatpush1.msra.mxu0 0.0
      %417 = vmatprep.subr.mxu0 0.0
      %418 = vmatpush1.msra.mxu0 0.0
      %419 = vmatprep.subr.mxu0 0.0
      %420 = vmatpush1.msra.mxu0 0.0
      %421 = vmatprep.subr.mxu0 0.0
      %422 = vmatpush1.msra.mxu0 0.0
      %423 = vmatprep.subr.mxu0 0.0
      %424 = vmatpush1.msra.mxu0 0.0
      %425 = vmatprep.subr.mxu0 0.0
      %426 = vmatpush1.msra.mxu0 0.0
      %427 = vmatprep.subr.mxu0 0.0
      %428 = vmatpush1.msra.mxu0 0.0
      %429 = vmatprep.subr.mxu0 0.0
      %430 = vmatpush1.msra.mxu0 0.0
      %431 = vmatprep.subr.mxu0 0.0
      %432 = vmatpush1.msra.mxu0 0.0
      %433 = vmatprep.subr.mxu0 0.0
      %434 = vmatpush1.msra.mxu0 0.0
      %435 = vmatprep.subr.mxu0 0.0
      %436 = vmatpush1.msra.mxu0 0.0
      %437 = vmatprep.subr.mxu0 0.0
      %438 = vmatpush1.msra.mxu0 0.0
      %439 = vmatprep.subr.mxu0 0.0
      %440 = vmatpush1.msra.mxu0 0.0
      %441 = vmatprep.subr.mxu0 0.0
      %442 = vmatpush1.msra.mxu0 0.0
      %443 = vmatprep.subr.mxu0 0.0
      %444 = vmatpush1.msra.mxu0 0.0
      %445 = vmatprep.mubr.f32.mxu0 0.0
      %v446 = vand.u32 %v148, 4294901760
      %v447 = vsub.f32 %v148, %v446
      %v448 = vand.u32 %v447, 4294901760
      %449 = vmatmul.mubr.f32.gmra.mrb[0].mxu0 %v448
      %v450 = vpop.f32.mrb[0].mxu0
      %v451 = vadd.f32 %v377, %v450
      %v452 = vpop.f32.mrb[0].mxu0
      %453 = vdwg.mxu0
      %454 = vmatprep.subr.mxu0 0.0
      %v455 = vand.u32 %v152, 4294901760
      %v456 = vsub.f32 %v152, %v455
      %v457 = vand.u32 %v456, 4294901760
      %458 = vmatpush1.msra.mxu0 %v457
      %459 = vmatprep.subr.mxu0 0.0
      %460 = vmatpush1.msra.mxu0 0.0
      %461 = vmatprep.subr.mxu0 0.0
      %462 = vmatpush1.msra.mxu0 0.0
      %463 = vmatprep.subr.mxu0 0.0
      %464 = vmatpush1.msra.mxu0 0.0
      %465 = vmatprep.subr.mxu0 0.0
      %466 = vmatpush1.msra.mxu0 0.0
      %467 = vmatprep.subr.mxu0 0.0
      %468 = vmatpush1.msra.mxu0 0.0
      %469 = vmatprep.subr.mxu0 0.0
      %470 = vmatpush1.msra.mxu0 0.0
      %471 = vmatprep.subr.mxu0 0.0
      %472 = vmatpush1.msra.mxu0 0.0
      %473 = vmatprep.subr.mxu0 0.0
      %474 = vmatpush1.msra.mxu0 0.0
      %475 = vmatprep.subr.mxu0 0.0
      %476 = vmatpush1.msra.mxu0 0.0
      %477 = vmatprep.subr.mxu0 0.0
      %478 = vmatpush1.msra.mxu0 0.0
      %479 = vmatprep.subr.mxu0 0.0
      %480 = vmatpush1.msra.mxu0 0.0
      %481 = vmatprep.subr.mxu0 0.0
      %482 = vmatpush1.msra.mxu0 0.0
      %483 = vmatprep.subr.mxu0 0.0
      %484 = vmatpush1.msra.mxu0 0.0
      %485 = vmatprep.subr.mxu0 0.0
      %486 = vmatpush1.msra.mxu0 0.0
      %487 = vmatprep.subr.mxu0 0.0
      %488 = vmatpush1.msra.mxu0 0.0
      %489 = vmatprep.subr.mxu0 0.0
      %490 = vmatpush1.msra.mxu0 0.0
      %491 = vmatprep.subr.mxu0 0.0
      %492 = vmatpush1.msra.mxu0 0.0
      %493 = vmatprep.subr.mxu0 0.0
      %494 = vmatpush1.msra.mxu0 0.0
      %495 = vmatprep.subr.mxu0 0.0
      %496 = vmatpush1.msra.mxu0 0.0
      %497 = vmatprep.subr.mxu0 0.0
      %498 = vmatpush1.msra.mxu0 0.0
      %499 = vmatprep.subr.mxu0 0.0
      %500 = vmatpush1.msra.mxu0 0.0
      %501 = vmatprep.subr.mxu0 0.0
      %502 = vmatpush1.msra.mxu0 0.0
      %503 = vmatprep.subr.mxu0 0.0
      %504 = vmatpush1.msra.mxu0 0.0
      %505 = vmatprep.subr.mxu0 0.0
      %506 = vmatpush1.msra.mxu0 0.0
      %507 = vmatprep.subr.mxu0 0.0
      %508 = vmatpush1.msra.mxu0 0.0
      %509 = vmatprep.subr.mxu0 0.0
      %510 = vmatpush1.msra.mxu0 0.0
      %511 = vmatprep.subr.mxu0 0.0
      %512 = vmatpush1.msra.mxu0 0.0
      %513 = vmatprep.subr.mxu0 0.0
      %514 = vmatpush1.msra.mxu0 0.0
      %515 = vmatprep.subr.mxu0 0.0
      %516 = vmatpush1.msra.mxu0 0.0
      %517 = vmatprep.subr.mxu0 0.0
      %518 = vmatpush1.msra.mxu0 0.0
      %519 = vmatprep.subr.mxu0 0.0
      %520 = vmatpush1.msra.mxu0 0.0
      %521 = vmatprep.mubr.f32.mxu0 0.0
      %v522 = vand.u32 %v148, 4294901760
      %523 = vmatmul.mubr.f32.gmra.mrb[0].mxu0 %v522
      %v524 = vpop.f32.mrb[0].mxu0
      %v525 = vadd.f32 %v451, %v524
      %v526 = vpop.f32.mrb[0].mxu0
      %527 = vdwg.mxu0
      %528 = vmatprep.subr.mxu0 0.0
      %v529 = vand.u32 %v152, 4294901760
      %530 = vmatpush1.msra.mxu0 %v529
      %531 = vmatprep.subr.mxu0 0.0
      %532 = vmatpush1.msra.mxu0 0.0
      %533 = vmatprep.subr.mxu0 0.0
      %534 = vmatpush1.msra.mxu0 0.0
      %535 = vmatprep.subr.mxu0 0.0
      %536 = vmatpush1.msra.mxu0 0.0
      %537 = vmatprep.subr.mxu0 0.0
      %538 = vmatpush1.msra.mxu0 0.0
      %539 = vmatprep.subr.mxu0 0.0
      %540 = vmatpush1.msra.mxu0 0.0
      %541 = vmatprep.subr.mxu0 0.0
      %542 = vmatpush1.msra.mxu0 0.0
      %543 = vmatprep.subr.mxu0 0.0
      %544 = vmatpush1.msra.mxu0 0.0
      %545 = vmatprep.subr.mxu0 0.0
      %546 = vmatpush1.msra.mxu0 0.0
      %547 = vmatprep.subr.mxu0 0.0
      %548 = vmatpush1.msra.mxu0 0.0
      %549 = vmatprep.subr.mxu0 0.0
      %550 = vmatpush1.msra.mxu0 0.0
      %551 = vmatprep.subr.mxu0 0.0
      %552 = vmatpush1.msra.mxu0 0.0
      %553 = vmatprep.subr.mxu0 0.0
      %554 = vmatpush1.msra.mxu0 0.0
      %555 = vmatprep.subr.mxu0 0.0
      %556 = vmatpush1.msra.mxu0 0.0
      %557 = vmatprep.subr.mxu0 0.0
      %558 = vmatpush1.msra.mxu0 0.0
      %559 = vmatprep.subr.mxu0 0.0
      %560 = vmatpush1.msra.mxu0 0.0
      %561 = vmatprep.subr.mxu0 0.0
      %562 = vmatpush1.msra.mxu0 0.0
      %563 = vmatprep.subr.mxu0 0.0
      %564 = vmatpush1.msra.mxu0 0.0
      %565 = vmatprep.subr.mxu0 0.0
      %566 = vmatpush1.msra.mxu0 0.0
      %567 = vmatprep.subr.mxu0 0.0
      %568 = vmatpush1.msra.mxu0 0.0
      %569 = vmatprep.subr.mxu0 0.0
      %570 = vmatpush1.msra.mxu0 0.0
      %571 = vmatprep.subr.mxu0 0.0
      %572 = vmatpush1.msra.mxu0 0.0
      %573 = vmatprep.subr.mxu0 0.0
      %574 = vmatpush1.msra.mxu0 0.0
      %575 = vmatprep.subr.mxu0 0.0
      %576 = vmatpush1.msra.mxu0 0.0
      %577 = vmatprep.subr.mxu0 0.0
      %578 = vmatpush1.msra.mxu0 0.0
      %579 = vmatprep.subr.mxu0 0.0
      %580 = vmatpush1.msra.mxu0 0.0
      %581 = vmatprep.subr.mxu0 0.0
      %582 = vmatpush1.msra.mxu0 0.0
      %583 = vmatprep.subr.mxu0 0.0
      %584 = vmatpush1.msra.mxu0 0.0
      %585 = vmatprep.subr.mxu0 0.0
      %586 = vmatpush1.msra.mxu0 0.0
      %587 = vmatprep.subr.mxu0 0.0
      %588 = vmatpush1.msra.mxu0 0.0
      %589 = vmatprep.subr.mxu0 0.0
      %590 = vmatpush1.msra.mxu0 0.0
      %591 = vmatprep.subr.mxu0 0.0
      %592 = vmatpush1.msra.mxu0 0.0
      %593 = vmatprep.mubr.f32.mxu0 0.0
      %v594 = vand.u32 %v148, 4294901760
      %595 = vmatmul.mubr.f32.gmra.mrb[0].mxu0 %v594
      %v596 = vpop.f32.mrb[0].mxu0
      %v597 = vadd.f32 %v525, %v596
      %v598 = vpop.f32.mrb[0].mxu0
      %599 = vdwg.mxu0
      %v600 = vmul.f32 %v597, %v597
      %vm601 = vcmask 125952
      %v602 = vsel %vm601, %v600, 0.0
      %v603 = vrot.slane %v602, 4
      %v604 = vadd.f32 %v602, %v603
      %v605 = vrot.slane %v604, 2
      %v606 = vadd.f32 %v604, %v605
      %v607 = vrot.slane %v606, 1
      %v608 = vadd.f32 %v606, %v607
      %v609 = vmax.f32 %v608, 1e-24
      %v610 = vrsqrt.pop %v609
      %v611 = vmul.f32 %v597, %v610
      %612 = vxpose.xlu0.b32.start [1/16] %v611, 128
      %613 = vxpose.xlu0.b32.cont [2/16] 0.0, 128
      %614 = vxpose.xlu0.b32.cont [3/16] 0.0, 128
      %615 = vxpose.xlu0.b32.cont [4/16] 0.0, 128
      %616 = vxpose.xlu0.b32.cont [5/16] 0.0, 128
      %617 = vxpose.xlu0.b32.cont [6/16] 0.0, 128
      %618 = vxpose.xlu0.b32.cont [7/16] 0.0, 128
      %619 = vxpose.xlu0.b32.cont [8/16] 0.0, 128
      %620 = vxpose.xlu0.b32.cont [9/16] 0.0, 128
      %621 = vxpose.xlu0.b32.cont [10/16] 0.0, 128
      %622 = vxpose.xlu0.b32.cont [11/16] 0.0, 128
      %623 = vxpose.xlu0.b32.cont [12/16] 0.0, 128
      %624 = vxpose.xlu0.b32.cont [13/16] 0.0, 128
      %625 = vxpose.xlu0.b32.cont [14/16] 0.0, 128
      %626 = vxpose.xlu0.b32.cont [15/16] 0.0, 128
      %627 = vxpose.xlu0.b32.end [16/16] 0.0, 128
      %v628 = vpop.trf.xlu0
      %v629 = vpop.trf.xlu0
      %v630 = vpop.trf.xlu0
      %v631 = vpop.trf.xlu0
      %v632 = vpop.trf.xlu0
      %v633 = vpop.trf.xlu0
      %v634 = vpop.trf.xlu0
      %v635 = vpop.trf.xlu0
      %v636 = vpop.trf.xlu0
      %v637 = vpop.trf.xlu0
      %v638 = vpop.trf.xlu0
      %v639 = vpop.trf.xlu0
      %v640 = vpop.trf.xlu0
      %v641 = vpop.trf.xlu0
      %v642 = vpop.trf.xlu0
      %v643 = vpop.trf.xlu0
      %v645 = vsel %vm147, %v628, 0
      %v648 = vsel %vm147, %v629, 0
      %v651 = vsel %vm150, %v611, 0
      %653 = vmatprep.subr.mxu0 0.0
      %v654 = vand.u32 %v651, 4294901760
      %655 = vmatpush1.msra.mxu0 %v654
      %656 = vmatprep.subr.mxu0 0.0
      %657 = vmatpush1.msra.mxu0 0.0
      %658 = vmatprep.subr.mxu0 0.0
      %659 = vmatpush1.msra.mxu0 0.0
      %660 = vmatprep.subr.mxu0 0.0
      %661 = vmatpush1.msra.mxu0 0.0
      %662 = vmatprep.subr.mxu0 0.0
      %663 = vmatpush1.msra.mxu0 0.0
      %664 = vmatprep.subr.mxu0 0.0
      %665 = vmatpush1.msra.mxu0 0.0
      %666 = vmatprep.subr.mxu0 0.0
      %667 = vmatpush1.msra.mxu0 0.0
      %668 = vmatprep.subr.mxu0 0.0
      %669 = vmatpush1.msra.mxu0 0.0
      %670 = vmatprep.subr.mxu0 0.0
      %671 = vmatpush1.msra.mxu0 0.0
      %672 = vmatprep.subr.mxu0 0.0
      %673 = vmatpush1.msra.mxu0 0.0
      %674 = vmatprep.subr.mxu0 0.0
      %675 = vmatpush1.msra.mxu0 0.0
      %676 = vmatprep.subr.mxu0 0.0
      %677 = vmatpush1.msra.mxu0 0.0
      %678 = vmatprep.subr.mxu0 0.0
      %679 = vmatpush1.msra.mxu0 0.0
      %680 = vmatprep.subr.mxu0 0.0
      %681 = vmatpush1.msra.mxu0 0.0
      %682 = vmatprep.subr.mxu0 0.0
      %683 = vmatpush1.msra.mxu0 0.0
      %684 = vmatprep.subr.mxu0 0.0
      %685 = vmatpush1.msra.mxu0 0.0
      %686 = vmatprep.subr.mxu0 0.0
      %687 = vmatpush1.msra.mxu0 0.0
      %688 = vmatprep.subr.mxu0 0.0
      %689 = vmatpush1.msra.mxu0 0.0
      %690 = vmatprep.subr.mxu0 0.0
      %691 = vmatpush1.msra.mxu0 0.0
      %692 = vmatprep.subr.mxu0 0.0
      %693 = vmatpush1.msra.mxu0 0.0
      %694 = vmatprep.subr.mxu0 0.0
      %695 = vmatpush1.msra.mxu0 0.0
      %696 = vmatprep.subr.mxu0 0.0
      %697 = vmatpush1.msra.mxu0 0.0
      %698 = vmatprep.subr.mxu0 0.0
      %699 = vmatpush1.msra.mxu0 0.0
      %700 = vmatprep.subr.mxu0 0.0
      %701 = vmatpush1.msra.mxu0 0.0
      %702 = vmatprep.subr.mxu0 0.0
      %703 = vmatpush1.msra.mxu0 0.0
      %704 = vmatprep.subr.mxu0 0.0
      %705 = vmatpush1.msra.mxu0 0.0
      %706 = vmatprep.subr.mxu0 0.0
      %707 = vmatpush1.msra.mxu0 0.0
      %708 = vmatprep.subr.mxu0 0.0
      %709 = vmatpush1.msra.mxu0 0.0
      %710 = vmatprep.subr.mxu0 0.0
      %711 = vmatpush1.msra.mxu0 0.0
      %712 = vmatprep.subr.mxu0 0.0
      %713 = vmatpush1.msra.mxu0 0.0
      %714 = vmatprep.subr.mxu0 0.0
      %715 = vmatpush1.msra.mxu0 0.0
      %716 = vmatprep.subr.mxu0 0.0
      %717 = vmatpush1.msra.mxu0 0.0
      %718 = vmatprep.mubr.f32.mxu0 0.0
      %v719 = vand.u32 %v645, 4294901760
      %v720 = vsub.f32 %v645, %v719
      %v721 = vand.u32 %v720, 4294901760
      %v722 = vsub.f32 %v720, %v721
      %v723 = vand.u32 %v722, 4294901760
      %724 = vmatmul.mubr.f32.gmra.mrb[0].mxu0 %v723
      %v725 = vpop.f32.mrb[0].mxu0
      %v726 = vadd.f32 0.0, %v725
      %v727 = vpop.f32.mrb[0].mxu0
      %728 = vmatprep.mubr.f32.mxu0 0.0
      %v729 = vand.u32 %v648, 4294901760
      %v730 = vsub.f32 %v648, %v729
      %v731 = vand.u32 %v730, 4294901760
      %v732 = vsub.f32 %v730, %v731
      %v733 = vand.u32 %v732, 4294901760
      %734 = vmatmul.mubr.f32.gmra.mrb[0].mxu0 %v733
      %v735 = vpop.f32.mrb[0].mxu0
      %v736 = vadd.f32 0.0, %v735
      %v737 = vpop.f32.mrb[0].mxu0
      %738 = vdwg.mxu0
      %739 = vmatprep.subr.mxu0 0.0
      %v740 = vand.u32 %v651, 4294901760
      %v741 = vsub.f32 %v651, %v740
      %v742 = vand.u32 %v741, 4294901760
      %v743 = vsub.f32 %v741, %v742
      %v744 = vand.u32 %v743, 4294901760
      %745 = vmatpush1.msra.mxu0 %v744
      %746 = vmatprep.subr.mxu0 0.0
      %747 = vmatpush1.msra.mxu0 0.0
      %748 = vmatprep.subr.mxu0 0.0
      %749 = vmatpush1.msra.mxu0 0.0
      %750 = vmatprep.subr.mxu0 0.0
      %751 = vmatpush1.msra.mxu0 0.0
      %752 = vmatprep.subr.mxu0 0.0
      %753 = vmatpush1.msra.mxu0 0.0
      %754 = vmatprep.subr.mxu0 0.0
      %755 = vmatpush1.msra.mxu0 0.0
      %756 = vmatprep.subr.mxu0 0.0
      %757 = vmatpush1.msra.mxu0 0.0
      %758 = vmatprep.subr.mxu0 0.0
      %759 = vmatpush1.msra.mxu0 0.0
      %760 = vmatprep.subr.mxu0 0.0
      %761 = vmatpush1.msra.mxu0 0.0
      %762 = vmatprep.subr.mxu0 0.0
      %763 = vmatpush1.msra.mxu0 0.0
      %764 = vmatprep.subr.mxu0 0.0
      %765 = vmatpush1.msra.mxu0 0.0
      %766 = vmatprep.subr.mxu0 0.0
      %767 = vmatpush1.msra.mxu0 0.0
      %768 = vmatprep.subr.mxu0 0.0
      %769 = vmatpush1.msra.mxu0 0.0
      %770 = vmatprep.subr.mxu0 0.0
      %771 = vmatpush1.msra.mxu0 0.0
      %772 = vmatprep.subr.mxu0 0.0
      %773 = vmatpush1.msra.mxu0 0.0
      %774 = vmatprep.subr.mxu0 0.0
      %775 = vmatpush1.msra.mxu0 0.0
      %776 = vmatprep.subr.mxu0 0.0
      %777 = vmatpush1.msra.mxu0 0.0
      %778 = vmatprep.subr.mxu0 0.0
      %779 = vmatpush1.msra.mxu0 0.0
      %780 = vmatprep.subr.mxu0 0.0
      %781 = vmatpush1.msra.mxu0 0.0
      %782 = vmatprep.subr.mxu0 0.0
      %783 = vmatpush1.msra.mxu0 0.0
      %784 = vmatprep.subr.mxu0 0.0
      %785 = vmatpush1.msra.mxu0 0.0
      %786 = vmatprep.subr.mxu0 0.0
      %787 = vmatpush1.msra.mxu0 0.0
      %788 = vmatprep.subr.mxu0 0.0
      %789 = vmatpush1.msra.mxu0 0.0
      %790 = vmatprep.subr.mxu0 0.0
      %791 = vmatpush1.msra.mxu0 0.0
      %792 = vmatprep.subr.mxu0 0.0
      %793 = vmatpush1.msra.mxu0 0.0
      %794 = vmatprep.subr.mxu0 0.0
      %795 = vmatpush1.msra.mxu0 0.0
      %796 = vmatprep.subr.mxu0 0.0
      %797 = vmatpush1.msra.mxu0 0.0
      %798 = vmatprep.subr.mxu0 0.0
      %799 = vmatpush1.msra.mxu0 0.0
      %800 = vmatprep.subr.mxu0 0.0
      %801 = vmatpush1.msra.mxu0 0.0
      %802 = vmatprep.subr.mxu0 0.0
      %803 = vmatpush1.msra.mxu0 0.0
      %804 = vmatprep.subr.mxu0 0.0
      %805 = vmatpush1.msra.mxu0 0.0
      %806 = vmatprep.subr.mxu0 0.0
      %807 = vmatpush1.msra.mxu0 0.0
      %808 = vmatprep.mubr.f32.mxu0 0.0
      %v809 = vand.u32 %v645, 4294901760
      %810 = vmatmul.mubr.f32.gmra.mrb[0].mxu0 %v809
      %v811 = vpop.f32.mrb[0].mxu0
      %v812 = vadd.f32 %v726, %v811
      %v813 = vpop.f32.mrb[0].mxu0
      %814 = vmatprep.mubr.f32.mxu0 0.0
      %v815 = vand.u32 %v648, 4294901760
      %816 = vmatmul.mubr.f32.gmra.mrb[0].mxu0 %v815
      %v817 = vpop.f32.mrb[0].mxu0
      %v818 = vadd.f32 %v736, %v817
      %v819 = vpop.f32.mrb[0].mxu0
      %820 = vdwg.mxu0
      %821 = vmatprep.subr.mxu0 0.0
      %v822 = vand.u32 %v651, 4294901760
      %v823 = vsub.f32 %v651, %v822
      %824 = vmatpush1.msra.mxu0 %v823
      %825 = vmatprep.subr.mxu0 0.0
      %826 = vmatpush1.msra.mxu0 0.0
      %827 = vmatprep.subr.mxu0 0.0
      %828 = vmatpush1.msra.mxu0 0.0
      %829 = vmatprep.subr.mxu0 0.0
      %830 = vmatpush1.msra.mxu0 0.0
      %831 = vmatprep.subr.mxu0 0.0
      %832 = vmatpush1.msra.mxu0 0.0
      %833 = vmatprep.subr.mxu0 0.0
      %834 = vmatpush1.msra.mxu0 0.0
      %835 = vmatprep.subr.mxu0 0.0
      %836 = vmatpush1.msra.mxu0 0.0
      %837 = vmatprep.subr.mxu0 0.0
      %838 = vmatpush1.msra.mxu0 0.0
      %839 = vmatprep.subr.mxu0 0.0
      %840 = vmatpush1.msra.mxu0 0.0
      %841 = vmatprep.subr.mxu0 0.0
      %842 = vmatpush1.msra.mxu0 0.0
      %843 = vmatprep.subr.mxu0 0.0
      %844 = vmatpush1.msra.mxu0 0.0
      %845 = vmatprep.subr.mxu0 0.0
      %846 = vmatpush1.msra.mxu0 0.0
      %847 = vmatprep.subr.mxu0 0.0
      %848 = vmatpush1.msra.mxu0 0.0
      %849 = vmatprep.subr.mxu0 0.0
      %850 = vmatpush1.msra.mxu0 0.0
      %851 = vmatprep.subr.mxu0 0.0
      %852 = vmatpush1.msra.mxu0 0.0
      %853 = vmatprep.subr.mxu0 0.0
      %854 = vmatpush1.msra.mxu0 0.0
      %855 = vmatprep.subr.mxu0 0.0
      %856 = vmatpush1.msra.mxu0 0.0
      %857 = vmatprep.subr.mxu0 0.0
      %858 = vmatpush1.msra.mxu0 0.0
      %859 = vmatprep.subr.mxu0 0.0
      %860 = vmatpush1.msra.mxu0 0.0
      %861 = vmatprep.subr.mxu0 0.0
      %862 = vmatpush1.msra.mxu0 0.0
      %863 = vmatprep.subr.mxu0 0.0
      %864 = vmatpush1.msra.mxu0 0.0
      %865 = vmatprep.subr.mxu0 0.0
      %866 = vmatpush1.msra.mxu0 0.0
      %867 = vmatprep.subr.mxu0 0.0
      %868 = vmatpush1.msra.mxu0 0.0
      %869 = vmatprep.subr.mxu0 0.0
      %870 = vmatpush1.msra.mxu0 0.0
      %871 = vmatprep.subr.mxu0 0.0
      %872 = vmatpush1.msra.mxu0 0.0
      %873 = vmatprep.subr.mxu0 0.0
      %874 = vmatpush1.msra.mxu0 0.0
      %875 = vmatprep.subr.mxu0 0.0
      %876 = vmatpush1.msra.mxu0 0.0
      %877 = vmatprep.subr.mxu0 0.0
      %878 = vmatpush1.msra.mxu0 0.0
      %879 = vmatprep.subr.mxu0 0.0
      %880 = vmatpush1.msra.mxu0 0.0
      %881 = vmatprep.subr.mxu0 0.0
      %882 = vmatpush1.msra.mxu0 0.0
      %883 = vmatprep.subr.mxu0 0.0
      %884 = vmatpush1.msra.mxu0 0.0
      %885 = vmatprep.subr.mxu0 0.0
      %886 = vmatpush1.msra.mxu0 0.0
      %887 = vmatprep.mubr.f32.mxu0 0.0
      %v888 = vand.u32 %v645, 4294901760
      %v889 = vsub.f32 %v645, %v888
      %890 = vmatmul.mubr.f32.gmra.mrb[0].mxu0 %v889
      %v891 = vpop.f32.mrb[0].mxu0
      %v892 = vadd.f32 %v812, %v891
      %v893 = vpop.f32.mrb[0].mxu0
      %894 = vmatprep.mubr.f32.mxu0 0.0
      %v895 = vand.u32 %v648, 4294901760
      %v896 = vsub.f32 %v648, %v895
      %897 = vmatmul.mubr.f32.gmra.mrb[0].mxu0 %v896
      %v898 = vpop.f32.mrb[0].mxu0
      %v899 = vadd.f32 %v818, %v898
      %v900 = vpop.f32.mrb[0].mxu0
      %901 = vdwg.mxu0
      %902 = vmatprep.subr.mxu0 0.0
      %v903 = vand.u32 %v651, 4294901760
      %904 = vmatpush1.msra.mxu0 %v903
      %905 = vmatprep.subr.mxu0 0.0
      %906 = vmatpush1.msra.mxu0 0.0
      %907 = vmatprep.subr.mxu0 0.0
      %908 = vmatpush1.msra.mxu0 0.0
      %909 = vmatprep.subr.mxu0 0.0
      %910 = vmatpush1.msra.mxu0 0.0
      %911 = vmatprep.subr.mxu0 0.0
      %912 = vmatpush1.msra.mxu0 0.0
      %913 = vmatprep.subr.mxu0 0.0
      %914 = vmatpush1.msra.mxu0 0.0
      %915 = vmatprep.subr.mxu0 0.0
      %916 = vmatpush1.msra.mxu0 0.0
      %917 = vmatprep.subr.mxu0 0.0
      %918 = vmatpush1.msra.mxu0 0.0
      %919 = vmatprep.subr.mxu0 0.0
      %920 = vmatpush1.msra.mxu0 0.0
      %921 = vmatprep.subr.mxu0 0.0
      %922 = vmatpush1.msra.mxu0 0.0
      %923 = vmatprep.subr.mxu0 0.0
      %924 = vmatpush1.msra.mxu0 0.0
      %925 = vmatprep.subr.mxu0 0.0
      %926 = vmatpush1.msra.mxu0 0.0
      %927 = vmatprep.subr.mxu0 0.0
      %928 = vmatpush1.msra.mxu0 0.0
      %929 = vmatprep.subr.mxu0 0.0
      %930 = vmatpush1.msra.mxu0 0.0
      %931 = vmatprep.subr.mxu0 0.0
      %932 = vmatpush1.msra.mxu0 0.0
      %933 = vmatprep.subr.mxu0 0.0
      %934 = vmatpush1.msra.mxu0 0.0
      %935 = vmatprep.subr.mxu0 0.0
      %936 = vmatpush1.msra.mxu0 0.0
      %937 = vmatprep.subr.mxu0 0.0
      %938 = vmatpush1.msra.mxu0 0.0
      %939 = vmatprep.subr.mxu0 0.0
      %940 = vmatpush1.msra.mxu0 0.0
      %941 = vmatprep.subr.mxu0 0.0
      %942 = vmatpush1.msra.mxu0 0.0
      %943 = vmatprep.subr.mxu0 0.0
      %944 = vmatpush1.msra.mxu0 0.0
      %945 = vmatprep.subr.mxu0 0.0
      %946 = vmatpush1.msra.mxu0 0.0
      %947 = vmatprep.subr.mxu0 0.0
      %948 = vmatpush1.msra.mxu0 0.0
      %949 = vmatprep.subr.mxu0 0.0
      %950 = vmatpush1.msra.mxu0 0.0
      %951 = vmatprep.subr.mxu0 0.0
      %952 = vmatpush1.msra.mxu0 0.0
      %953 = vmatprep.subr.mxu0 0.0
      %954 = vmatpush1.msra.mxu0 0.0
      %955 = vmatprep.subr.mxu0 0.0
      %956 = vmatpush1.msra.mxu0 0.0
      %957 = vmatprep.subr.mxu0 0.0
      %958 = vmatpush1.msra.mxu0 0.0
      %959 = vmatprep.subr.mxu0 0.0
      %960 = vmatpush1.msra.mxu0 0.0
      %961 = vmatprep.subr.mxu0 0.0
      %962 = vmatpush1.msra.mxu0 0.0
      %963 = vmatprep.subr.mxu0 0.0
      %964 = vmatpush1.msra.mxu0 0.0
      %965 = vmatprep.subr.mxu0 0.0
      %966 = vmatpush1.msra.mxu0 0.0
      %967 = vmatprep.mubr.f32.mxu0 0.0
      %v968 = vand.u32 %v645, 4294901760
      %v969 = vsub.f32 %v645, %v968
      %v970 = vand.u32 %v969, 4294901760
      %971 = vmatmul.mubr.f32.gmra.mrb[0].mxu0 %v970
      %v972 = vpop.f32.mrb[0].mxu0
      %v973 = vadd.f32 %v892, %v972
      %v974 = vpop.f32.mrb[0].mxu0
      %975 = vmatprep.mubr.f32.mxu0 0.0
      %v976 = vand.u32 %v648, 4294901760
      %v977 = vsub.f32 %v648, %v976
      %v978 = vand.u32 %v977, 4294901760
      %979 = vmatmul.mubr.f32.gmra.mrb[0].mxu0 %v978
      %v980 = vpop.f32.mrb[0].mxu0
      %v981 = vadd.f32 %v899, %v980
      %v982 = vpop.f32.mrb[0].mxu0
      %983 = vdwg.mxu0
      %984 = vmatprep.subr.mxu0 0.0
      %v985 = vand.u32 %v651, 4294901760
      %v986 = vsub.f32 %v651, %v985
      %v987 = vand.u32 %v986, 4294901760
      %988 = vmatpush1.msra.mxu0 %v987
      %989 = vmatprep.subr.mxu0 0.0
      %990 = vmatpush1.msra.mxu0 0.0
      %991 = vmatprep.subr.mxu0 0.0
      %992 = vmatpush1.msra.mxu0 0.0
      %993 = vmatprep.subr.mxu0 0.0
      %994 = vmatpush1.msra.mxu0 0.0
      %995 = vmatprep.subr.mxu0 0.0
      %996 = vmatpush1.msra.mxu0 0.0
      %997 = vmatprep.subr.mxu0 0.0
      %998 = vmatpush1.msra.mxu0 0.0
      %999 = vmatprep.subr.mxu0 0.0
      %1000 = vmatpush1.msra.mxu0 0.0
      %1001 = vmatprep.subr.mxu0 0.0
      %1002 = vmatpush1.msra.mxu0 0.0
      %1003 = vmatprep.subr.mxu0 0.0
      %1004 = vmatpush1.msra.mxu0 0.0
      %1005 = vmatprep.subr.mxu0 0.0
      %1006 = vmatpush1.msra.mxu0 0.0
      %1007 = vmatprep.subr.mxu0 0.0
      %1008 = vmatpush1.msra.mxu0 0.0
      %1009 = vmatprep.subr.mxu0 0.0
      %1010 = vmatpush1.msra.mxu0 0.0
      %1011 = vmatprep.subr.mxu0 0.0
      %1012 = vmatpush1.msra.mxu0 0.0
      %1013 = vmatprep.subr.mxu0 0.0
      %1014 = vmatpush1.msra.mxu0 0.0
      %1015 = vmatprep.subr.mxu0 0.0
      %1016 = vmatpush1.msra.mxu0 0.0
      %1017 = vmatprep.subr.mxu0 0.0
      %1018 = vmatpush1.msra.mxu0 0.0
      %1019 = vmatprep.subr.mxu0 0.0
      %1020 = vmatpush1.msra.mxu0 0.0
      %1021 = vmatprep.subr.mxu0 0.0
      %1022 = vmatpush1.msra.mxu0 0.0
      %1023 = vmatprep.subr.mxu0 0.0
      %1024 = vmatpush1.msra.mxu0 0.0
      %1025 = vmatprep.subr.mxu0 0.0
      %1026 = vmatpush1.msra.mxu0 0.0
      %1027 = vmatprep.subr.mxu0 0.0
      %1028 = vmatpush1.msra.mxu0 0.0
      %1029 = vmatprep.subr.mxu0 0.0
      %1030 = vmatpush1.msra.mxu0 0.0
      %1031 = vmatprep.subr.mxu0 0.0
      %1032 = vmatpush1.msra.mxu0 0.0
      %1033 = vmatprep.subr.mxu0 0.0
      %1034 = vmatpush1.msra.mxu0 0.0
      %1035 = vmatprep.subr.mxu0 0.0
      %1036 = vmatpush1.msra.mxu0 0.0
      %1037 = vmatprep.subr.mxu0 0.0
      %1038 = vmatpush1.msra.mxu0 0.0
      %1039 = vmatprep.subr.mxu0 0.0
      %1040 = vmatpush1.msra.mxu0 0.0
      %1041 = vmatprep.subr.mxu0 0.0
      %1042 = vmatpush1.msra.mxu0 0.0
      %1043 = vmatprep.subr.mxu0 0.0
      %1044 = vmatpush1.msra.mxu0 0.0
      %1045 = vmatprep.subr.mxu0 0.0
      %1046 = vmatpush1.msra.mxu0 0.0
      %1047 = vmatprep.subr.mxu0 0.0
      %1048 = vmatpush1.msra.mxu0 0.0
      %1049 = vmatprep.subr.mxu0 0.0
      %1050 = vmatpush1.msra.mxu0 0.0
      %1051 = vmatprep.mubr.f32.mxu0 0.0
      %v1052 = vand.u32 %v645, 4294901760
      %1053 = vmatmul.mubr.f32.gmra.mrb[0].mxu0 %v1052
      %v1054 = vpop.f32.mrb[0].mxu0
      %v1055 = vadd.f32 %v973, %v1054
      %v1056 = vpop.f32.mrb[0].mxu0
      %1057 = vmatprep.mubr.f32.mxu0 0.0
      %v1058 = vand.u32 %v648, 4294901760
      %1059 = vmatmul.mubr.f32.gmra.mrb[0].mxu0 %v1058
      %v1060 = vpop.f32.mrb[0].mxu0
      %v1061 = vadd.f32 %v981, %v1060
      %v1062 = vpop.f32.mrb[0].mxu0
      %1063 = vdwg.mxu0
      %1064 = vmatprep.subr.mxu0 0.0
      %v1065 = vand.u32 %v651, 4294901760
      %1066 = vmatpush1.msra.mxu0 %v1065
      %1067 = vmatprep.subr.mxu0 0.0
      %1068 = vmatpush1.msra.mxu0 0.0
      %1069 = vmatprep.subr.mxu0 0.0
      %1070 = vmatpush1.msra.mxu0 0.0
      %1071 = vmatprep.subr.mxu0 0.0
      %1072 = vmatpush1.msra.mxu0 0.0
      %1073 = vmatprep.subr.mxu0 0.0
      %1074 = vmatpush1.msra.mxu0 0.0
      %1075 = vmatprep.subr.mxu0 0.0
      %1076 = vmatpush1.msra.mxu0 0.0
      %1077 = vmatprep.subr.mxu0 0.0
      %1078 = vmatpush1.msra.mxu0 0.0
      %1079 = vmatprep.subr.mxu0 0.0
      %1080 = vmatpush1.msra.mxu0 0.0
      %1081 = vmatprep.subr.mxu0 0.0
      %1082 = vmatpush1.msra.mxu0 0.0
      %1083 = vmatprep.subr.mxu0 0.0
      %1084 = vmatpush1.msra.mxu0 0.0
      %1085 = vmatprep.subr.mxu0 0.0
      %1086 = vmatpush1.msra.mxu0 0.0
      %1087 = vmatprep.subr.mxu0 0.0
      %1088 = vmatpush1.msra.mxu0 0.0
      %1089 = vmatprep.subr.mxu0 0.0
      %1090 = vmatpush1.msra.mxu0 0.0
      %1091 = vmatprep.subr.mxu0 0.0
      %1092 = vmatpush1.msra.mxu0 0.0
      %1093 = vmatprep.subr.mxu0 0.0
      %1094 = vmatpush1.msra.mxu0 0.0
      %1095 = vmatprep.subr.mxu0 0.0
      %1096 = vmatpush1.msra.mxu0 0.0
      %1097 = vmatprep.subr.mxu0 0.0
      %1098 = vmatpush1.msra.mxu0 0.0
      %1099 = vmatprep.subr.mxu0 0.0
      %1100 = vmatpush1.msra.mxu0 0.0
      %1101 = vmatprep.subr.mxu0 0.0
      %1102 = vmatpush1.msra.mxu0 0.0
      %1103 = vmatprep.subr.mxu0 0.0
      %1104 = vmatpush1.msra.mxu0 0.0
      %1105 = vmatprep.subr.mxu0 0.0
      %1106 = vmatpush1.msra.mxu0 0.0
      %1107 = vmatprep.subr.mxu0 0.0
      %1108 = vmatpush1.msra.mxu0 0.0
      %1109 = vmatprep.subr.mxu0 0.0
      %1110 = vmatpush1.msra.mxu0 0.0
      %1111 = vmatprep.subr.mxu0 0.0
      %1112 = vmatpush1.msra.mxu0 0.0
      %1113 = vmatprep.subr.mxu0 0.0
      %1114 = vmatpush1.msra.mxu0 0.0
      %1115 = vmatprep.subr.mxu0 0.0
      %1116 = vmatpush1.msra.mxu0 0.0
      %1117 = vmatprep.subr.mxu0 0.0
      %1118 = vmatpush1.msra.mxu0 0.0
      %1119 = vmatprep.subr.mxu0 0.0
      %1120 = vmatpush1.msra.mxu0 0.0
      %1121 = vmatprep.subr.mxu0 0.0
      %1122 = vmatpush1.msra.mxu0 0.0
      %1123 = vmatprep.subr.mxu0 0.0
      %1124 = vmatpush1.msra.mxu0 0.0
      %1125 = vmatprep.subr.mxu0 0.0
      %1126 = vmatpush1.msra.mxu0 0.0
      %1127 = vmatprep.subr.mxu0 0.0
      %1128 = vmatpush1.msra.mxu0 0.0
      %1129 = vmatprep.mubr.f32.mxu0 0.0
      %v1130 = vand.u32 %v645, 4294901760
      %1131 = vmatmul.mubr.f32.gmra.mrb[0].mxu0 %v1130
      %v1132 = vpop.f32.mrb[0].mxu0
      %v1133 = vadd.f32 %v1055, %v1132
      %v1134 = vpop.f32.mrb[0].mxu0
      %1135 = vmatprep.mubr.f32.mxu0 0.0
      %v1136 = vand.u32 %v648, 4294901760
      %1137 = vmatmul.mubr.f32.gmra.mrb[0].mxu0 %v1136
      %v1138 = vpop.f32.mrb[0].mxu0
      %v1139 = vadd.f32 %v1061, %v1138
      %v1140 = vpop.f32.mrb[0].mxu0
      %1141 = vdwg.mxu0
      %v1142 = vmul.f32 %v628, %v628
      %v1143 = vmul.f32 %v629, %v629
      %v1144 = vsel %vm147, %v1142, 0.0
      %1145 = vadd.xlane.f32.xlu0 %v1144
      %v1146 = vpop.xlane.xlu0 %1145
      %v1147 = vsel %vm147, %v1143, 0.0
      %1148 = vadd.xlane.f32.xlu0 %v1147
      %v1149 = vpop.xlane.xlu0 %1148
      %v1150 = vmul.f32 %v611, %v611
      %v1151 = vsel %vm601, %v1150, 0.0
      %v1152 = vrot.slane %v1151, 4
      %v1153 = vadd.f32 %v1151, %v1152
      %v1154 = vrot.slane %v1153, 2
      %v1155 = vadd.f32 %v1153, %v1154
      %v1156 = vrot.slane %v1155, 1
      %v1157 = vadd.f32 %v1155, %v1156
      %v1158 = vmul.f32 %v1133, 2.0
      %v1159 = vmul.f32 %v1139, 2.0
      %v1160 = vsub.f32 %v1146, %v1158
      %v1161 = vsub.f32 %v1149, %v1159
      %v1162 = vadd.f32 %v1160, %v1157
      %v1163 = vadd.f32 %v1161, %v1157
      %vm1164 = vcmask 130048
      %v1165 = vsel %vm1164, %v1162, inf
      %v1166 = vsel %vm1164, %v1163, inf
      %v1167 = vmin.f32 %v1165, %v1166
      %v1168 = vrot.slane %v1167, 4
      %v1169 = vmin.f32 %v1167, %v1168
      %v1170 = vrot.slane %v1169, 2
      %v1171 = vmin.f32 %v1169, %v1170
      %v1172 = vrot.slane %v1171, 1
      %v1173 = vmin.f32 %v1171, %v1172
      %vm1174 = vcmp.eq.f32.partialorder %v1162, %v1173
      %vm1175 = vcmp.eq.f32.partialorder %v1163, %v1173
      %v1176 = vsel %vm1174, 1, 0
      %v1177 = vsel %vm1175, 1, 0
      %v1178 = vcvt.s32.f32 %v1176
      %v1179 = vcvt.s32.f32 %v1177
      %v1181 = vsel %vm1164, %v597, 0
      %1183 = vmatprep.subr.mxu0 0.0
      %v1184 = vand.u32 %v1178, 4294901760
      %1185 = vmatpush1.msra.mxu0 %v1184
      %1186 = vmatprep.subr.mxu0 0.0
      %v1187 = vand.u32 %v1179, 4294901760
      %1188 = vmatpush1.msra.mxu0 %v1187
      %1189 = vmatprep.subr.mxu0 0.0
      %1190 = vmatpush1.msra.mxu0 0.0
      %1191 = vmatprep.subr.mxu0 0.0
      %1192 = vmatpush1.msra.mxu0 0.0
      %1193 = vmatprep.subr.mxu0 0.0
      %1194 = vmatpush1.msra.mxu0 0.0
      %1195 = vmatprep.subr.mxu0 0.0
      %1196 = vmatpush1.msra.mxu0 0.0
      %1197 = vmatprep.subr.mxu0 0.0
      %1198 = vmatpush1.msra.mxu0 0.0
      %1199 = vmatprep.subr.mxu0 0.0
      %1200 = vmatpush1.msra.mxu0 0.0
      %1201 = vmatprep.subr.mxu0 0.0
      %1202 = vmatpush1.msra.mxu0 0.0
      %1203 = vmatprep.subr.mxu0 0.0
      %1204 = vmatpush1.msra.mxu0 0.0
      %1205 = vmatprep.subr.mxu0 0.0
      %1206 = vmatpush1.msra.mxu0 0.0
      %1207 = vmatprep.subr.mxu0 0.0
      %1208 = vmatpush1.msra.mxu0 0.0
      %1209 = vmatprep.subr.mxu0 0.0
      %1210 = vmatpush1.msra.mxu0 0.0
      %1211 = vmatprep.subr.mxu0 0.0
      %1212 = vmatpush1.msra.mxu0 0.0
      %1213 = vmatprep.subr.mxu0 0.0
      %1214 = vmatpush1.msra.mxu0 0.0
      %1215 = vmatprep.subr.mxu0 0.0
      %1216 = vmatpush1.msra.mxu0 0.0
      %1217 = vmatprep.subr.mxu0 0.0
      %1218 = vmatpush1.msra.mxu0 0.0
      %1219 = vmatprep.subr.mxu0 0.0
      %1220 = vmatpush1.msra.mxu0 0.0
      %1221 = vmatprep.subr.mxu0 0.0
      %1222 = vmatpush1.msra.mxu0 0.0
      %1223 = vmatprep.subr.mxu0 0.0
      %1224 = vmatpush1.msra.mxu0 0.0
      %1225 = vmatprep.subr.mxu0 0.0
      %1226 = vmatpush1.msra.mxu0 0.0
      %1227 = vmatprep.subr.mxu0 0.0
      %1228 = vmatpush1.msra.mxu0 0.0
      %1229 = vmatprep.subr.mxu0 0.0
      %1230 = vmatpush1.msra.mxu0 0.0
      %1231 = vmatprep.subr.mxu0 0.0
      %1232 = vmatpush1.msra.mxu0 0.0
      %1233 = vmatprep.subr.mxu0 0.0
      %1234 = vmatpush1.msra.mxu0 0.0
      %1235 = vmatprep.subr.mxu0 0.0
      %1236 = vmatpush1.msra.mxu0 0.0
      %1237 = vmatprep.subr.mxu0 0.0
      %1238 = vmatpush1.msra.mxu0 0.0
      %1239 = vmatprep.subr.mxu0 0.0
      %1240 = vmatpush1.msra.mxu0 0.0
      %1241 = vmatprep.subr.mxu0 0.0
      %1242 = vmatpush1.msra.mxu0 0.0
      %1243 = vmatprep.subr.mxu0 0.0
      %1244 = vmatpush1.msra.mxu0 0.0
      %1245 = vmatprep.subr.mxu0 0.0
      %1246 = vmatpush1.msra.mxu0 0.0
      %1247 = vmatprep.subr.mxu0 0.0
      %1248 = vmatpush1.msra.mxu0 0.0
      %1249 = vmatprep.mubr.f32.mxu0 0.0
      %v1250 = vand.u32 %v1181, 4294901760
      %v1251 = vsub.f32 %v1181, %v1250
      %v1252 = vand.u32 %v1251, 4294901760
      %v1253 = vsub.f32 %v1251, %v1252
      %v1254 = vand.u32 %v1253, 4294901760
      %1255 = vmatmul.mubr.f32.gmra.mrb[0].mxu0 %v1254
      %v1256 = vpop.f32.mrb[0].mxu0
      %v1257 = vadd.f32 0.0, %v1256
      %v1258 = vpop.f32.mrb[0].mxu0
      %1259 = vdwg.mxu0
      %1260 = vmatprep.subr.mxu0 0.0
      %v1261 = vand.u32 %v1178, 4294901760
      %v1262 = vsub.f32 %v1178, %v1261
      %v1263 = vand.u32 %v1262, 4294901760
      %v1264 = vsub.f32 %v1262, %v1263
      %v1265 = vand.u32 %v1264, 4294901760
      %1266 = vmatpush1.msra.mxu0 %v1265
      %1267 = vmatprep.subr.mxu0 0.0
      %v1268 = vand.u32 %v1179, 4294901760
      %v1269 = vsub.f32 %v1179, %v1268
      %v1270 = vand.u32 %v1269, 4294901760
      %v1271 = vsub.f32 %v1269, %v1270
      %v1272 = vand.u32 %v1271, 4294901760
      %1273 = vmatpush1.msra.mxu0 %v1272
      %1274 = vmatprep.subr.mxu0 0.0
      %1275 = vmatpush1.msra.mxu0 0.0
      %1276 = vmatprep.subr.mxu0 0.0
      %1277 = vmatpush1.msra.mxu0 0.0
      %1278 = vmatprep.subr.mxu0 0.0
      %1279 = vmatpush1.msra.mxu0 0.0
      %1280 = vmatprep.subr.mxu0 0.0
      %1281 = vmatpush1.msra.mxu0 0.0
      %1282 = vmatprep.subr.mxu0 0.0
      %1283 = vmatpush1.msra.mxu0 0.0
      %1284 = vmatprep.subr.mxu0 0.0
      %1285 = vmatpush1.msra.mxu0 0.0
      %1286 = vmatprep.subr.mxu0 0.0
      %1287 = vmatpush1.msra.mxu0 0.0
      %1288 = vmatprep.subr.mxu0 0.0
      %1289 = vmatpush1.msra.mxu0 0.0
      %1290 = vmatprep.subr.mxu0 0.0
      %1291 = vmatpush1.msra.mxu0 0.0
      %1292 = vmatprep.subr.mxu0 0.0
      %1293 = vmatpush1.msra.mxu0 0.0
      %1294 = vmatprep.subr.mxu0 0.0
      %1295 = vmatpush1.msra.mxu0 0.0
      %1296 = vmatprep.subr.mxu0 0.0
      %1297 = vmatpush1.msra.mxu0 0.0
      %1298 = vmatprep.subr.mxu0 0.0
      %1299 = vmatpush1.msra.mxu0 0.0
      %1300 = vmatprep.subr.mxu0 0.0
      %1301 = vmatpush1.msra.mxu0 0.0
      %1302 = vmatprep.subr.mxu0 0.0
      %1303 = vmatpush1.msra.mxu0 0.0
      %1304 = vmatprep.subr.mxu0 0.0
      %1305 = vmatpush1.msra.mxu0 0.0
      %1306 = vmatprep.subr.mxu0 0.0
      %1307 = vmatpush1.msra.mxu0 0.0
      %1308 = vmatprep.subr.mxu0 0.0
      %1309 = vmatpush1.msra.mxu0 0.0
      %1310 = vmatprep.subr.mxu0 0.0
      %1311 = vmatpush1.msra.mxu0 0.0
      %1312 = vmatprep.subr.mxu0 0.0
      %1313 = vmatpush1.msra.mxu0 0.0
      %1314 = vmatprep.subr.mxu0 0.0
      %1315 = vmatpush1.msra.mxu0 0.0
      %1316 = vmatprep.subr.mxu0 0.0
      %1317 = vmatpush1.msra.mxu0 0.0
      %1318 = vmatprep.subr.mxu0 0.0
      %1319 = vmatpush1.msra.mxu0 0.0
      %1320 = vmatprep.subr.mxu0 0.0
      %1321 = vmatpush1.msra.mxu0 0.0
      %1322 = vmatprep.subr.mxu0 0.0
      %1323 = vmatpush1.msra.mxu0 0.0
      %1324 = vmatprep.subr.mxu0 0.0
      %1325 = vmatpush1.msra.mxu0 0.0
      %1326 = vmatprep.subr.mxu0 0.0
      %1327 = vmatpush1.msra.mxu0 0.0
      %1328 = vmatprep.subr.mxu0 0.0
      %1329 = vmatpush1.msra.mxu0 0.0
      %1330 = vmatprep.subr.mxu0 0.0
      %1331 = vmatpush1.msra.mxu0 0.0
      %1332 = vmatprep.subr.mxu0 0.0
      %1333 = vmatpush1.msra.mxu0 0.0
      %1334 = vmatprep.mubr.f32.mxu0 0.0
      %v1335 = vand.u32 %v1181, 4294901760
      %1336 = vmatmul.mubr.f32.gmra.mrb[0].mxu0 %v1335
      %v1337 = vpop.f32.mrb[0].mxu0
      %v1338 = vadd.f32 %v1257, %v1337
      %v1339 = vpop.f32.mrb[0].mxu0
      %1340 = vdwg.mxu0
      %1341 = vmatprep.subr.mxu0 0.0
      %v1342 = vand.u32 %v1178, 4294901760
      %v1343 = vsub.f32 %v1178, %v1342
      %1344 = vmatpush1.msra.mxu0 %v1343
      %1345 = vmatprep.subr.mxu0 0.0
      %v1346 = vand.u32 %v1179, 4294901760
      %v1347 = vsub.f32 %v1179, %v1346
      %1348 = vmatpush1.msra.mxu0 %v1347
      %1349 = vmatprep.subr.mxu0 0.0
      %1350 = vmatpush1.msra.mxu0 0.0
      %1351 = vmatprep.subr.mxu0 0.0
      %1352 = vmatpush1.msra.mxu0 0.0
      %1353 = vmatprep.subr.mxu0 0.0
      %1354 = vmatpush1.msra.mxu0 0.0
      %1355 = vmatprep.subr.mxu0 0.0
      %1356 = vmatpush1.msra.mxu0 0.0
      %1357 = vmatprep.subr.mxu0 0.0
      %1358 = vmatpush1.msra.mxu0 0.0
      %1359 = vmatprep.subr.mxu0 0.0
      %1360 = vmatpush1.msra.mxu0 0.0
      %1361 = vmatprep.subr.mxu0 0.0
      %1362 = vmatpush1.msra.mxu0 0.0
      %1363 = vmatprep.subr.mxu0 0.0
      %1364 = vmatpush1.msra.mxu0 0.0
      %1365 = vmatprep.subr.mxu0 0.0
      %1366 = vmatpush1.msra.mxu0 0.0
      %1367 = vmatprep.subr.mxu0 0.0
      %1368 = vmatpush1.msra.mxu0 0.0
      %1369 = vmatprep.subr.mxu0 0.0
      %1370 = vmatpush1.msra.mxu0 0.0
      %1371 = vmatprep.subr.mxu0 0.0
      %1372 = vmatpush1.msra.mxu0 0.0
      %1373 = vmatprep.subr.mxu0 0.0
      %1374 = vmatpush1.msra.mxu0 0.0
      %1375 = vmatprep.subr.mxu0 0.0
      %1376 = vmatpush1.msra.mxu0 0.0
      %1377 = vmatprep.subr.mxu0 0.0
      %1378 = vmatpush1.msra.mxu0 0.0
      %1379 = vmatprep.subr.mxu0 0.0
      %1380 = vmatpush1.msra.mxu0 0.0
      %1381 = vmatprep.subr.mxu0 0.0
      %1382 = vmatpush1.msra.mxu0 0.0
      %1383 = vmatprep.subr.mxu0 0.0
      %1384 = vmatpush1.msra.mxu0 0.0
      %1385 = vmatprep.subr.mxu0 0.0
      %1386 = vmatpush1.msra.mxu0 0.0
      %1387 = vmatprep.subr.mxu0 0.0
      %1388 = vmatpush1.msra.mxu0 0.0
      %1389 = vmatprep.subr.mxu0 0.0
      %1390 = vmatpush1.msra.mxu0 0.0
      %1391 = vmatprep.subr.mxu0 0.0
      %1392 = vmatpush1.msra.mxu0 0.0
      %1393 = vmatprep.subr.mxu0 0.0
      %1394 = vmatpush1.msra.mxu0 0.0
      %1395 = vmatprep.subr.mxu0 0.0
      %1396 = vmatpush1.msra.mxu0 0.0
      %1397 = vmatprep.subr.mxu0 0.0
      %1398 = vmatpush1.msra.mxu0 0.0
      %1399 = vmatprep.subr.mxu0 0.0
      %1400 = vmatpush1.msra.mxu0 0.0
      %1401 = vmatprep.subr.mxu0 0.0
      %1402 = vmatpush1.msra.mxu0 0.0
      %1403 = vmatprep.subr.mxu0 0.0
      %1404 = vmatpush1.msra.mxu0 0.0
      %1405 = vmatprep.subr.mxu0 0.0
      %1406 = vmatpush1.msra.mxu0 0.0
      %1407 = vmatprep.subr.mxu0 0.0
      %1408 = vmatpush1.msra.mxu0 0.0
      %1409 = vmatprep.mubr.f32.mxu0 0.0
      %v1410 = vand.u32 %v1181, 4294901760
      %v1411 = vsub.f32 %v1181, %v1410
      %1412 = vmatmul.mubr.f32.gmra.mrb[0].mxu0 %v1411
      %v1413 = vpop.f32.mrb[0].mxu0
      %v1414 = vadd.f32 %v1338, %v1413
      %v1415 = vpop.f32.mrb[0].mxu0
      %1416 = vdwg.mxu0
      %1417 = vmatprep.subr.mxu0 0.0
      %v1418 = vand.u32 %v1178, 4294901760
      %1419 = vmatpush1.msra.mxu0 %v1418
      %1420 = vmatprep.subr.mxu0 0.0
      %v1421 = vand.u32 %v1179, 4294901760
      %1422 = vmatpush1.msra.mxu0 %v1421
      %1423 = vmatprep.subr.mxu0 0.0
      %1424 = vmatpush1.msra.mxu0 0.0
      %1425 = vmatprep.subr.mxu0 0.0
      %1426 = vmatpush1.msra.mxu0 0.0
      %1427 = vmatprep.subr.mxu0 0.0
      %1428 = vmatpush1.msra.mxu0 0.0
      %1429 = vmatprep.subr.mxu0 0.0
      %1430 = vmatpush1.msra.mxu0 0.0
      %1431 = vmatprep.subr.mxu0 0.0
      %1432 = vmatpush1.msra.mxu0 0.0
      %1433 = vmatprep.subr.mxu0 0.0
      %1434 = vmatpush1.msra.mxu0 0.0
      %1435 = vmatprep.subr.mxu0 0.0
      %1436 = vmatpush1.msra.mxu0 0.0
      %1437 = vmatprep.subr.mxu0 0.0
      %1438 = vmatpush1.msra.mxu0 0.0
      %1439 = vmatprep.subr.mxu0 0.0
      %1440 = vmatpush1.msra.mxu0 0.0
      %1441 = vmatprep.subr.mxu0 0.0
      %1442 = vmatpush1.msra.mxu0 0.0
      %1443 = vmatprep.subr.mxu0 0.0
      %1444 = vmatpush1.msra.mxu0 0.0
      %1445 = vmatprep.subr.mxu0 0.0
      %1446 = vmatpush1.msra.mxu0 0.0
      %1447 = vmatprep.subr.mxu0 0.0
      %1448 = vmatpush1.msra.mxu0 0.0
      %1449 = vmatprep.subr.mxu0 0.0
      %1450 = vmatpush1.msra.mxu0 0.0
      %1451 = vmatprep.subr.mxu0 0.0
      %1452 = vmatpush1.msra.mxu0 0.0
      %1453 = vmatprep.subr.mxu0 0.0
      %1454 = vmatpush1.msra.mxu0 0.0
      %1455 = vmatprep.subr.mxu0 0.0
      %1456 = vmatpush1.msra.mxu0 0.0
      %1457 = vmatprep.subr.mxu0 0.0
      %1458 = vmatpush1.msra.mxu0 0.0
      %1459 = vmatprep.subr.mxu0 0.0
      %1460 = vmatpush1.msra.mxu0 0.0
      %1461 = vmatprep.subr.mxu0 0.0
      %1462 = vmatpush1.msra.mxu0 0.0
      %1463 = vmatprep.subr.mxu0 0.0
      %1464 = vmatpush1.msra.mxu0 0.0
      %1465 = vmatprep.subr.mxu0 0.0
      %1466 = vmatpush1.msra.mxu0 0.0
      %1467 = vmatprep.subr.mxu0 0.0
      %1468 = vmatpush1.msra.mxu0 0.0
      %1469 = vmatprep.subr.mxu0 0.0
      %1470 = vmatpush1.msra.mxu0 0.0
      %1471 = vmatprep.subr.mxu0 0.0
      %1472 = vmatpush1.msra.mxu0 0.0
      %1473 = vmatprep.subr.mxu0 0.0
      %1474 = vmatpush1.msra.mxu0 0.0
      %1475 = vmatprep.subr.mxu0 0.0
      %1476 = vmatpush1.msra.mxu0 0.0
      %1477 = vmatprep.subr.mxu0 0.0
      %1478 = vmatpush1.msra.mxu0 0.0
      %1479 = vmatprep.subr.mxu0 0.0
      %1480 = vmatpush1.msra.mxu0 0.0
      %1481 = vmatprep.subr.mxu0 0.0
      %1482 = vmatpush1.msra.mxu0 0.0
      %1483 = vmatprep.mubr.f32.mxu0 0.0
      %v1484 = vand.u32 %v1181, 4294901760
      %v1485 = vsub.f32 %v1181, %v1484
      %v1486 = vand.u32 %v1485, 4294901760
      %1487 = vmatmul.mubr.f32.gmra.mrb[0].mxu0 %v1486
      %v1488 = vpop.f32.mrb[0].mxu0
      %v1489 = vadd.f32 %v1414, %v1488
      %v1490 = vpop.f32.mrb[0].mxu0
      %1491 = vdwg.mxu0
      %1492 = vmatprep.subr.mxu0 0.0
      %v1493 = vand.u32 %v1178, 4294901760
      %v1494 = vsub.f32 %v1178, %v1493
      %v1495 = vand.u32 %v1494, 4294901760
      %1496 = vmatpush1.msra.mxu0 %v1495
      %1497 = vmatprep.subr.mxu0 0.0
      %v1498 = vand.u32 %v1179, 4294901760
      %v1499 = vsub.f32 %v1179, %v1498
      %v1500 = vand.u32 %v1499, 4294901760
      %1501 = vmatpush1.msra.mxu0 %v1500
      %1502 = vmatprep.subr.mxu0 0.0
      %1503 = vmatpush1.msra.mxu0 0.0
      %1504 = vmatprep.subr.mxu0 0.0
      %1505 = vmatpush1.msra.mxu0 0.0
      %1506 = vmatprep.subr.mxu0 0.0
      %1507 = vmatpush1.msra.mxu0 0.0
      %1508 = vmatprep.subr.mxu0 0.0
      %1509 = vmatpush1.msra.mxu0 0.0
      %1510 = vmatprep.subr.mxu0 0.0
      %1511 = vmatpush1.msra.mxu0 0.0
      %1512 = vmatprep.subr.mxu0 0.0
      %1513 = vmatpush1.msra.mxu0 0.0
      %1514 = vmatprep.subr.mxu0 0.0
      %1515 = vmatpush1.msra.mxu0 0.0
      %1516 = vmatprep.subr.mxu0 0.0
      %1517 = vmatpush1.msra.mxu0 0.0
      %1518 = vmatprep.subr.mxu0 0.0
      %1519 = vmatpush1.msra.mxu0 0.0
      %1520 = vmatprep.subr.mxu0 0.0
      %1521 = vmatpush1.msra.mxu0 0.0
      %1522 = vmatprep.subr.mxu0 0.0
      %1523 = vmatpush1.msra.mxu0 0.0
      %1524 = vmatprep.subr.mxu0 0.0
      %1525 = vmatpush1.msra.mxu0 0.0
      %1526 = vmatprep.subr.mxu0 0.0
      %1527 = vmatpush1.msra.mxu0 0.0
      %1528 = vmatprep.subr.mxu0 0.0
      %1529 = vmatpush1.msra.mxu0 0.0
      %1530 = vmatprep.subr.mxu0 0.0
      %1531 = vmatpush1.msra.mxu0 0.0
      %1532 = vmatprep.subr.mxu0 0.0
      %1533 = vmatpush1.msra.mxu0 0.0
      %1534 = vmatprep.subr.mxu0 0.0
      %1535 = vmatpush1.msra.mxu0 0.0
      %1536 = vmatprep.subr.mxu0 0.0
      %1537 = vmatpush1.msra.mxu0 0.0
      %1538 = vmatprep.subr.mxu0 0.0
      %1539 = vmatpush1.msra.mxu0 0.0
      %1540 = vmatprep.subr.mxu0 0.0
      %1541 = vmatpush1.msra.mxu0 0.0
      %1542 = vmatprep.subr.mxu0 0.0
      %1543 = vmatpush1.msra.mxu0 0.0
      %1544 = vmatprep.subr.mxu0 0.0
      %1545 = vmatpush1.msra.mxu0 0.0
      %1546 = vmatprep.subr.mxu0 0.0
      %1547 = vmatpush1.msra.mxu0 0.0
      %1548 = vmatprep.subr.mxu0 0.0
      %1549 = vmatpush1.msra.mxu0 0.0
      %1550 = vmatprep.subr.mxu0 0.0
      %1551 = vmatpush1.msra.mxu0 0.0
      %1552 = vmatprep.subr.mxu0 0.0
      %1553 = vmatpush1.msra.mxu0 0.0
      %1554 = vmatprep.subr.mxu0 0.0
      %1555 = vmatpush1.msra.mxu0 0.0
      %1556 = vmatprep.subr.mxu0 0.0
      %1557 = vmatpush1.msra.mxu0 0.0
      %1558 = vmatprep.subr.mxu0 0.0
      %1559 = vmatpush1.msra.mxu0 0.0
      %1560 = vmatprep.subr.mxu0 0.0
      %1561 = vmatpush1.msra.mxu0 0.0
      %1562 = vmatprep.mubr.f32.mxu0 0.0
      %v1563 = vand.u32 %v1181, 4294901760
      %1564 = vmatmul.mubr.f32.gmra.mrb[0].mxu0 %v1563
      %v1565 = vpop.f32.mrb[0].mxu0
      %v1566 = vadd.f32 %v1489, %v1565
      %v1567 = vpop.f32.mrb[0].mxu0
      %1568 = vdwg.mxu0
      %1569 = vmatprep.subr.mxu0 0.0
      %v1570 = vand.u32 %v1178, 4294901760
      %1571 = vmatpush1.msra.mxu0 %v1570
      %1572 = vmatprep.subr.mxu0 0.0
      %v1573 = vand.u32 %v1179, 4294901760
      %1574 = vmatpush1.msra.mxu0 %v1573
      %1575 = vmatprep.subr.mxu0 0.0
      %1576 = vmatpush1.msra.mxu0 0.0
      %1577 = vmatprep.subr.mxu0 0.0
      %1578 = vmatpush1.msra.mxu0 0.0
      %1579 = vmatprep.subr.mxu0 0.0
      %1580 = vmatpush1.msra.mxu0 0.0
      %1581 = vmatprep.subr.mxu0 0.0
      %1582 = vmatpush1.msra.mxu0 0.0
      %1583 = vmatprep.subr.mxu0 0.0
      %1584 = vmatpush1.msra.mxu0 0.0
      %1585 = vmatprep.subr.mxu0 0.0
      %1586 = vmatpush1.msra.mxu0 0.0
      %1587 = vmatprep.subr.mxu0 0.0
      %1588 = vmatpush1.msra.mxu0 0.0
      %1589 = vmatprep.subr.mxu0 0.0
      %1590 = vmatpush1.msra.mxu0 0.0
      %1591 = vmatprep.subr.mxu0 0.0
      %1592 = vmatpush1.msra.mxu0 0.0
      %1593 = vmatprep.subr.mxu0 0.0
      %1594 = vmatpush1.msra.mxu0 0.0
      %1595 = vmatprep.subr.mxu0 0.0
      %1596 = vmatpush1.msra.mxu0 0.0
      %1597 = vmatprep.subr.mxu0 0.0
      %1598 = vmatpush1.msra.mxu0 0.0
      %1599 = vmatprep.subr.mxu0 0.0
      %1600 = vmatpush1.msra.mxu0 0.0
      %1601 = vmatprep.subr.mxu0 0.0
      %1602 = vmatpush1.msra.mxu0 0.0
      %1603 = vmatprep.subr.mxu0 0.0
      %1604 = vmatpush1.msra.mxu0 0.0
      %1605 = vmatprep.subr.mxu0 0.0
      %1606 = vmatpush1.msra.mxu0 0.0
      %1607 = vmatprep.subr.mxu0 0.0
      %1608 = vmatpush1.msra.mxu0 0.0
      %1609 = vmatprep.subr.mxu0 0.0
      %1610 = vmatpush1.msra.mxu0 0.0
      %1611 = vmatprep.subr.mxu0 0.0
      %1612 = vmatpush1.msra.mxu0 0.0
      %1613 = vmatprep.subr.mxu0 0.0
      %1614 = vmatpush1.msra.mxu0 0.0
      %1615 = vmatprep.subr.mxu0 0.0
      %1616 = vmatpush1.msra.mxu0 0.0
      %1617 = vmatprep.subr.mxu0 0.0
      %1618 = vmatpush1.msra.mxu0 0.0
      %1619 = vmatprep.subr.mxu0 0.0
      %1620 = vmatpush1.msra.mxu0 0.0
      %1621 = vmatprep.subr.mxu0 0.0
      %1622 = vmatpush1.msra.mxu0 0.0
      %1623 = vmatprep.subr.mxu0 0.0
      %1624 = vmatpush1.msra.mxu0 0.0
      %1625 = vmatprep.subr.mxu0 0.0
      %1626 = vmatpush1.msra.mxu0 0.0
      %1627 = vmatprep.subr.mxu0 0.0
      %1628 = vmatpush1.msra.mxu0 0.0
      %1629 = vmatprep.subr.mxu0 0.0
      %1630 = vmatpush1.msra.mxu0 0.0
      %1631 = vmatprep.subr.mxu0 0.0
      %1632 = vmatpush1.msra.mxu0 0.0
      %1633 = vmatprep.subr.mxu0 0.0
      %1634 = vmatpush1.msra.mxu0 0.0
      %1635 = vmatprep.mubr.f32.mxu0 0.0
      %v1636 = vand.u32 %v1181, 4294901760
      %1637 = vmatmul.mubr.f32.gmra.mrb[0].mxu0 %v1636
      %v1638 = vpop.f32.mrb[0].mxu0
      %v1639 = vadd.f32 %v1566, %v1638
      %v1640 = vpop.f32.mrb[0].mxu0
      %1641 = vdwg.mxu0
      %v1642 = vsub.f32 %v1639, %v597
      %v1643 = vsel %vm1174, 1e+30, %v1162
      %v1644 = vsel %vm1175, 1e+30, %v1163
      %v1645 = vsel %vm1164, %v1643, inf
      %v1646 = vsel %vm1164, %v1644, inf
      %v1647 = vmin.f32 %v1645, %v1646
      %v1648 = vrot.slane %v1647, 4
      %v1649 = vmin.f32 %v1647, %v1648
      %v1650 = vrot.slane %v1649, 2
      %v1651 = vmin.f32 %v1649, %v1650
      %v1652 = vrot.slane %v1651, 1
      %v1653 = vmin.f32 %v1651, %v1652
      %vm1654 = vcmp.eq.f32.partialorder %v1643, %v1653
      %vm1655 = vcmp.eq.f32.partialorder %v1644, %v1653
      %v1656 = vsel %vm1654, 1, 0
      %v1657 = vsel %vm1655, 1, 0
      %v1658 = vcvt.s32.f32 %v1656
      %v1659 = vcvt.s32.f32 %v1657
      %1660 = vmatprep.subr.mxu0 0.0
      %v1661 = vand.u32 %v1658, 4294901760
      %1662 = vmatpush1.msra.mxu0 %v1661
      %1663 = vmatprep.subr.mxu0 0.0
      %v1664 = vand.u32 %v1659, 4294901760
      %1665 = vmatpush1.msra.mxu0 %v1664
      %1666 = vmatprep.subr.mxu0 0.0
      %1667 = vmatpush1.msra.mxu0 0.0
      %1668 = vmatprep.subr.mxu0 0.0
      %1669 = vmatpush1.msra.mxu0 0.0
      %1670 = vmatprep.subr.mxu0 0.0
      %1671 = vmatpush1.msra.mxu0 0.0
      %1672 = vmatprep.subr.mxu0 0.0
      %1673 = vmatpush1.msra.mxu0 0.0
      %1674 = vmatprep.subr.mxu0 0.0
      %1675 = vmatpush1.msra.mxu0 0.0
      %1676 = vmatprep.subr.mxu0 0.0
      %1677 = vmatpush1.msra.mxu0 0.0
      %1678 = vmatprep.subr.mxu0 0.0
      %1679 = vmatpush1.msra.mxu0 0.0
      %1680 = vmatprep.subr.mxu0 0.0
      %1681 = vmatpush1.msra.mxu0 0.0
      %1682 = vmatprep.subr.mxu0 0.0
      %1683 = vmatpush1.msra.mxu0 0.0
      %1684 = vmatprep.subr.mxu0 0.0
      %1685 = vmatpush1.msra.mxu0 0.0
      %1686 = vmatprep.subr.mxu0 0.0
      %1687 = vmatpush1.msra.mxu0 0.0
      %1688 = vmatprep.subr.mxu0 0.0
      %1689 = vmatpush1.msra.mxu0 0.0
      %1690 = vmatprep.subr.mxu0 0.0
      %1691 = vmatpush1.msra.mxu0 0.0
      %1692 = vmatprep.subr.mxu0 0.0
      %1693 = vmatpush1.msra.mxu0 0.0
      %1694 = vmatprep.subr.mxu0 0.0
      %1695 = vmatpush1.msra.mxu0 0.0
      %1696 = vmatprep.subr.mxu0 0.0
      %1697 = vmatpush1.msra.mxu0 0.0
      %1698 = vmatprep.subr.mxu0 0.0
      %1699 = vmatpush1.msra.mxu0 0.0
      %1700 = vmatprep.subr.mxu0 0.0
      %1701 = vmatpush1.msra.mxu0 0.0
      %1702 = vmatprep.subr.mxu0 0.0
      %1703 = vmatpush1.msra.mxu0 0.0
      %1704 = vmatprep.subr.mxu0 0.0
      %1705 = vmatpush1.msra.mxu0 0.0
      %1706 = vmatprep.subr.mxu0 0.0
      %1707 = vmatpush1.msra.mxu0 0.0
      %1708 = vmatprep.subr.mxu0 0.0
      %1709 = vmatpush1.msra.mxu0 0.0
      %1710 = vmatprep.subr.mxu0 0.0
      %1711 = vmatpush1.msra.mxu0 0.0
      %1712 = vmatprep.subr.mxu0 0.0
      %1713 = vmatpush1.msra.mxu0 0.0
      %1714 = vmatprep.subr.mxu0 0.0
      %1715 = vmatpush1.msra.mxu0 0.0
      %1716 = vmatprep.subr.mxu0 0.0
      %1717 = vmatpush1.msra.mxu0 0.0
      %1718 = vmatprep.subr.mxu0 0.0
      %1719 = vmatpush1.msra.mxu0 0.0
      %1720 = vmatprep.subr.mxu0 0.0
      %1721 = vmatpush1.msra.mxu0 0.0
      %1722 = vmatprep.subr.mxu0 0.0
      %1723 = vmatpush1.msra.mxu0 0.0
      %1724 = vmatprep.subr.mxu0 0.0
      %1725 = vmatpush1.msra.mxu0 0.0
      %1726 = vmatprep.mubr.f32.mxu0 0.0
      %v1727 = vand.u32 %v1181, 4294901760
      %v1728 = vsub.f32 %v1181, %v1727
      %v1729 = vand.u32 %v1728, 4294901760
      %v1730 = vsub.f32 %v1728, %v1729
      %v1731 = vand.u32 %v1730, 4294901760
      %1732 = vmatmul.mubr.f32.gmra.mrb[0].mxu0 %v1731
      %v1733 = vpop.f32.mrb[0].mxu0
      %v1734 = vadd.f32 0.0, %v1733
      %v1735 = vpop.f32.mrb[0].mxu0
      %1736 = vdwg.mxu0
      %1737 = vmatprep.subr.mxu0 0.0
      %v1738 = vand.u32 %v1658, 4294901760
      %v1739 = vsub.f32 %v1658, %v1738
      %v1740 = vand.u32 %v1739, 4294901760
      %v1741 = vsub.f32 %v1739, %v1740
      %v1742 = vand.u32 %v1741, 4294901760
      %1743 = vmatpush1.msra.mxu0 %v1742
      %1744 = vmatprep.subr.mxu0 0.0
      %v1745 = vand.u32 %v1659, 4294901760
      %v1746 = vsub.f32 %v1659, %v1745
      %v1747 = vand.u32 %v1746, 4294901760
      %v1748 = vsub.f32 %v1746, %v1747
      %v1749 = vand.u32 %v1748, 4294901760
      %1750 = vmatpush1.msra.mxu0 %v1749
      %1751 = vmatprep.subr.mxu0 0.0
      %1752 = vmatpush1.msra.mxu0 0.0
      %1753 = vmatprep.subr.mxu0 0.0
      %1754 = vmatpush1.msra.mxu0 0.0
      %1755 = vmatprep.subr.mxu0 0.0
      %1756 = vmatpush1.msra.mxu0 0.0
      %1757 = vmatprep.subr.mxu0 0.0
      %1758 = vmatpush1.msra.mxu0 0.0
      %1759 = vmatprep.subr.mxu0 0.0
      %1760 = vmatpush1.msra.mxu0 0.0
      %1761 = vmatprep.subr.mxu0 0.0
      %1762 = vmatpush1.msra.mxu0 0.0
      %1763 = vmatprep.subr.mxu0 0.0
      %1764 = vmatpush1.msra.mxu0 0.0
      %1765 = vmatprep.subr.mxu0 0.0
      %1766 = vmatpush1.msra.mxu0 0.0
      %1767 = vmatprep.subr.mxu0 0.0
      %1768 = vmatpush1.msra.mxu0 0.0
      %1769 = vmatprep.subr.mxu0 0.0
      %1770 = vmatpush1.msra.mxu0 0.0
      %1771 = vmatprep.subr.mxu0 0.0
      %1772 = vmatpush1.msra.mxu0 0.0
      %1773 = vmatprep.subr.mxu0 0.0
      %1774 = vmatpush1.msra.mxu0 0.0
      %1775 = vmatprep.subr.mxu0 0.0
      %1776 = vmatpush1.msra.mxu0 0.0
      %1777 = vmatprep.subr.mxu0 0.0
      %1778 = vmatpush1.msra.mxu0 0.0
      %1779 = vmatprep.subr.mxu0 0.0
      %1780 = vmatpush1.msra.mxu0 0.0
      %1781 = vmatprep.subr.mxu0 0.0
      %1782 = vmatpush1.msra.mxu0 0.0
      %1783 = vmatprep.subr.mxu0 0.0
      %1784 = vmatpush1.msra.mxu0 0.0
      %1785 = vmatprep.subr.mxu0 0.0
      %1786 = vmatpush1.msra.mxu0 0.0
      %1787 = vmatprep.subr.mxu0 0.0
      %1788 = vmatpush1.msra.mxu0 0.0
      %1789 = vmatprep.subr.mxu0 0.0
      %1790 = vmatpush1.msra.mxu0 0.0
      %1791 = vmatprep.subr.mxu0 0.0
      %1792 = vmatpush1.msra.mxu0 0.0
      %1793 = vmatprep.subr.mxu0 0.0
      %1794 = vmatpush1.msra.mxu0 0.0
      %1795 = vmatprep.subr.mxu0 0.0
      %1796 = vmatpush1.msra.mxu0 0.0
      %1797 = vmatprep.subr.mxu0 0.0
      %1798 = vmatpush1.msra.mxu0 0.0
      %1799 = vmatprep.subr.mxu0 0.0
      %1800 = vmatpush1.msra.mxu0 0.0
      %1801 = vmatprep.subr.mxu0 0.0
      %1802 = vmatpush1.msra.mxu0 0.0
      %1803 = vmatprep.subr.mxu0 0.0
      %1804 = vmatpush1.msra.mxu0 0.0
      %1805 = vmatprep.subr.mxu0 0.0
      %1806 = vmatpush1.msra.mxu0 0.0
      %1807 = vmatprep.subr.mxu0 0.0
      %1808 = vmatpush1.msra.mxu0 0.0
      %1809 = vmatprep.subr.mxu0 0.0
      %1810 = vmatpush1.msra.mxu0 0.0
      %1811 = vmatprep.mubr.f32.mxu0 0.0
      %v1812 = vand.u32 %v1181, 4294901760
      %1813 = vmatmul.mubr.f32.gmra.mrb[0].mxu0 %v1812
      %v1814 = vpop.f32.mrb[0].mxu0
      %v1815 = vadd.f32 %v1734, %v1814
      %v1816 = vpop.f32.mrb[0].mxu0
      %1817 = vdwg.mxu0
      %1818 = vmatprep.subr.mxu0 0.0
      %v1819 = vand.u32 %v1658, 4294901760
      %v1820 = vsub.f32 %v1658, %v1819
      %1821 = vmatpush1.msra.mxu0 %v1820
      %1822 = vmatprep.subr.mxu0 0.0
      %v1823 = vand.u32 %v1659, 4294901760
      %v1824 = vsub.f32 %v1659, %v1823
      %1825 = vmatpush1.msra.mxu0 %v1824
      %1826 = vmatprep.subr.mxu0 0.0
      %1827 = vmatpush1.msra.mxu0 0.0
      %1828 = vmatprep.subr.mxu0 0.0
      %1829 = vmatpush1.msra.mxu0 0.0
      %1830 = vmatprep.subr.mxu0 0.0
      %1831 = vmatpush1.msra.mxu0 0.0
      %1832 = vmatprep.subr.mxu0 0.0
      %1833 = vmatpush1.msra.mxu0 0.0
      %1834 = vmatprep.subr.mxu0 0.0
      %1835 = vmatpush1.msra.mxu0 0.0
      %1836 = vmatprep.subr.mxu0 0.0
      %1837 = vmatpush1.msra.mxu0 0.0
      %1838 = vmatprep.subr.mxu0 0.0
      %1839 = vmatpush1.msra.mxu0 0.0
      %1840 = vmatprep.subr.mxu0 0.0
      %1841 = vmatpush1.msra.mxu0 0.0
      %1842 = vmatprep.subr.mxu0 0.0
      %1843 = vmatpush1.msra.mxu0 0.0
      %1844 = vmatprep.subr.mxu0 0.0
      %1845 = vmatpush1.msra.mxu0 0.0
      %1846 = vmatprep.subr.mxu0 0.0
      %1847 = vmatpush1.msra.mxu0 0.0
      %1848 = vmatprep.subr.mxu0 0.0
      %1849 = vmatpush1.msra.mxu0 0.0
      %1850 = vmatprep.subr.mxu0 0.0
      %1851 = vmatpush1.msra.mxu0 0.0
      %1852 = vmatprep.subr.mxu0 0.0
      %1853 = vmatpush1.msra.mxu0 0.0
      %1854 = vmatprep.subr.mxu0 0.0
      %1855 = vmatpush1.msra.mxu0 0.0
      %1856 = vmatprep.subr.mxu0 0.0
      %1857 = vmatpush1.msra.mxu0 0.0
      %1858 = vmatprep.subr.mxu0 0.0
      %1859 = vmatpush1.msra.mxu0 0.0
      %1860 = vmatprep.subr.mxu0 0.0
      %1861 = vmatpush1.msra.mxu0 0.0
      %1862 = vmatprep.subr.mxu0 0.0
      %1863 = vmatpush1.msra.mxu0 0.0
      %1864 = vmatprep.subr.mxu0 0.0
      %1865 = vmatpush1.msra.mxu0 0.0
      %1866 = vmatprep.subr.mxu0 0.0
      %1867 = vmatpush1.msra.mxu0 0.0
      %1868 = vmatprep.subr.mxu0 0.0
      %1869 = vmatpush1.msra.mxu0 0.0
      %1870 = vmatprep.subr.mxu0 0.0
      %1871 = vmatpush1.msra.mxu0 0.0
      %1872 = vmatprep.subr.mxu0 0.0
      %1873 = vmatpush1.msra.mxu0 0.0
      %1874 = vmatprep.subr.mxu0 0.0
      %1875 = vmatpush1.msra.mxu0 0.0
      %1876 = vmatprep.subr.mxu0 0.0
      %1877 = vmatpush1.msra.mxu0 0.0
      %1878 = vmatprep.subr.mxu0 0.0
      %1879 = vmatpush1.msra.mxu0 0.0
      %1880 = vmatprep.subr.mxu0 0.0
      %1881 = vmatpush1.msra.mxu0 0.0
      %1882 = vmatprep.subr.mxu0 0.0
      %1883 = vmatpush1.msra.mxu0 0.0
      %1884 = vmatprep.subr.mxu0 0.0
      %1885 = vmatpush1.msra.mxu0 0.0
      %1886 = vmatprep.mubr.f32.mxu0 0.0
      %v1887 = vand.u32 %v1181, 4294901760
      %v1888 = vsub.f32 %v1181, %v1887
      %1889 = vmatmul.mubr.f32.gmra.mrb[0].mxu0 %v1888
      %v1890 = vpop.f32.mrb[0].mxu0
      %v1891 = vadd.f32 %v1815, %v1890
      %v1892 = vpop.f32.mrb[0].mxu0
      %1893 = vdwg.mxu0
      %1894 = vmatprep.subr.mxu0 0.0
      %v1895 = vand.u32 %v1658, 4294901760
      %1896 = vmatpush1.msra.mxu0 %v1895
      %1897 = vmatprep.subr.mxu0 0.0
      %v1898 = vand.u32 %v1659, 4294901760
      %1899 = vmatpush1.msra.mxu0 %v1898
      %1900 = vmatprep.subr.mxu0 0.0
      %1901 = vmatpush1.msra.mxu0 0.0
      %1902 = vmatprep.subr.mxu0 0.0
      %1903 = vmatpush1.msra.mxu0 0.0
      %1904 = vmatprep.subr.mxu0 0.0
      %1905 = vmatpush1.msra.mxu0 0.0
      %1906 = vmatprep.subr.mxu0 0.0
      %1907 = vmatpush1.msra.mxu0 0.0
      %1908 = vmatprep.subr.mxu0 0.0
      %1909 = vmatpush1.msra.mxu0 0.0
      %1910 = vmatprep.subr.mxu0 0.0
      %1911 = vmatpush1.msra.mxu0 0.0
      %1912 = vmatprep.subr.mxu0 0.0
      %1913 = vmatpush1.msra.mxu0 0.0
      %1914 = vmatprep.subr.mxu0 0.0
      %1915 = vmatpush1.msra.mxu0 0.0
      %1916 = vmatprep.subr.mxu0 0.0
      %1917 = vmatpush1.msra.mxu0 0.0
      %1918 = vmatprep.subr.mxu0 0.0
      %1919 = vmatpush1.msra.mxu0 0.0
      %1920 = vmatprep.subr.mxu0 0.0
      %1921 = vmatpush1.msra.mxu0 0.0
      %1922 = vmatprep.subr.mxu0 0.0
      %1923 = vmatpush1.msra.mxu0 0.0
      %1924 = vmatprep.subr.mxu0 0.0
      %1925 = vmatpush1.msra.mxu0 0.0
      %1926 = vmatprep.subr.mxu0 0.0
      %1927 = vmatpush1.msra.mxu0 0.0
      %1928 = vmatprep.subr.mxu0 0.0
      %1929 = vmatpush1.msra.mxu0 0.0
      %1930 = vmatprep.subr.mxu0 0.0
      %1931 = vmatpush1.msra.mxu0 0.0
      %1932 = vmatprep.subr.mxu0 0.0
      %1933 = vmatpush1.msra.mxu0 0.0
      %1934 = vmatprep.subr.mxu0 0.0
      %1935 = vmatpush1.msra.mxu0 0.0
      %1936 = vmatprep.subr.mxu0 0.0
      %1937 = vmatpush1.msra.mxu0 0.0
      %1938 = vmatprep.subr.mxu0 0.0
      %1939 = vmatpush1.msra.mxu0 0.0
      %1940 = vmatprep.subr.mxu0 0.0
      %1941 = vmatpush1.msra.mxu0 0.0
      %1942 = vmatprep.subr.mxu0 0.0
      %1943 = vmatpush1.msra.mxu0 0.0
      %1944 = vmatprep.subr.mxu0 0.0
      %1945 = vmatpush1.msra.mxu0 0.0
      %1946 = vmatprep.subr.mxu0 0.0
      %1947 = vmatpush1.msra.mxu0 0.0
      %1948 = vmatprep.subr.mxu0 0.0
      %1949 = vmatpush1.msra.mxu0 0.0
      %1950 = vmatprep.subr.mxu0 0.0
      %1951 = vmatpush1.msra.mxu0 0.0
      %1952 = vmatprep.subr.mxu0 0.0
      %1953 = vmatpush1.msra.mxu0 0.0
      %1954 = vmatprep.subr.mxu0 0.0
      %1955 = vmatpush1.msra.mxu0 0.0
      %1956 = vmatprep.subr.mxu0 0.0
      %1957 = vmatpush1.msra.mxu0 0.0
      %1958 = vmatprep.subr.mxu0 0.0
      %1959 = vmatpush1.msra.mxu0 0.0
      %1960 = vmatprep.mubr.f32.mxu0 0.0
      %v1961 = vand.u32 %v1181, 4294901760
      %v1962 = vsub.f32 %v1181, %v1961
      %v1963 = vand.u32 %v1962, 4294901760
      %1964 = vmatmul.mubr.f32.gmra.mrb[0].mxu0 %v1963
      %v1965 = vpop.f32.mrb[0].mxu0
      %v1966 = vadd.f32 %v1891, %v1965
      %v1967 = vpop.f32.mrb[0].mxu0
      %1968 = vdwg.mxu0
      %1969 = vmatprep.subr.mxu0 0.0
      %v1970 = vand.u32 %v1658, 4294901760
      %v1971 = vsub.f32 %v1658, %v1970
      %v1972 = vand.u32 %v1971, 4294901760
      %1973 = vmatpush1.msra.mxu0 %v1972
      %1974 = vmatprep.subr.mxu0 0.0
      %v1975 = vand.u32 %v1659, 4294901760
      %v1976 = vsub.f32 %v1659, %v1975
      %v1977 = vand.u32 %v1976, 4294901760
      %1978 = vmatpush1.msra.mxu0 %v1977
      %1979 = vmatprep.subr.mxu0 0.0
      %1980 = vmatpush1.msra.mxu0 0.0
      %1981 = vmatprep.subr.mxu0 0.0
      %1982 = vmatpush1.msra.mxu0 0.0
      %1983 = vmatprep.subr.mxu0 0.0
      %1984 = vmatpush1.msra.mxu0 0.0
      %1985 = vmatprep.subr.mxu0 0.0
      %1986 = vmatpush1.msra.mxu0 0.0
      %1987 = vmatprep.subr.mxu0 0.0
      %1988 = vmatpush1.msra.mxu0 0.0
      %1989 = vmatprep.subr.mxu0 0.0
      %1990 = vmatpush1.msra.mxu0 0.0
      %1991 = vmatprep.subr.mxu0 0.0
      %1992 = vmatpush1.msra.mxu0 0.0
      %1993 = vmatprep.subr.mxu0 0.0
      %1994 = vmatpush1.msra.mxu0 0.0
      %1995 = vmatprep.subr.mxu0 0.0
      %1996 = vmatpush1.msra.mxu0 0.0
      %1997 = vmatprep.subr.mxu0 0.0
      %1998 = vmatpush1.msra.mxu0 0.0
      %1999 = vmatprep.subr.mxu0 0.0
      %2000 = vmatpush1.msra.mxu0 0.0
      %2001 = vmatprep.subr.mxu0 0.0
      %2002 = vmatpush1.msra.mxu0 0.0
      %2003 = vmatprep.subr.mxu0 0.0
      %2004 = vmatpush1.msra.mxu0 0.0
      %2005 = vmatprep.subr.mxu0 0.0
      %2006 = vmatpush1.msra.mxu0 0.0
      %2007 = vmatprep.subr.mxu0 0.0
      %2008 = vmatpush1.msra.mxu0 0.0
      %2009 = vmatprep.subr.mxu0 0.0
      %2010 = vmatpush1.msra.mxu0 0.0
      %2011 = vmatprep.subr.mxu0 0.0
      %2012 = vmatpush1.msra.mxu0 0.0
      %2013 = vmatprep.subr.mxu0 0.0
      %2014 = vmatpush1.msra.mxu0 0.0
      %2015 = vmatprep.subr.mxu0 0.0
      %2016 = vmatpush1.msra.mxu0 0.0
      %2017 = vmatprep.subr.mxu0 0.0
      %2018 = vmatpush1.msra.mxu0 0.0
      %2019 = vmatprep.subr.mxu0 0.0
      %2020 = vmatpush1.msra.mxu0 0.0
      %2021 = vmatprep.subr.mxu0 0.0
      %2022 = vmatpush1.msra.mxu0 0.0
      %2023 = vmatprep.subr.mxu0 0.0
      %2024 = vmatpush1.msra.mxu0 0.0
      %2025 = vmatprep.subr.mxu0 0.0
      %2026 = vmatpush1.msra.mxu0 0.0
      %2027 = vmatprep.subr.mxu0 0.0
      %2028 = vmatpush1.msra.mxu0 0.0
      %2029 = vmatprep.subr.mxu0 0.0
      %2030 = vmatpush1.msra.mxu0 0.0
      %2031 = vmatprep.subr.mxu0 0.0
      %2032 = vmatpush1.msra.mxu0 0.0
      %2033 = vmatprep.subr.mxu0 0.0
      %2034 = vmatpush1.msra.mxu0 0.0
      %2035 = vmatprep.subr.mxu0 0.0
      %2036 = vmatpush1.msra.mxu0 0.0
      %2037 = vmatprep.subr.mxu0 0.0
      %2038 = vmatpush1.msra.mxu0 0.0
      %2039 = vmatprep.mubr.f32.mxu0 0.0
      %v2040 = vand.u32 %v1181, 4294901760
      %2041 = vmatmul.mubr.f32.gmra.mrb[0].mxu0 %v2040
      %v2042 = vpop.f32.mrb[0].mxu0
      %v2043 = vadd.f32 %v1966, %v2042
      %v2044 = vpop.f32.mrb[0].mxu0
      %2045 = vdwg.mxu0
      %2046 = vmatprep.subr.mxu0 0.0
      %v2047 = vand.u32 %v1658, 4294901760
      %2048 = vmatpush1.msra.mxu0 %v2047
      %2049 = vmatprep.subr.mxu0 0.0
      %v2050 = vand.u32 %v1659, 4294901760
      %2051 = vmatpush1.msra.mxu0 %v2050
      %2052 = vmatprep.subr.mxu0 0.0
      %2053 = vmatpush1.msra.mxu0 0.0
      %2054 = vmatprep.subr.mxu0 0.0
      %2055 = vmatpush1.msra.mxu0 0.0
      %2056 = vmatprep.subr.mxu0 0.0
      %2057 = vmatpush1.msra.mxu0 0.0
      %2058 = vmatprep.subr.mxu0 0.0
      %2059 = vmatpush1.msra.mxu0 0.0
      %2060 = vmatprep.subr.mxu0 0.0
      %2061 = vmatpush1.msra.mxu0 0.0
      %2062 = vmatprep.subr.mxu0 0.0
      %2063 = vmatpush1.msra.mxu0 0.0
      %2064 = vmatprep.subr.mxu0 0.0
      %2065 = vmatpush1.msra.mxu0 0.0
      %2066 = vmatprep.subr.mxu0 0.0
      %2067 = vmatpush1.msra.mxu0 0.0
      %2068 = vmatprep.subr.mxu0 0.0
      %2069 = vmatpush1.msra.mxu0 0.0
      %2070 = vmatprep.subr.mxu0 0.0
      %2071 = vmatpush1.msra.mxu0 0.0
      %2072 = vmatprep.subr.mxu0 0.0
      %2073 = vmatpush1.msra.mxu0 0.0
      %2074 = vmatprep.subr.mxu0 0.0
      %2075 = vmatpush1.msra.mxu0 0.0
      %2076 = vmatprep.subr.mxu0 0.0
      %2077 = vmatpush1.msra.mxu0 0.0
      %2078 = vmatprep.subr.mxu0 0.0
      %2079 = vmatpush1.msra.mxu0 0.0
      %2080 = vmatprep.subr.mxu0 0.0
      %2081 = vmatpush1.msra.mxu0 0.0
      %2082 = vmatprep.subr.mxu0 0.0
      %2083 = vmatpush1.msra.mxu0 0.0
      %2084 = vmatprep.subr.mxu0 0.0
      %2085 = vmatpush1.msra.mxu0 0.0
      %2086 = vmatprep.subr.mxu0 0.0
      %2087 = vmatpush1.msra.mxu0 0.0
      %2088 = vmatprep.subr.mxu0 0.0
      %2089 = vmatpush1.msra.mxu0 0.0
      %2090 = vmatprep.subr.mxu0 0.0
      %2091 = vmatpush1.msra.mxu0 0.0
      %2092 = vmatprep.subr.mxu0 0.0
      %2093 = vmatpush1.msra.mxu0 0.0
      %2094 = vmatprep.subr.mxu0 0.0
      %2095 = vmatpush1.msra.mxu0 0.0
      %2096 = vmatprep.subr.mxu0 0.0
      %2097 = vmatpush1.msra.mxu0 0.0
      %2098 = vmatprep.subr.mxu0 0.0
      %2099 = vmatpush1.msra.mxu0 0.0
      %2100 = vmatprep.subr.mxu0 0.0
      %2101 = vmatpush1.msra.mxu0 0.0
      %2102 = vmatprep.subr.mxu0 0.0
      %2103 = vmatpush1.msra.mxu0 0.0
      %2104 = vmatprep.subr.mxu0 0.0
      %2105 = vmatpush1.msra.mxu0 0.0
      %2106 = vmatprep.subr.mxu0 0.0
      %2107 = vmatpush1.msra.mxu0 0.0
      %2108 = vmatprep.subr.mxu0 0.0
      %2109 = vmatpush1.msra.mxu0 0.0
      %2110 = vmatprep.subr.mxu0 0.0
      %2111 = vmatpush1.msra.mxu0 0.0
      %2112 = vmatprep.mubr.f32.mxu0 0.0
      %v2113 = vand.u32 %v1181, 4294901760
      %2114 = vmatmul.mubr.f32.gmra.mrb[0].mxu0 %v2113
      %v2115 = vpop.f32.mrb[0].mxu0
      %v2116 = vadd.f32 %v2043, %v2115
      %v2117 = vpop.f32.mrb[0].mxu0
      %2118 = vdwg.mxu0
      %v2119 = vsub.f32 %v2116, %v597
      %v2120 = vmax.f32 %v1642, %v2119
      %v2121 = vsel %vm1654, 1e+30, %v1643
      %v2122 = vsel %vm1655, 1e+30, %v1644
      %v2123 = vsel %vm1164, %v2121, inf
      %v2124 = vsel %vm1164, %v2122, inf
      %v2125 = vmin.f32 %v2123, %v2124
      %v2126 = vrot.slane %v2125, 4
      %v2127 = vmin.f32 %v2125, %v2126
      %v2128 = vrot.slane %v2127, 2
      %v2129 = vmin.f32 %v2127, %v2128
      %v2130 = vrot.slane %v2129, 1
      %v2131 = vmin.f32 %v2129, %v2130
      %vm2132 = vcmp.eq.f32.partialorder %v2121, %v2131
      %vm2133 = vcmp.eq.f32.partialorder %v2122, %v2131
      %v2134 = vsel %vm2132, 1, 0
      %v2135 = vsel %vm2133, 1, 0
      %v2136 = vcvt.s32.f32 %v2134
      %v2137 = vcvt.s32.f32 %v2135
      %2138 = vmatprep.subr.mxu0 0.0
      %v2139 = vand.u32 %v2136, 4294901760
      %2140 = vmatpush1.msra.mxu0 %v2139
      %2141 = vmatprep.subr.mxu0 0.0
      %v2142 = vand.u32 %v2137, 4294901760
      %2143 = vmatpush1.msra.mxu0 %v2142
      %2144 = vmatprep.subr.mxu0 0.0
      %2145 = vmatpush1.msra.mxu0 0.0
      %2146 = vmatprep.subr.mxu0 0.0
      %2147 = vmatpush1.msra.mxu0 0.0
      %2148 = vmatprep.subr.mxu0 0.0
      %2149 = vmatpush1.msra.mxu0 0.0
      %2150 = vmatprep.subr.mxu0 0.0
      %2151 = vmatpush1.msra.mxu0 0.0
      %2152 = vmatprep.subr.mxu0 0.0
      %2153 = vmatpush1.msra.mxu0 0.0
      %2154 = vmatprep.subr.mxu0 0.0
      %2155 = vmatpush1.msra.mxu0 0.0
      %2156 = vmatprep.subr.mxu0 0.0
      %2157 = vmatpush1.msra.mxu0 0.0
      %2158 = vmatprep.subr.mxu0 0.0
      %2159 = vmatpush1.msra.mxu0 0.0
      %2160 = vmatprep.subr.mxu0 0.0
      %2161 = vmatpush1.msra.mxu0 0.0
      %2162 = vmatprep.subr.mxu0 0.0
      %2163 = vmatpush1.msra.mxu0 0.0
      %2164 = vmatprep.subr.mxu0 0.0
      %2165 = vmatpush1.msra.mxu0 0.0
      %2166 = vmatprep.subr.mxu0 0.0
      %2167 = vmatpush1.msra.mxu0 0.0
      %2168 = vmatprep.subr.mxu0 0.0
      %2169 = vmatpush1.msra.mxu0 0.0
      %2170 = vmatprep.subr.mxu0 0.0
      %2171 = vmatpush1.msra.mxu0 0.0
      %2172 = vmatprep.subr.mxu0 0.0
      %2173 = vmatpush1.msra.mxu0 0.0
      %2174 = vmatprep.subr.mxu0 0.0
      %2175 = vmatpush1.msra.mxu0 0.0
      %2176 = vmatprep.subr.mxu0 0.0
      %2177 = vmatpush1.msra.mxu0 0.0
      %2178 = vmatprep.subr.mxu0 0.0
      %2179 = vmatpush1.msra.mxu0 0.0
      %2180 = vmatprep.subr.mxu0 0.0
      %2181 = vmatpush1.msra.mxu0 0.0
      %2182 = vmatprep.subr.mxu0 0.0
      %2183 = vmatpush1.msra.mxu0 0.0
      %2184 = vmatprep.subr.mxu0 0.0
      %2185 = vmatpush1.msra.mxu0 0.0
      %2186 = vmatprep.subr.mxu0 0.0
      %2187 = vmatpush1.msra.mxu0 0.0
      %2188 = vmatprep.subr.mxu0 0.0
      %2189 = vmatpush1.msra.mxu0 0.0
      %2190 = vmatprep.subr.mxu0 0.0
      %2191 = vmatpush1.msra.mxu0 0.0
      %2192 = vmatprep.subr.mxu0 0.0
      %2193 = vmatpush1.msra.mxu0 0.0
      %2194 = vmatprep.subr.mxu0 0.0
      %2195 = vmatpush1.msra.mxu0 0.0
      %2196 = vmatprep.subr.mxu0 0.0
      %2197 = vmatpush1.msra.mxu0 0.0
      %2198 = vmatprep.subr.mxu0 0.0
      %2199 = vmatpush1.msra.mxu0 0.0
      %2200 = vmatprep.subr.mxu0 0.0
      %2201 = vmatpush1.msra.mxu0 0.0
      %2202 = vmatprep.subr.mxu0 0.0
      %2203 = vmatpush1.msra.mxu0 0.0
      %2204 = vmatprep.mubr.f32.mxu0 0.0
      %v2205 = vand.u32 %v1181, 4294901760
      %v2206 = vsub.f32 %v1181, %v2205
      %v2207 = vand.u32 %v2206, 4294901760
      %v2208 = vsub.f32 %v2206, %v2207
      %v2209 = vand.u32 %v2208, 4294901760
      %2210 = vmatmul.mubr.f32.gmra.mrb[0].mxu0 %v2209
      %v2211 = vpop.f32.mrb[0].mxu0
      %v2212 = vadd.f32 0.0, %v2211
      %v2213 = vpop.f32.mrb[0].mxu0
      %2214 = vdwg.mxu0
      %2215 = vmatprep.subr.mxu0 0.0
      %v2216 = vand.u32 %v2136, 4294901760
      %v2217 = vsub.f32 %v2136, %v2216
      %v2218 = vand.u32 %v2217, 4294901760
      %v2219 = vsub.f32 %v2217, %v2218
      %v2220 = vand.u32 %v2219, 4294901760
      %2221 = vmatpush1.msra.mxu0 %v2220
      %2222 = vmatprep.subr.mxu0 0.0
      %v2223 = vand.u32 %v2137, 4294901760
      %v2224 = vsub.f32 %v2137, %v2223
      %v2225 = vand.u32 %v2224, 4294901760
      %v2226 = vsub.f32 %v2224, %v2225
      %v2227 = vand.u32 %v2226, 4294901760
      %2228 = vmatpush1.msra.mxu0 %v2227
      %2229 = vmatprep.subr.mxu0 0.0
      %2230 = vmatpush1.msra.mxu0 0.0
      %2231 = vmatprep.subr.mxu0 0.0
      %2232 = vmatpush1.msra.mxu0 0.0
      %2233 = vmatprep.subr.mxu0 0.0
      %2234 = vmatpush1.msra.mxu0 0.0
      %2235 = vmatprep.subr.mxu0 0.0
      %2236 = vmatpush1.msra.mxu0 0.0
      %2237 = vmatprep.subr.mxu0 0.0
      %2238 = vmatpush1.msra.mxu0 0.0
      %2239 = vmatprep.subr.mxu0 0.0
      %2240 = vmatpush1.msra.mxu0 0.0
      %2241 = vmatprep.subr.mxu0 0.0
      %2242 = vmatpush1.msra.mxu0 0.0
      %2243 = vmatprep.subr.mxu0 0.0
      %2244 = vmatpush1.msra.mxu0 0.0
      %2245 = vmatprep.subr.mxu0 0.0
      %2246 = vmatpush1.msra.mxu0 0.0
      %2247 = vmatprep.subr.mxu0 0.0
      %2248 = vmatpush1.msra.mxu0 0.0
      %2249 = vmatprep.subr.mxu0 0.0
      %2250 = vmatpush1.msra.mxu0 0.0
      %2251 = vmatprep.subr.mxu0 0.0
      %2252 = vmatpush1.msra.mxu0 0.0
      %2253 = vmatprep.subr.mxu0 0.0
      %2254 = vmatpush1.msra.mxu0 0.0
      %2255 = vmatprep.subr.mxu0 0.0
      %2256 = vmatpush1.msra.mxu0 0.0
      %2257 = vmatprep.subr.mxu0 0.0
      %2258 = vmatpush1.msra.mxu0 0.0
      %2259 = vmatprep.subr.mxu0 0.0
      %2260 = vmatpush1.msra.mxu0 0.0
      %2261 = vmatprep.subr.mxu0 0.0
      %2262 = vmatpush1.msra.mxu0 0.0
      %2263 = vmatprep.subr.mxu0 0.0
      %2264 = vmatpush1.msra.mxu0 0.0
      %2265 = vmatprep.subr.mxu0 0.0
      %2266 = vmatpush1.msra.mxu0 0.0
      %2267 = vmatprep.subr.mxu0 0.0
      %2268 = vmatpush1.msra.mxu0 0.0
      %2269 = vmatprep.subr.mxu0 0.0
      %2270 = vmatpush1.msra.mxu0 0.0
      %2271 = vmatprep.subr.mxu0 0.0
      %2272 = vmatpush1.msra.mxu0 0.0
      %2273 = vmatprep.subr.mxu0 0.0
      %2274 = vmatpush1.msra.mxu0 0.0
      %2275 = vmatprep.subr.mxu0 0.0
      %2276 = vmatpush1.msra.mxu0 0.0
      %2277 = vmatprep.subr.mxu0 0.0
      %2278 = vmatpush1.msra.mxu0 0.0
      %2279 = vmatprep.subr.mxu0 0.0
      %2280 = vmatpush1.msra.mxu0 0.0
      %2281 = vmatprep.subr.mxu0 0.0
      %2282 = vmatpush1.msra.mxu0 0.0
      %2283 = vmatprep.subr.mxu0 0.0
      %2284 = vmatpush1.msra.mxu0 0.0
      %2285 = vmatprep.subr.mxu0 0.0
      %2286 = vmatpush1.msra.mxu0 0.0
      %2287 = vmatprep.subr.mxu0 0.0
      %2288 = vmatpush1.msra.mxu0 0.0
      %2289 = vmatprep.mubr.f32.mxu0 0.0
      %v2290 = vand.u32 %v1181, 4294901760
      %2291 = vmatmul.mubr.f32.gmra.mrb[0].mxu0 %v2290
      %v2292 = vpop.f32.mrb[0].mxu0
      %v2293 = vadd.f32 %v2212, %v2292
      %v2294 = vpop.f32.mrb[0].mxu0
      %2295 = vdwg.mxu0
      %2296 = vmatprep.subr.mxu0 0.0
      %v2297 = vand.u32 %v2136, 4294901760
      %v2298 = vsub.f32 %v2136, %v2297
      %2299 = vmatpush1.msra.mxu0 %v2298
      %2300 = vmatprep.subr.mxu0 0.0
      %v2301 = vand.u32 %v2137, 4294901760
      %v2302 = vsub.f32 %v2137, %v2301
      %2303 = vmatpush1.msra.mxu0 %v2302
      %2304 = vmatprep.subr.mxu0 0.0
      %2305 = vmatpush1.msra.mxu0 0.0
      %2306 = vmatprep.subr.mxu0 0.0
      %2307 = vmatpush1.msra.mxu0 0.0
      %2308 = vmatprep.subr.mxu0 0.0
      %2309 = vmatpush1.msra.mxu0 0.0
      %2310 = vmatprep.subr.mxu0 0.0
      %2311 = vmatpush1.msra.mxu0 0.0
      %2312 = vmatprep.subr.mxu0 0.0
      %2313 = vmatpush1.msra.mxu0 0.0
      %2314 = vmatprep.subr.mxu0 0.0
      %2315 = vmatpush1.msra.mxu0 0.0
      %2316 = vmatprep.subr.mxu0 0.0
      %2317 = vmatpush1.msra.mxu0 0.0
      %2318 = vmatprep.subr.mxu0 0.0
      %2319 = vmatpush1.msra.mxu0 0.0
      %2320 = vmatprep.subr.mxu0 0.0
      %2321 = vmatpush1.msra.mxu0 0.0
      %2322 = vmatprep.subr.mxu0 0.0
      %2323 = vmatpush1.msra.mxu0 0.0
      %2324 = vmatprep.subr.mxu0 0.0
      %2325 = vmatpush1.msra.mxu0 0.0
      %2326 = vmatprep.subr.mxu0 0.0
      %2327 = vmatpush1.msra.mxu0 0.0
      %2328 = vmatprep.subr.mxu0 0.0
      %2329 = vmatpush1.msra.mxu0 0.0
      %2330 = vmatprep.subr.mxu0 0.0
      %2331 = vmatpush1.msra.mxu0 0.0
      %2332 = vmatprep.subr.mxu0 0.0
      %2333 = vmatpush1.msra.mxu0 0.0
      %2334 = vmatprep.subr.mxu0 0.0
      %2335 = vmatpush1.msra.mxu0 0.0
      %2336 = vmatprep.subr.mxu0 0.0
      %2337 = vmatpush1.msra.mxu0 0.0
      %2338 = vmatprep.subr.mxu0 0.0
      %2339 = vmatpush1.msra.mxu0 0.0
      %2340 = vmatprep.subr.mxu0 0.0
      %2341 = vmatpush1.msra.mxu0 0.0
      %2342 = vmatprep.subr.mxu0 0.0
      %2343 = vmatpush1.msra.mxu0 0.0
      %2344 = vmatprep.subr.mxu0 0.0
      %2345 = vmatpush1.msra.mxu0 0.0
      %2346 = vmatprep.subr.mxu0 0.0
      %2347 = vmatpush1.msra.mxu0 0.0
      %2348 = vmatprep.subr.mxu0 0.0
      %2349 = vmatpush1.msra.mxu0 0.0
      %2350 = vmatprep.subr.mxu0 0.0
      %2351 = vmatpush1.msra.mxu0 0.0
      %2352 = vmatprep.subr.mxu0 0.0
      %2353 = vmatpush1.msra.mxu0 0.0
      %2354 = vmatprep.subr.mxu0 0.0
      %2355 = vmatpush1.msra.mxu0 0.0
      %2356 = vmatprep.subr.mxu0 0.0
      %2357 = vmatpush1.msra.mxu0 0.0
      %2358 = vmatprep.subr.mxu0 0.0
      %2359 = vmatpush1.msra.mxu0 0.0
      %2360 = vmatprep.subr.mxu0 0.0
      %2361 = vmatpush1.msra.mxu0 0.0
      %2362 = vmatprep.subr.mxu0 0.0
      %2363 = vmatpush1.msra.mxu0 0.0
      %2364 = vmatprep.mubr.f32.mxu0 0.0
      %v2365 = vand.u32 %v1181, 4294901760
      %v2366 = vsub.f32 %v1181, %v2365
      %2367 = vmatmul.mubr.f32.gmra.mrb[0].mxu0 %v2366
      %v2368 = vpop.f32.mrb[0].mxu0
      %v2369 = vadd.f32 %v2293, %v2368
      %v2370 = vpop.f32.mrb[0].mxu0
      %2371 = vdwg.mxu0
      %2372 = vmatprep.subr.mxu0 0.0
      %v2373 = vand.u32 %v2136, 4294901760
      %2374 = vmatpush1.msra.mxu0 %v2373
      %2375 = vmatprep.subr.mxu0 0.0
      %v2376 = vand.u32 %v2137, 4294901760
      %2377 = vmatpush1.msra.mxu0 %v2376
      %2378 = vmatprep.subr.mxu0 0.0
      %2379 = vmatpush1.msra.mxu0 0.0
      %2380 = vmatprep.subr.mxu0 0.0
      %2381 = vmatpush1.msra.mxu0 0.0
      %2382 = vmatprep.subr.mxu0 0.0
      %2383 = vmatpush1.msra.mxu0 0.0
      %2384 = vmatprep.subr.mxu0 0.0
      %2385 = vmatpush1.msra.mxu0 0.0
      %2386 = vmatprep.subr.mxu0 0.0
      %2387 = vmatpush1.msra.mxu0 0.0
      %2388 = vmatprep.subr.mxu0 0.0
      %2389 = vmatpush1.msra.mxu0 0.0
      %2390 = vmatprep.subr.mxu0 0.0
      %2391 = vmatpush1.msra.mxu0 0.0
      %2392 = vmatprep.subr.mxu0 0.0
      %2393 = vmatpush1.msra.mxu0 0.0
      %2394 = vmatprep.subr.mxu0 0.0
      %2395 = vmatpush1.msra.mxu0 0.0
      %2396 = vmatprep.subr.mxu0 0.0
      %2397 = vmatpush1.msra.mxu0 0.0
      %2398 = vmatprep.subr.mxu0 0.0
      %2399 = vmatpush1.msra.mxu0 0.0
      %2400 = vmatprep.subr.mxu0 0.0
      %2401 = vmatpush1.msra.mxu0 0.0
      %2402 = vmatprep.subr.mxu0 0.0
      %2403 = vmatpush1.msra.mxu0 0.0
      %2404 = vmatprep.subr.mxu0 0.0
      %2405 = vmatpush1.msra.mxu0 0.0
      %2406 = vmatprep.subr.mxu0 0.0
      %2407 = vmatpush1.msra.mxu0 0.0
      %2408 = vmatprep.subr.mxu0 0.0
      %2409 = vmatpush1.msra.mxu0 0.0
      %2410 = vmatprep.subr.mxu0 0.0
      %2411 = vmatpush1.msra.mxu0 0.0
      %2412 = vmatprep.subr.mxu0 0.0
      %2413 = vmatpush1.msra.mxu0 0.0
      %2414 = vmatprep.subr.mxu0 0.0
      %2415 = vmatpush1.msra.mxu0 0.0
      %2416 = vmatprep.subr.mxu0 0.0
      %2417 = vmatpush1.msra.mxu0 0.0
      %2418 = vmatprep.subr.mxu0 0.0
      %2419 = vmatpush1.msra.mxu0 0.0
      %2420 = vmatprep.subr.mxu0 0.0
      %2421 = vmatpush1.msra.mxu0 0.0
      %2422 = vmatprep.subr.mxu0 0.0
      %2423 = vmatpush1.msra.mxu0 0.0
      %2424 = vmatprep.subr.mxu0 0.0
      %2425 = vmatpush1.msra.mxu0 0.0
      %2426 = vmatprep.subr.mxu0 0.0
      %2427 = vmatpush1.msra.mxu0 0.0
      %2428 = vmatprep.subr.mxu0 0.0
      %2429 = vmatpush1.msra.mxu0 0.0
      %2430 = vmatprep.subr.mxu0 0.0
      %2431 = vmatpush1.msra.mxu0 0.0
      %2432 = vmatprep.subr.mxu0 0.0
      %2433 = vmatpush1.msra.mxu0 0.0
      %2434 = vmatprep.subr.mxu0 0.0
      %2435 = vmatpush1.msra.mxu0 0.0
      %2436 = vmatprep.subr.mxu0 0.0
      %2437 = vmatpush1.msra.mxu0 0.0
      %2438 = vmatprep.mubr.f32.mxu0 0.0
      %v2439 = vand.u32 %v1181, 4294901760
      %v2440 = vsub.f32 %v1181, %v2439
      %v2441 = vand.u32 %v2440, 4294901760
      %2442 = vmatmul.mubr.f32.gmra.mrb[0].mxu0 %v2441
      %v2443 = vpop.f32.mrb[0].mxu0
      %v2444 = vadd.f32 %v2369, %v2443
      %v2445 = vpop.f32.mrb[0].mxu0
      %2446 = vdwg.mxu0
      %2447 = vmatprep.subr.mxu0 0.0
      %v2448 = vand.u32 %v2136, 4294901760
      %v2449 = vsub.f32 %v2136, %v2448
      %v2450 = vand.u32 %v2449, 4294901760
      %2451 = vmatpush1.msra.mxu0 %v2450
      %2452 = vmatprep.subr.mxu0 0.0
      %v2453 = vand.u32 %v2137, 4294901760
      %v2454 = vsub.f32 %v2137, %v2453
      %v2455 = vand.u32 %v2454, 4294901760
      %2456 = vmatpush1.msra.mxu0 %v2455
      %2457 = vmatprep.subr.mxu0 0.0
      %2458 = vmatpush1.msra.mxu0 0.0
      %2459 = vmatprep.subr.mxu0 0.0
      %2460 = vmatpush1.msra.mxu0 0.0
      %2461 = vmatprep.subr.mxu0 0.0
      %2462 = vmatpush1.msra.mxu0 0.0
      %2463 = vmatprep.subr.mxu0 0.0
      %2464 = vmatpush1.msra.mxu0 0.0
      %2465 = vmatprep.subr.mxu0 0.0
      %2466 = vmatpush1.msra.mxu0 0.0
      %2467 = vmatprep.subr.mxu0 0.0
      %2468 = vmatpush1.msra.mxu0 0.0
      %2469 = vmatprep.subr.mxu0 0.0
      %2470 = vmatpush1.msra.mxu0 0.0
      %2471 = vmatprep.subr.mxu0 0.0
      %2472 = vmatpush1.msra.mxu0 0.0
      %2473 = vmatprep.subr.mxu0 0.0
      %2474 = vmatpush1.msra.mxu0 0.0
      %2475 = vmatprep.subr.mxu0 0.0
      %2476 = vmatpush1.msra.mxu0 0.0
      %2477 = vmatprep.subr.mxu0 0.0
      %2478 = vmatpush1.msra.mxu0 0.0
      %2479 = vmatprep.subr.mxu0 0.0
      %2480 = vmatpush1.msra.mxu0 0.0
      %2481 = vmatprep.subr.mxu0 0.0
      %2482 = vmatpush1.msra.mxu0 0.0
      %2483 = vmatprep.subr.mxu0 0.0
      %2484 = vmatpush1.msra.mxu0 0.0
      %2485 = vmatprep.subr.mxu0 0.0
      %2486 = vmatpush1.msra.mxu0 0.0
      %2487 = vmatprep.subr.mxu0 0.0
      %2488 = vmatpush1.msra.mxu0 0.0
      %2489 = vmatprep.subr.mxu0 0.0
      %2490 = vmatpush1.msra.mxu0 0.0
      %2491 = vmatprep.subr.mxu0 0.0
      %2492 = vmatpush1.msra.mxu0 0.0
      %2493 = vmatprep.subr.mxu0 0.0
      %2494 = vmatpush1.msra.mxu0 0.0
      %2495 = vmatprep.subr.mxu0 0.0
      %2496 = vmatpush1.msra.mxu0 0.0
      %2497 = vmatprep.subr.mxu0 0.0
      %2498 = vmatpush1.msra.mxu0 0.0
      %2499 = vmatprep.subr.mxu0 0.0
      %2500 = vmatpush1.msra.mxu0 0.0
      %2501 = vmatprep.subr.mxu0 0.0
      %2502 = vmatpush1.msra.mxu0 0.0
      %2503 = vmatprep.subr.mxu0 0.0
      %2504 = vmatpush1.msra.mxu0 0.0
      %2505 = vmatprep.subr.mxu0 0.0
      %2506 = vmatpush1.msra.mxu0 0.0
      %2507 = vmatprep.subr.mxu0 0.0
      %2508 = vmatpush1.msra.mxu0 0.0
      %2509 = vmatprep.subr.mxu0 0.0
      %2510 = vmatpush1.msra.mxu0 0.0
      %2511 = vmatprep.subr.mxu0 0.0
      %2512 = vmatpush1.msra.mxu0 0.0
      %2513 = vmatprep.subr.mxu0 0.0
      %2514 = vmatpush1.msra.mxu0 0.0
      %2515 = vmatprep.subr.mxu0 0.0
      %2516 = vmatpush1.msra.mxu0 0.0
      %2517 = vmatprep.mubr.f32.mxu0 0.0
      %v2518 = vand.u32 %v1181, 4294901760
      %2519 = vmatmul.mubr.f32.gmra.mrb[0].mxu0 %v2518
      %v2520 = vpop.f32.mrb[0].mxu0
      %v2521 = vadd.f32 %v2444, %v2520
      %v2522 = vpop.f32.mrb[0].mxu0
      %2523 = vdwg.mxu0
      %2524 = vmatprep.subr.mxu0 0.0
      %v2525 = vand.u32 %v2136, 4294901760
      %2526 = vmatpush1.msra.mxu0 %v2525
      %2527 = vmatprep.subr.mxu0 0.0
      %v2528 = vand.u32 %v2137, 4294901760
      %2529 = vmatpush1.msra.mxu0 %v2528
      %2530 = vmatprep.subr.mxu0 0.0
      %2531 = vmatpush1.msra.mxu0 0.0
      %2532 = vmatprep.subr.mxu0 0.0
      %2533 = vmatpush1.msra.mxu0 0.0
      %2534 = vmatprep.subr.mxu0 0.0
      %2535 = vmatpush1.msra.mxu0 0.0
      %2536 = vmatprep.subr.mxu0 0.0
      %2537 = vmatpush1.msra.mxu0 0.0
      %2538 = vmatprep.subr.mxu0 0.0
      %2539 = vmatpush1.msra.mxu0 0.0
      %2540 = vmatprep.subr.mxu0 0.0
      %2541 = vmatpush1.msra.mxu0 0.0
      %2542 = vmatprep.subr.mxu0 0.0
      %2543 = vmatpush1.msra.mxu0 0.0
      %2544 = vmatprep.subr.mxu0 0.0
      %2545 = vmatpush1.msra.mxu0 0.0
      %2546 = vmatprep.subr.mxu0 0.0
      %2547 = vmatpush1.msra.mxu0 0.0
      %2548 = vmatprep.subr.mxu0 0.0
      %2549 = vmatpush1.msra.mxu0 0.0
      %2550 = vmatprep.subr.mxu0 0.0
      %2551 = vmatpush1.msra.mxu0 0.0
      %2552 = vmatprep.subr.mxu0 0.0
      %2553 = vmatpush1.msra.mxu0 0.0
      %2554 = vmatprep.subr.mxu0 0.0
      %2555 = vmatpush1.msra.mxu0 0.0
      %2556 = vmatprep.subr.mxu0 0.0
      %2557 = vmatpush1.msra.mxu0 0.0
      %2558 = vmatprep.subr.mxu0 0.0
      %2559 = vmatpush1.msra.mxu0 0.0
      %2560 = vmatprep.subr.mxu0 0.0
      %2561 = vmatpush1.msra.mxu0 0.0
      %2562 = vmatprep.subr.mxu0 0.0
      %2563 = vmatpush1.msra.mxu0 0.0
      %2564 = vmatprep.subr.mxu0 0.0
      %2565 = vmatpush1.msra.mxu0 0.0
      %2566 = vmatprep.subr.mxu0 0.0
      %2567 = vmatpush1.msra.mxu0 0.0
      %2568 = vmatprep.subr.mxu0 0.0
      %2569 = vmatpush1.msra.mxu0 0.0
      %2570 = vmatprep.subr.mxu0 0.0
      %2571 = vmatpush1.msra.mxu0 0.0
      %2572 = vmatprep.subr.mxu0 0.0
      %2573 = vmatpush1.msra.mxu0 0.0
      %2574 = vmatprep.subr.mxu0 0.0
      %2575 = vmatpush1.msra.mxu0 0.0
      %2576 = vmatprep.subr.mxu0 0.0
      %2577 = vmatpush1.msra.mxu0 0.0
      %2578 = vmatprep.subr.mxu0 0.0
      %2579 = vmatpush1.msra.mxu0 0.0
      %2580 = vmatprep.subr.mxu0 0.0
      %2581 = vmatpush1.msra.mxu0 0.0
      %2582 = vmatprep.subr.mxu0 0.0
      %2583 = vmatpush1.msra.mxu0 0.0
      %2584 = vmatprep.subr.mxu0 0.0
      %2585 = vmatpush1.msra.mxu0 0.0
      %2586 = vmatprep.subr.mxu0 0.0
      %2587 = vmatpush1.msra.mxu0 0.0
      %2588 = vmatprep.subr.mxu0 0.0
      %2589 = vmatpush1.msra.mxu0 0.0
      %2590 = vmatprep.mubr.f32.mxu0 0.0
      %v2591 = vand.u32 %v1181, 4294901760
      %2592 = vmatmul.mubr.f32.gmra.mrb[0].mxu0 %v2591
      %v2593 = vpop.f32.mrb[0].mxu0
      %v2594 = vadd.f32 %v2521, %v2593
      %v2595 = vpop.f32.mrb[0].mxu0
      %2596 = vdwg.mxu0
      %v2597 = vsub.f32 %v2594, %v597
      %v2598 = vmax.f32 %v2120, %v2597
      %v2599 = vsel %vm2132, 1e+30, %v2121
      %v2600 = vsel %vm2133, 1e+30, %v2122
      %v2601 = vsel %vm1164, %v2599, inf
      %v2602 = vsel %vm1164, %v2600, inf
      %v2603 = vmin.f32 %v2601, %v2602
      %v2604 = vrot.slane %v2603, 4
      %v2605 = vmin.f32 %v2603, %v2604
      %v2606 = vrot.slane %v2605, 2
      %v2607 = vmin.f32 %v2605, %v2606
      %v2608 = vrot.slane %v2607, 1
      %v2609 = vmin.f32 %v2607, %v2608
      %vm2610 = vcmp.eq.f32.partialorder %v2599, %v2609
      %vm2611 = vcmp.eq.f32.partialorder %v2600, %v2609
      %v2612 = vsel %vm2610, 1, 0
      %v2613 = vsel %vm2611, 1, 0
      %v2614 = vcvt.s32.f32 %v2612
      %v2615 = vcvt.s32.f32 %v2613
      %2616 = vmatprep.subr.mxu0 0.0
      %v2617 = vand.u32 %v2614, 4294901760
      %2618 = vmatpush1.msra.mxu0 %v2617
      %2619 = vmatprep.subr.mxu0 0.0
      %v2620 = vand.u32 %v2615, 4294901760
      %2621 = vmatpush1.msra.mxu0 %v2620
      %2622 = vmatprep.subr.mxu0 0.0
      %2623 = vmatpush1.msra.mxu0 0.0
      %2624 = vmatprep.subr.mxu0 0.0
      %2625 = vmatpush1.msra.mxu0 0.0
      %2626 = vmatprep.subr.mxu0 0.0
      %2627 = vmatpush1.msra.mxu0 0.0
      %2628 = vmatprep.subr.mxu0 0.0
      %2629 = vmatpush1.msra.mxu0 0.0
      %2630 = vmatprep.subr.mxu0 0.0
      %2631 = vmatpush1.msra.mxu0 0.0
      %2632 = vmatprep.subr.mxu0 0.0
      %2633 = vmatpush1.msra.mxu0 0.0
      %2634 = vmatprep.subr.mxu0 0.0
      %2635 = vmatpush1.msra.mxu0 0.0
      %2636 = vmatprep.subr.mxu0 0.0
      %2637 = vmatpush1.msra.mxu0 0.0
      %2638 = vmatprep.subr.mxu0 0.0
      %2639 = vmatpush1.msra.mxu0 0.0
      %2640 = vmatprep.subr.mxu0 0.0
      %2641 = vmatpush1.msra.mxu0 0.0
      %2642 = vmatprep.subr.mxu0 0.0
      %2643 = vmatpush1.msra.mxu0 0.0
      %2644 = vmatprep.subr.mxu0 0.0
      %2645 = vmatpush1.msra.mxu0 0.0
      %2646 = vmatprep.subr.mxu0 0.0
      %2647 = vmatpush1.msra.mxu0 0.0
      %2648 = vmatprep.subr.mxu0 0.0
      %2649 = vmatpush1.msra.mxu0 0.0
      %2650 = vmatprep.subr.mxu0 0.0
      %2651 = vmatpush1.msra.mxu0 0.0
      %2652 = vmatprep.subr.mxu0 0.0
      %2653 = vmatpush1.msra.mxu0 0.0
      %2654 = vmatprep.subr.mxu0 0.0
      %2655 = vmatpush1.msra.mxu0 0.0
      %2656 = vmatprep.subr.mxu0 0.0
      %2657 = vmatpush1.msra.mxu0 0.0
      %2658 = vmatprep.subr.mxu0 0.0
      %2659 = vmatpush1.msra.mxu0 0.0
      %2660 = vmatprep.subr.mxu0 0.0
      %2661 = vmatpush1.msra.mxu0 0.0
      %2662 = vmatprep.subr.mxu0 0.0
      %2663 = vmatpush1.msra.mxu0 0.0
      %2664 = vmatprep.subr.mxu0 0.0
      %2665 = vmatpush1.msra.mxu0 0.0
      %2666 = vmatprep.subr.mxu0 0.0
      %2667 = vmatpush1.msra.mxu0 0.0
      %2668 = vmatprep.subr.mxu0 0.0
      %2669 = vmatpush1.msra.mxu0 0.0
      %2670 = vmatprep.subr.mxu0 0.0
      %2671 = vmatpush1.msra.mxu0 0.0
      %2672 = vmatprep.subr.mxu0 0.0
      %2673 = vmatpush1.msra.mxu0 0.0
      %2674 = vmatprep.subr.mxu0 0.0
      %2675 = vmatpush1.msra.mxu0 0.0
      %2676 = vmatprep.subr.mxu0 0.0
      %2677 = vmatpush1.msra.mxu0 0.0
      %2678 = vmatprep.subr.mxu0 0.0
      %2679 = vmatpush1.msra.mxu0 0.0
      %2680 = vmatprep.subr.mxu0 0.0
      %2681 = vmatpush1.msra.mxu0 0.0
      %2682 = vmatprep.mubr.f32.mxu0 0.0
      %v2683 = vand.u32 %v1181, 4294901760
      %v2684 = vsub.f32 %v1181, %v2683
      %v2685 = vand.u32 %v2684, 4294901760
      %v2686 = vsub.f32 %v2684, %v2685
      %v2687 = vand.u32 %v2686, 4294901760
      %2688 = vmatmul.mubr.f32.gmra.mrb[0].mxu0 %v2687
      %v2689 = vpop.f32.mrb[0].mxu0
      %v2690 = vadd.f32 0.0, %v2689
      %v2691 = vpop.f32.mrb[0].mxu0
      %2692 = vdwg.mxu0
      %2693 = vmatprep.subr.mxu0 0.0
      %v2694 = vand.u32 %v2614, 4294901760
      %v2695 = vsub.f32 %v2614, %v2694
      %v2696 = vand.u32 %v2695, 4294901760
      %v2697 = vsub.f32 %v2695, %v2696
      %v2698 = vand.u32 %v2697, 4294901760
      %2699 = vmatpush1.msra.mxu0 %v2698
      %2700 = vmatprep.subr.mxu0 0.0
      %v2701 = vand.u32 %v2615, 4294901760
      %v2702 = vsub.f32 %v2615, %v2701
      %v2703 = vand.u32 %v2702, 4294901760
      %v2704 = vsub.f32 %v2702, %v2703
      %v2705 = vand.u32 %v2704, 4294901760
      %2706 = vmatpush1.msra.mxu0 %v2705
      %2707 = vmatprep.subr.mxu0 0.0
      %2708 = vmatpush1.msra.mxu0 0.0
      %2709 = vmatprep.subr.mxu0 0.0
      %2710 = vmatpush1.msra.mxu0 0.0
      %2711 = vmatprep.subr.mxu0 0.0
      %2712 = vmatpush1.msra.mxu0 0.0
      %2713 = vmatprep.subr.mxu0 0.0
      %2714 = vmatpush1.msra.mxu0 0.0
      %2715 = vmatprep.subr.mxu0 0.0
      %2716 = vmatpush1.msra.mxu0 0.0
      %2717 = vmatprep.subr.mxu0 0.0
      %2718 = vmatpush1.msra.mxu0 0.0
      %2719 = vmatprep.subr.mxu0 0.0
      %2720 = vmatpush1.msra.mxu0 0.0
      %2721 = vmatprep.subr.mxu0 0.0
      %2722 = vmatpush1.msra.mxu0 0.0
      %2723 = vmatprep.subr.mxu0 0.0
      %2724 = vmatpush1.msra.mxu0 0.0
      %2725 = vmatprep.subr.mxu0 0.0
      %2726 = vmatpush1.msra.mxu0 0.0
      %2727 = vmatprep.subr.mxu0 0.0
      %2728 = vmatpush1.msra.mxu0 0.0
      %2729 = vmatprep.subr.mxu0 0.0
      %2730 = vmatpush1.msra.mxu0 0.0
      %2731 = vmatprep.subr.mxu0 0.0
      %2732 = vmatpush1.msra.mxu0 0.0
      %2733 = vmatprep.subr.mxu0 0.0
      %2734 = vmatpush1.msra.mxu0 0.0
      %2735 = vmatprep.subr.mxu0 0.0
      %2736 = vmatpush1.msra.mxu0 0.0
      %2737 = vmatprep.subr.mxu0 0.0
      %2738 = vmatpush1.msra.mxu0 0.0
      %2739 = vmatprep.subr.mxu0 0.0
      %2740 = vmatpush1.msra.mxu0 0.0
      %2741 = vmatprep.subr.mxu0 0.0
      %2742 = vmatpush1.msra.mxu0 0.0
      %2743 = vmatprep.subr.mxu0 0.0
      %2744 = vmatpush1.msra.mxu0 0.0
      %2745 = vmatprep.subr.mxu0 0.0
      %2746 = vmatpush1.msra.mxu0 0.0
      %2747 = vmatprep.subr.mxu0 0.0
      %2748 = vmatpush1.msra.mxu0 0.0
      %2749 = vmatprep.subr.mxu0 0.0
      %2750 = vmatpush1.msra.mxu0 0.0
      %2751 = vmatprep.subr.mxu0 0.0
      %2752 = vmatpush1.msra.mxu0 0.0
      %2753 = vmatprep.subr.mxu0 0.0
      %2754 = vmatpush1.msra.mxu0 0.0
      %2755 = vmatprep.subr.mxu0 0.0
      %2756 = vmatpush1.msra.mxu0 0.0
      %2757 = vmatprep.subr.mxu0 0.0
      %2758 = vmatpush1.msra.mxu0 0.0
      %2759 = vmatprep.subr.mxu0 0.0
      %2760 = vmatpush1.msra.mxu0 0.0
      %2761 = vmatprep.subr.mxu0 0.0
      %2762 = vmatpush1.msra.mxu0 0.0
      %2763 = vmatprep.subr.mxu0 0.0
      %2764 = vmatpush1.msra.mxu0 0.0
      %2765 = vmatprep.subr.mxu0 0.0
      %2766 = vmatpush1.msra.mxu0 0.0
      %2767 = vmatprep.mubr.f32.mxu0 0.0
      %v2768 = vand.u32 %v1181, 4294901760
      %2769 = vmatmul.mubr.f32.gmra.mrb[0].mxu0 %v2768
      %v2770 = vpop.f32.mrb[0].mxu0
      %v2771 = vadd.f32 %v2690, %v2770
      %v2772 = vpop.f32.mrb[0].mxu0
      %2773 = vdwg.mxu0
      %2774 = vmatprep.subr.mxu0 0.0
      %v2775 = vand.u32 %v2614, 4294901760
      %v2776 = vsub.f32 %v2614, %v2775
      %2777 = vmatpush1.msra.mxu0 %v2776
      %2778 = vmatprep.subr.mxu0 0.0
      %v2779 = vand.u32 %v2615, 4294901760
      %v2780 = vsub.f32 %v2615, %v2779
      %2781 = vmatpush1.msra.mxu0 %v2780
      %2782 = vmatprep.subr.mxu0 0.0
      %2783 = vmatpush1.msra.mxu0 0.0
      %2784 = vmatprep.subr.mxu0 0.0
      %2785 = vmatpush1.msra.mxu0 0.0
      %2786 = vmatprep.subr.mxu0 0.0
      %2787 = vmatpush1.msra.mxu0 0.0
      %2788 = vmatprep.subr.mxu0 0.0
      %2789 = vmatpush1.msra.mxu0 0.0
      %2790 = vmatprep.subr.mxu0 0.0
      %2791 = vmatpush1.msra.mxu0 0.0
      %2792 = vmatprep.subr.mxu0 0.0
      %2793 = vmatpush1.msra.mxu0 0.0
      %2794 = vmatprep.subr.mxu0 0.0
      %2795 = vmatpush1.msra.mxu0 0.0
      %2796 = vmatprep.subr.mxu0 0.0
      %2797 = vmatpush1.msra.mxu0 0.0
      %2798 = vmatprep.subr.mxu0 0.0
      %2799 = vmatpush1.msra.mxu0 0.0
      %2800 = vmatprep.subr.mxu0 0.0
      %2801 = vmatpush1.msra.mxu0 0.0
      %2802 = vmatprep.subr.mxu0 0.0
      %2803 = vmatpush1.msra.mxu0 0.0
      %2804 = vmatprep.subr.mxu0 0.0
      %2805 = vmatpush1.msra.mxu0 0.0
      %2806 = vmatprep.subr.mxu0 0.0
      %2807 = vmatpush1.msra.mxu0 0.0
      %2808 = vmatprep.subr.mxu0 0.0
      %2809 = vmatpush1.msra.mxu0 0.0
      %2810 = vmatprep.subr.mxu0 0.0
      %2811 = vmatpush1.msra.mxu0 0.0
      %2812 = vmatprep.subr.mxu0 0.0
      %2813 = vmatpush1.msra.mxu0 0.0
      %2814 = vmatprep.subr.mxu0 0.0
      %2815 = vmatpush1.msra.mxu0 0.0
      %2816 = vmatprep.subr.mxu0 0.0
      %2817 = vmatpush1.msra.mxu0 0.0
      %2818 = vmatprep.subr.mxu0 0.0
      %2819 = vmatpush1.msra.mxu0 0.0
      %2820 = vmatprep.subr.mxu0 0.0
      %2821 = vmatpush1.msra.mxu0 0.0
      %2822 = vmatprep.subr.mxu0 0.0
      %2823 = vmatpush1.msra.mxu0 0.0
      %2824 = vmatprep.subr.mxu0 0.0
      %2825 = vmatpush1.msra.mxu0 0.0
      %2826 = vmatprep.subr.mxu0 0.0
      %2827 = vmatpush1.msra.mxu0 0.0
      %2828 = vmatprep.subr.mxu0 0.0
      %2829 = vmatpush1.msra.mxu0 0.0
      %2830 = vmatprep.subr.mxu0 0.0
      %2831 = vmatpush1.msra.mxu0 0.0
      %2832 = vmatprep.subr.mxu0 0.0
      %2833 = vmatpush1.msra.mxu0 0.0
      %2834 = vmatprep.subr.mxu0 0.0
      %2835 = vmatpush1.msra.mxu0 0.0
      %2836 = vmatprep.subr.mxu0 0.0
      %2837 = vmatpush1.msra.mxu0 0.0
      %2838 = vmatprep.subr.mxu0 0.0
      %2839 = vmatpush1.msra.mxu0 0.0
      %2840 = vmatprep.subr.mxu0 0.0
      %2841 = vmatpush1.msra.mxu0 0.0
      %2842 = vmatprep.mubr.f32.mxu0 0.0
      %v2843 = vand.u32 %v1181, 4294901760
      %v2844 = vsub.f32 %v1181, %v2843
      %2845 = vmatmul.mubr.f32.gmra.mrb[0].mxu0 %v2844
      %v2846 = vpop.f32.mrb[0].mxu0
      %v2847 = vadd.f32 %v2771, %v2846
      %v2848 = vpop.f32.mrb[0].mxu0
      %2849 = vdwg.mxu0
      %2850 = vmatprep.subr.mxu0 0.0
      %v2851 = vand.u32 %v2614, 4294901760
      %2852 = vmatpush1.msra.mxu0 %v2851
      %2853 = vmatprep.subr.mxu0 0.0
      %v2854 = vand.u32 %v2615, 4294901760
      %2855 = vmatpush1.msra.mxu0 %v2854
      %2856 = vmatprep.subr.mxu0 0.0
      %2857 = vmatpush1.msra.mxu0 0.0
      %2858 = vmatprep.subr.mxu0 0.0
      %2859 = vmatpush1.msra.mxu0 0.0
      %2860 = vmatprep.subr.mxu0 0.0
      %2861 = vmatpush1.msra.mxu0 0.0
      %2862 = vmatprep.subr.mxu0 0.0
      %2863 = vmatpush1.msra.mxu0 0.0
      %2864 = vmatprep.subr.mxu0 0.0
      %2865 = vmatpush1.msra.mxu0 0.0
      %2866 = vmatprep.subr.mxu0 0.0
      %2867 = vmatpush1.msra.mxu0 0.0
      %2868 = vmatprep.subr.mxu0 0.0
      %2869 = vmatpush1.msra.mxu0 0.0
      %2870 = vmatprep.subr.mxu0 0.0
      %2871 = vmatpush1.msra.mxu0 0.0
      %2872 = vmatprep.subr.mxu0 0.0
      %2873 = vmatpush1.msra.mxu0 0.0
      %2874 = vmatprep.subr.mxu0 0.0
      %2875 = vmatpush1.msra.mxu0 0.0
      %2876 = vmatprep.subr.mxu0 0.0
      %2877 = vmatpush1.msra.mxu0 0.0
      %2878 = vmatprep.subr.mxu0 0.0
      %2879 = vmatpush1.msra.mxu0 0.0
      %2880 = vmatprep.subr.mxu0 0.0
      %2881 = vmatpush1.msra.mxu0 0.0
      %2882 = vmatprep.subr.mxu0 0.0
      %2883 = vmatpush1.msra.mxu0 0.0
      %2884 = vmatprep.subr.mxu0 0.0
      %2885 = vmatpush1.msra.mxu0 0.0
      %2886 = vmatprep.subr.mxu0 0.0
      %2887 = vmatpush1.msra.mxu0 0.0
      %2888 = vmatprep.subr.mxu0 0.0
      %2889 = vmatpush1.msra.mxu0 0.0
      %2890 = vmatprep.subr.mxu0 0.0
      %2891 = vmatpush1.msra.mxu0 0.0
      %2892 = vmatprep.subr.mxu0 0.0
      %2893 = vmatpush1.msra.mxu0 0.0
      %2894 = vmatprep.subr.mxu0 0.0
      %2895 = vmatpush1.msra.mxu0 0.0
      %2896 = vmatprep.subr.mxu0 0.0
      %2897 = vmatpush1.msra.mxu0 0.0
      %2898 = vmatprep.subr.mxu0 0.0
      %2899 = vmatpush1.msra.mxu0 0.0
      %2900 = vmatprep.subr.mxu0 0.0
      %2901 = vmatpush1.msra.mxu0 0.0
      %2902 = vmatprep.subr.mxu0 0.0
      %2903 = vmatpush1.msra.mxu0 0.0
      %2904 = vmatprep.subr.mxu0 0.0
      %2905 = vmatpush1.msra.mxu0 0.0
      %2906 = vmatprep.subr.mxu0 0.0
      %2907 = vmatpush1.msra.mxu0 0.0
      %2908 = vmatprep.subr.mxu0 0.0
      %2909 = vmatpush1.msra.mxu0 0.0
      %2910 = vmatprep.subr.mxu0 0.0
      %2911 = vmatpush1.msra.mxu0 0.0
      %2912 = vmatprep.subr.mxu0 0.0
      %2913 = vmatpush1.msra.mxu0 0.0
      %2914 = vmatprep.subr.mxu0 0.0
      %2915 = vmatpush1.msra.mxu0 0.0
      %2916 = vmatprep.mubr.f32.mxu0 0.0
      %v2917 = vand.u32 %v1181, 4294901760
      %v2918 = vsub.f32 %v1181, %v2917
      %v2919 = vand.u32 %v2918, 4294901760
      %2920 = vmatmul.mubr.f32.gmra.mrb[0].mxu0 %v2919
      %v2921 = vpop.f32.mrb[0].mxu0
      %v2922 = vadd.f32 %v2847, %v2921
      %v2923 = vpop.f32.mrb[0].mxu0
      %2924 = vdwg.mxu0
      %2925 = vmatprep.subr.mxu0 0.0
      %v2926 = vand.u32 %v2614, 4294901760
      %v2927 = vsub.f32 %v2614, %v2926
      %v2928 = vand.u32 %v2927, 4294901760
      %2929 = vmatpush1.msra.mxu0 %v2928
      %2930 = vmatprep.subr.mxu0 0.0
      %v2931 = vand.u32 %v2615, 4294901760
      %v2932 = vsub.f32 %v2615, %v2931
      %v2933 = vand.u32 %v2932, 4294901760
      %2934 = vmatpush1.msra.mxu0 %v2933
      %2935 = vmatprep.subr.mxu0 0.0
      %2936 = vmatpush1.msra.mxu0 0.0
      %2937 = vmatprep.subr.mxu0 0.0
      %2938 = vmatpush1.msra.mxu0 0.0
      %2939 = vmatprep.subr.mxu0 0.0
      %2940 = vmatpush1.msra.mxu0 0.0
      %2941 = vmatprep.subr.mxu0 0.0
      %2942 = vmatpush1.msra.mxu0 0.0
      %2943 = vmatprep.subr.mxu0 0.0
      %2944 = vmatpush1.msra.mxu0 0.0
      %2945 = vmatprep.subr.mxu0 0.0
      %2946 = vmatpush1.msra.mxu0 0.0
      %2947 = vmatprep.subr.mxu0 0.0
      %2948 = vmatpush1.msra.mxu0 0.0
      %2949 = vmatprep.subr.mxu0 0.0
      %2950 = vmatpush1.msra.mxu0 0.0
      %2951 = vmatprep.subr.mxu0 0.0
      %2952 = vmatpush1.msra.mxu0 0.0
      %2953 = vmatprep.subr.mxu0 0.0
      %2954 = vmatpush1.msra.mxu0 0.0
      %2955 = vmatprep.subr.mxu0 0.0
      %2956 = vmatpush1.msra.mxu0 0.0
      %2957 = vmatprep.subr.mxu0 0.0
      %2958 = vmatpush1.msra.mxu0 0.0
      %2959 = vmatprep.subr.mxu0 0.0
      %2960 = vmatpush1.msra.mxu0 0.0
      %2961 = vmatprep.subr.mxu0 0.0
      %2962 = vmatpush1.msra.mxu0 0.0
      %2963 = vmatprep.subr.mxu0 0.0
      %2964 = vmatpush1.msra.mxu0 0.0
      %2965 = vmatprep.subr.mxu0 0.0
      %2966 = vmatpush1.msra.mxu0 0.0
      %2967 = vmatprep.subr.mxu0 0.0
      %2968 = vmatpush1.msra.mxu0 0.0
      %2969 = vmatprep.subr.mxu0 0.0
      %2970 = vmatpush1.msra.mxu0 0.0
      %2971 = vmatprep.subr.mxu0 0.0
      %2972 = vmatpush1.msra.mxu0 0.0
      %2973 = vmatprep.subr.mxu0 0.0
      %2974 = vmatpush1.msra.mxu0 0.0
      %2975 = vmatprep.subr.mxu0 0.0
      %2976 = vmatpush1.msra.mxu0 0.0
      %2977 = vmatprep.subr.mxu0 0.0
      %2978 = vmatpush1.msra.mxu0 0.0
      %2979 = vmatprep.subr.mxu0 0.0
      %2980 = vmatpush1.msra.mxu0 0.0
      %2981 = vmatprep.subr.mxu0 0.0
      %2982 = vmatpush1.msra.mxu0 0.0
      %2983 = vmatprep.subr.mxu0 0.0
      %2984 = vmatpush1.msra.mxu0 0.0
      %2985 = vmatprep.subr.mxu0 0.0
      %2986 = vmatpush1.msra.mxu0 0.0
      %2987 = vmatprep.subr.mxu0 0.0
      %2988 = vmatpush1.msra.mxu0 0.0
      %2989 = vmatprep.subr.mxu0 0.0
      %2990 = vmatpush1.msra.mxu0 0.0
      %2991 = vmatprep.subr.mxu0 0.0
      %2992 = vmatpush1.msra.mxu0 0.0
      %2993 = vmatprep.subr.mxu0 0.0
      %2994 = vmatpush1.msra.mxu0 0.0
      %2995 = vmatprep.mubr.f32.mxu0 0.0
      %v2996 = vand.u32 %v1181, 4294901760
      %2997 = vmatmul.mubr.f32.gmra.mrb[0].mxu0 %v2996
      %v2998 = vpop.f32.mrb[0].mxu0
      %v2999 = vadd.f32 %v2922, %v2998
      %v3000 = vpop.f32.mrb[0].mxu0
      %3001 = vdwg.mxu0
      %3002 = vmatprep.subr.mxu0 0.0
      %v3003 = vand.u32 %v2614, 4294901760
      %3004 = vmatpush1.msra.mxu0 %v3003
      %3005 = vmatprep.subr.mxu0 0.0
      %v3006 = vand.u32 %v2615, 4294901760
      %3007 = vmatpush1.msra.mxu0 %v3006
      %3008 = vmatprep.subr.mxu0 0.0
      %3009 = vmatpush1.msra.mxu0 0.0
      %3010 = vmatprep.subr.mxu0 0.0
      %3011 = vmatpush1.msra.mxu0 0.0
      %3012 = vmatprep.subr.mxu0 0.0
      %3013 = vmatpush1.msra.mxu0 0.0
      %3014 = vmatprep.subr.mxu0 0.0
      %3015 = vmatpush1.msra.mxu0 0.0
      %3016 = vmatprep.subr.mxu0 0.0
      %3017 = vmatpush1.msra.mxu0 0.0
      %3018 = vmatprep.subr.mxu0 0.0
      %3019 = vmatpush1.msra.mxu0 0.0
      %3020 = vmatprep.subr.mxu0 0.0
      %3021 = vmatpush1.msra.mxu0 0.0
      %3022 = vmatprep.subr.mxu0 0.0
      %3023 = vmatpush1.msra.mxu0 0.0
      %3024 = vmatprep.subr.mxu0 0.0
      %3025 = vmatpush1.msra.mxu0 0.0
      %3026 = vmatprep.subr.mxu0 0.0
      %3027 = vmatpush1.msra.mxu0 0.0
      %3028 = vmatprep.subr.mxu0 0.0
      %3029 = vmatpush1.msra.mxu0 0.0
      %3030 = vmatprep.subr.mxu0 0.0
      %3031 = vmatpush1.msra.mxu0 0.0
      %3032 = vmatprep.subr.mxu0 0.0
      %3033 = vmatpush1.msra.mxu0 0.0
      %3034 = vmatprep.subr.mxu0 0.0
      %3035 = vmatpush1.msra.mxu0 0.0
      %3036 = vmatprep.subr.mxu0 0.0
      %3037 = vmatpush1.msra.mxu0 0.0
      %3038 = vmatprep.subr.mxu0 0.0
      %3039 = vmatpush1.msra.mxu0 0.0
      %3040 = vmatprep.subr.mxu0 0.0
      %3041 = vmatpush1.msra.mxu0 0.0
      %3042 = vmatprep.subr.mxu0 0.0
      %3043 = vmatpush1.msra.mxu0 0.0
      %3044 = vmatprep.subr.mxu0 0.0
      %3045 = vmatpush1.msra.mxu0 0.0
      %3046 = vmatprep.subr.mxu0 0.0
      %3047 = vmatpush1.msra.mxu0 0.0
      %3048 = vmatprep.subr.mxu0 0.0
      %3049 = vmatpush1.msra.mxu0 0.0
      %3050 = vmatprep.subr.mxu0 0.0
      %3051 = vmatpush1.msra.mxu0 0.0
      %3052 = vmatprep.subr.mxu0 0.0
      %3053 = vmatpush1.msra.mxu0 0.0
      %3054 = vmatprep.subr.mxu0 0.0
      %3055 = vmatpush1.msra.mxu0 0.0
      %3056 = vmatprep.subr.mxu0 0.0
      %3057 = vmatpush1.msra.mxu0 0.0
      %3058 = vmatprep.subr.mxu0 0.0
      %3059 = vmatpush1.msra.mxu0 0.0
      %3060 = vmatprep.subr.mxu0 0.0
      %3061 = vmatpush1.msra.mxu0 0.0
      %3062 = vmatprep.subr.mxu0 0.0
      %3063 = vmatpush1.msra.mxu0 0.0
      %3064 = vmatprep.subr.mxu0 0.0
      %3065 = vmatpush1.msra.mxu0 0.0
      %3066 = vmatprep.subr.mxu0 0.0
      %3067 = vmatpush1.msra.mxu0 0.0
      %3068 = vmatprep.mubr.f32.mxu0 0.0
      %v3069 = vand.u32 %v1181, 4294901760
      %3070 = vmatmul.mubr.f32.gmra.mrb[0].mxu0 %v3069
      %v3071 = vpop.f32.mrb[0].mxu0
      %v3072 = vadd.f32 %v2999, %v3071
      %v3073 = vpop.f32.mrb[0].mxu0
      %3074 = vdwg.mxu0
      %v3075 = vsub.f32 %v3072, %v597
      %v3076 = vmax.f32 %v2598, %v3075
      %v3078 = vrot.slane %v3076, 4
      %v3080 = vsel %vm150, %v597, %v3078
      %3081 = vset.pattern.permute.xlu0 8
      %3082 = vperm.xlu0 %3081, %v140
      %v3083 = vpop.permute.xlu0 %3082
      %3085 = vset.pattern.permute.xlu0 8
      %3086 = vperm.xlu0 %3085, %v141
      %v3087 = vpop.permute.xlu0 %3086
      %v3088 = vrot.slane %v140, 4
      %v3089 = vrot.slane %v141, 4
      %v3090 = vsel %vm150, %v3088, %v3089
      %v3091 = vrot.slane %v3083, 4
      %v3092 = vrot.slane %v3087, 4
      %v3093 = vsel %vm150, %v3091, %v3092
      %vm3095 = vcmask 64512
      %v3096 = vsel %vm3095, %v3090, 0
      %3098 = vmatprep.subr.mxu0 0.0
      %v3099 = vand.u32 %v3080, 4294901760
      %3100 = vmatpush1.msra.mxu0 %v3099
      %3101 = vmatprep.subr.mxu0 0.0
      %3102 = vmatpush1.msra.mxu0 0.0
      %3103 = vmatprep.subr.mxu0 0.0
      %3104 = vmatpush1.msra.mxu0 0.0
      %3105 = vmatprep.subr.mxu0 0.0
      %3106 = vmatpush1.msra.mxu0 0.0
      %3107 = vmatprep.subr.mxu0 0.0
      %3108 = vmatpush1.msra.mxu0 0.0
      %3109 = vmatprep.subr.mxu0 0.0
      %3110 = vmatpush1.msra.mxu0 0.0
      %3111 = vmatprep.subr.mxu0 0.0
      %3112 = vmatpush1.msra.mxu0 0.0
      %3113 = vmatprep.subr.mxu0 0.0
      %3114 = vmatpush1.msra.mxu0 0.0
      %3115 = vmatprep.subr.mxu0 0.0
      %3116 = vmatpush1.msra.mxu0 0.0
      %3117 = vmatprep.subr.mxu0 0.0
      %3118 = vmatpush1.msra.mxu0 0.0
      %3119 = vmatprep.subr.mxu0 0.0
      %3120 = vmatpush1.msra.mxu0 0.0
      %3121 = vmatprep.subr.mxu0 0.0
      %3122 = vmatpush1.msra.mxu0 0.0
      %3123 = vmatprep.subr.mxu0 0.0
      %3124 = vmatpush1.msra.mxu0 0.0
      %3125 = vmatprep.subr.mxu0 0.0
      %3126 = vmatpush1.msra.mxu0 0.0
      %3127 = vmatprep.subr.mxu0 0.0
      %3128 = vmatpush1.msra.mxu0 0.0
      %3129 = vmatprep.subr.mxu0 0.0
      %3130 = vmatpush1.msra.mxu0 0.0
      %3131 = vmatprep.subr.mxu0 0.0
      %3132 = vmatpush1.msra.mxu0 0.0
      %3133 = vmatprep.subr.mxu0 0.0
      %3134 = vmatpush1.msra.mxu0 0.0
      %3135 = vmatprep.subr.mxu0 0.0
      %3136 = vmatpush1.msra.mxu0 0.0
      %3137 = vmatprep.subr.mxu0 0.0
      %3138 = vmatpush1.msra.mxu0 0.0
      %3139 = vmatprep.subr.mxu0 0.0
      %3140 = vmatpush1.msra.mxu0 0.0
      %3141 = vmatprep.subr.mxu0 0.0
      %3142 = vmatpush1.msra.mxu0 0.0
      %3143 = vmatprep.subr.mxu0 0.0
      %3144 = vmatpush1.msra.mxu0 0.0
      %3145 = vmatprep.subr.mxu0 0.0
      %3146 = vmatpush1.msra.mxu0 0.0
      %3147 = vmatprep.subr.mxu0 0.0
      %3148 = vmatpush1.msra.mxu0 0.0
      %3149 = vmatprep.subr.mxu0 0.0
      %3150 = vmatpush1.msra.mxu0 0.0
      %3151 = vmatprep.subr.mxu0 0.0
      %3152 = vmatpush1.msra.mxu0 0.0
      %3153 = vmatprep.subr.mxu0 0.0
      %3154 = vmatpush1.msra.mxu0 0.0
      %3155 = vmatprep.subr.mxu0 0.0
      %3156 = vmatpush1.msra.mxu0 0.0
      %3157 = vmatprep.subr.mxu0 0.0
      %3158 = vmatpush1.msra.mxu0 0.0
      %3159 = vmatprep.subr.mxu0 0.0
      %3160 = vmatpush1.msra.mxu0 0.0
      %3161 = vmatprep.subr.mxu0 0.0
      %3162 = vmatpush1.msra.mxu0 0.0
      %3163 = vmatprep.mubr.f32.mxu0 0.0
      %v3164 = vand.u32 %v3096, 4294901760
      %v3165 = vsub.f32 %v3096, %v3164
      %v3166 = vand.u32 %v3165, 4294901760
      %v3167 = vsub.f32 %v3165, %v3166
      %v3168 = vand.u32 %v3167, 4294901760
      %3169 = vmatmul.mubr.f32.gmra.mrb[0].mxu0 %v3168
      %v3170 = vpop.f32.mrb[0].mxu0
      %v3171 = vadd.f32 %v3093, %v3170
      %v3172 = vpop.f32.mrb[0].mxu0
      %3173 = vdwg.mxu0
      %3174 = vmatprep.subr.mxu0 0.0
      %v3175 = vand.u32 %v3080, 4294901760
      %v3176 = vsub.f32 %v3080, %v3175
      %v3177 = vand.u32 %v3176, 4294901760
      %v3178 = vsub.f32 %v3176, %v3177
      %v3179 = vand.u32 %v3178, 4294901760
      %3180 = vmatpush1.msra.mxu0 %v3179
      %3181 = vmatprep.subr.mxu0 0.0
      %3182 = vmatpush1.msra.mxu0 0.0
      %3183 = vmatprep.subr.mxu0 0.0
      %3184 = vmatpush1.msra.mxu0 0.0
      %3185 = vmatprep.subr.mxu0 0.0
      %3186 = vmatpush1.msra.mxu0 0.0
      %3187 = vmatprep.subr.mxu0 0.0
      %3188 = vmatpush1.msra.mxu0 0.0
      %3189 = vmatprep.subr.mxu0 0.0
      %3190 = vmatpush1.msra.mxu0 0.0
      %3191 = vmatprep.subr.mxu0 0.0
      %3192 = vmatpush1.msra.mxu0 0.0
      %3193 = vmatprep.subr.mxu0 0.0
      %3194 = vmatpush1.msra.mxu0 0.0
      %3195 = vmatprep.subr.mxu0 0.0
      %3196 = vmatpush1.msra.mxu0 0.0
      %3197 = vmatprep.subr.mxu0 0.0
      %3198 = vmatpush1.msra.mxu0 0.0
      %3199 = vmatprep.subr.mxu0 0.0
      %3200 = vmatpush1.msra.mxu0 0.0
      %3201 = vmatprep.subr.mxu0 0.0
      %3202 = vmatpush1.msra.mxu0 0.0
      %3203 = vmatprep.subr.mxu0 0.0
      %3204 = vmatpush1.msra.mxu0 0.0
      %3205 = vmatprep.subr.mxu0 0.0
      %3206 = vmatpush1.msra.mxu0 0.0
      %3207 = vmatprep.subr.mxu0 0.0
      %3208 = vmatpush1.msra.mxu0 0.0
      %3209 = vmatprep.subr.mxu0 0.0
      %3210 = vmatpush1.msra.mxu0 0.0
      %3211 = vmatprep.subr.mxu0 0.0
      %3212 = vmatpush1.msra.mxu0 0.0
      %3213 = vmatprep.subr.mxu0 0.0
      %3214 = vmatpush1.msra.mxu0 0.0
      %3215 = vmatprep.subr.mxu0 0.0
      %3216 = vmatpush1.msra.mxu0 0.0
      %3217 = vmatprep.subr.mxu0 0.0
      %3218 = vmatpush1.msra.mxu0 0.0
      %3219 = vmatprep.subr.mxu0 0.0
      %3220 = vmatpush1.msra.mxu0 0.0
      %3221 = vmatprep.subr.mxu0 0.0
      %3222 = vmatpush1.msra.mxu0 0.0
      %3223 = vmatprep.subr.mxu0 0.0
      %3224 = vmatpush1.msra.mxu0 0.0
      %3225 = vmatprep.subr.mxu0 0.0
      %3226 = vmatpush1.msra.mxu0 0.0
      %3227 = vmatprep.subr.mxu0 0.0
      %3228 = vmatpush1.msra.mxu0 0.0
      %3229 = vmatprep.subr.mxu0 0.0
      %3230 = vmatpush1.msra.mxu0 0.0
      %3231 = vmatprep.subr.mxu0 0.0
      %3232 = vmatpush1.msra.mxu0 0.0
      %3233 = vmatprep.subr.mxu0 0.0
      %3234 = vmatpush1.msra.mxu0 0.0
      %3235 = vmatprep.subr.mxu0 0.0
      %3236 = vmatpush1.msra.mxu0 0.0
      %3237 = vmatprep.subr.mxu0 0.0
      %3238 = vmatpush1.msra.mxu0 0.0
      %3239 = vmatprep.subr.mxu0 0.0
      %3240 = vmatpush1.msra.mxu0 0.0
      %3241 = vmatprep.subr.mxu0 0.0
      %3242 = vmatpush1.msra.mxu0 0.0
      %3243 = vmatprep.mubr.f32.mxu0 0.0
      %v3244 = vand.u32 %v3096, 4294901760
      %3245 = vmatmul.mubr.f32.gmra.mrb[0].mxu0 %v3244
      %v3246 = vpop.f32.mrb[0].mxu0
      %v3247 = vadd.f32 %v3171, %v3246
      %v3248 = vpop.f32.mrb[0].mxu0
      %3249 = vdwg.mxu0
      %3250 = vmatprep.subr.mxu0 0.0
      %v3251 = vand.u32 %v3080, 4294901760
      %v3252 = vsub.f32 %v3080, %v3251
      %3253 = vmatpush1.msra.mxu0 %v3252
      %3254 = vmatprep.subr.mxu0 0.0
      %3255 = vmatpush1.msra.mxu0 0.0
      %3256 = vmatprep.subr.mxu0 0.0
      %3257 = vmatpush1.msra.mxu0 0.0
      %3258 = vmatprep.subr.mxu0 0.0
      %3259 = vmatpush1.msra.mxu0 0.0
      %3260 = vmatprep.subr.mxu0 0.0
      %3261 = vmatpush1.msra.mxu0 0.0
      %3262 = vmatprep.subr.mxu0 0.0
      %3263 = vmatpush1.msra.mxu0 0.0
      %3264 = vmatprep.subr.mxu0 0.0
      %3265 = vmatpush1.msra.mxu0 0.0
      %3266 = vmatprep.subr.mxu0 0.0
      %3267 = vmatpush1.msra.mxu0 0.0
      %3268 = vmatprep.subr.mxu0 0.0
      %3269 = vmatpush1.msra.mxu0 0.0
      %3270 = vmatprep.subr.mxu0 0.0
      %3271 = vmatpush1.msra.mxu0 0.0
      %3272 = vmatprep.subr.mxu0 0.0
      %3273 = vmatpush1.msra.mxu0 0.0
      %3274 = vmatprep.subr.mxu0 0.0
      %3275 = vmatpush1.msra.mxu0 0.0
      %3276 = vmatprep.subr.mxu0 0.0
      %3277 = vmatpush1.msra.mxu0 0.0
      %3278 = vmatprep.subr.mxu0 0.0
      %3279 = vmatpush1.msra.mxu0 0.0
      %3280 = vmatprep.subr.mxu0 0.0
      %3281 = vmatpush1.msra.mxu0 0.0
      %3282 = vmatprep.subr.mxu0 0.0
      %3283 = vmatpush1.msra.mxu0 0.0
      %3284 = vmatprep.subr.mxu0 0.0
      %3285 = vmatpush1.msra.mxu0 0.0
      %3286 = vmatprep.subr.mxu0 0.0
      %3287 = vmatpush1.msra.mxu0 0.0
      %3288 = vmatprep.subr.mxu0 0.0
      %3289 = vmatpush1.msra.mxu0 0.0
      %3290 = vmatprep.subr.mxu0 0.0
      %3291 = vmatpush1.msra.mxu0 0.0
      %3292 = vmatprep.subr.mxu0 0.0
      %3293 = vmatpush1.msra.mxu0 0.0
      %3294 = vmatprep.subr.mxu0 0.0
      %3295 = vmatpush1.msra.mxu0 0.0
      %3296 = vmatprep.subr.mxu0 0.0
      %3297 = vmatpush1.msra.mxu0 0.0
      %3298 = vmatprep.subr.mxu0 0.0
      %3299 = vmatpush1.msra.mxu0 0.0
      %3300 = vmatprep.subr.mxu0 0.0
      %3301 = vmatpush1.msra.mxu0 0.0
      %3302 = vmatprep.subr.mxu0 0.0
      %3303 = vmatpush1.msra.mxu0 0.0
      %3304 = vmatprep.subr.mxu0 0.0
      %3305 = vmatpush1.msra.mxu0 0.0
      %3306 = vmatprep.subr.mxu0 0.0
      %3307 = vmatpush1.msra.mxu0 0.0
      %3308 = vmatprep.subr.mxu0 0.0
      %3309 = vmatpush1.msra.mxu0 0.0
      %3310 = vmatprep.subr.mxu0 0.0
      %3311 = vmatpush1.msra.mxu0 0.0
      %3312 = vmatprep.subr.mxu0 0.0
      %3313 = vmatpush1.msra.mxu0 0.0
      %3314 = vmatprep.subr.mxu0 0.0
      %3315 = vmatpush1.msra.mxu0 0.0
      %3316 = vmatprep.mubr.f32.mxu0 0.0
      %v3317 = vand.u32 %v3096, 4294901760
      %v3318 = vsub.f32 %v3096, %v3317
      %3319 = vmatmul.mubr.f32.gmra.mrb[0].mxu0 %v3318
      %v3320 = vpop.f32.mrb[0].mxu0
      %v3321 = vadd.f32 %v3247, %v3320
      %v3322 = vpop.f32.mrb[0].mxu0
      %3323 = vdwg.mxu0
      %3324 = vmatprep.subr.mxu0 0.0
      %v3325 = vand.u32 %v3080, 4294901760
      %3326 = vmatpush1.msra.mxu0 %v3325
      %3327 = vmatprep.subr.mxu0 0.0
      %3328 = vmatpush1.msra.mxu0 0.0
      %3329 = vmatprep.subr.mxu0 0.0
      %3330 = vmatpush1.msra.mxu0 0.0
      %3331 = vmatprep.subr.mxu0 0.0
      %3332 = vmatpush1.msra.mxu0 0.0
      %3333 = vmatprep.subr.mxu0 0.0
      %3334 = vmatpush1.msra.mxu0 0.0
      %3335 = vmatprep.subr.mxu0 0.0
      %3336 = vmatpush1.msra.mxu0 0.0
      %3337 = vmatprep.subr.mxu0 0.0
      %3338 = vmatpush1.msra.mxu0 0.0
      %3339 = vmatprep.subr.mxu0 0.0
      %3340 = vmatpush1.msra.mxu0 0.0
      %3341 = vmatprep.subr.mxu0 0.0
      %3342 = vmatpush1.msra.mxu0 0.0
      %3343 = vmatprep.subr.mxu0 0.0
      %3344 = vmatpush1.msra.mxu0 0.0
      %3345 = vmatprep.subr.mxu0 0.0
      %3346 = vmatpush1.msra.mxu0 0.0
      %3347 = vmatprep.subr.mxu0 0.0
      %3348 = vmatpush1.msra.mxu0 0.0
      %3349 = vmatprep.subr.mxu0 0.0
      %3350 = vmatpush1.msra.mxu0 0.0
      %3351 = vmatprep.subr.mxu0 0.0
      %3352 = vmatpush1.msra.mxu0 0.0
      %3353 = vmatprep.subr.mxu0 0.0
      %3354 = vmatpush1.msra.mxu0 0.0
      %3355 = vmatprep.subr.mxu0 0.0
      %3356 = vmatpush1.msra.mxu0 0.0
      %3357 = vmatprep.subr.mxu0 0.0
      %3358 = vmatpush1.msra.mxu0 0.0
      %3359 = vmatprep.subr.mxu0 0.0
      %3360 = vmatpush1.msra.mxu0 0.0
      %3361 = vmatprep.subr.mxu0 0.0
      %3362 = vmatpush1.msra.mxu0 0.0
      %3363 = vmatprep.subr.mxu0 0.0
      %3364 = vmatpush1.msra.mxu0 0.0
      %3365 = vmatprep.subr.mxu0 0.0
      %3366 = vmatpush1.msra.mxu0 0.0
      %3367 = vmatprep.subr.mxu0 0.0
      %3368 = vmatpush1.msra.mxu0 0.0
      %3369 = vmatprep.subr.mxu0 0.0
      %3370 = vmatpush1.msra.mxu0 0.0
      %3371 = vmatprep.subr.mxu0 0.0
      %3372 = vmatpush1.msra.mxu0 0.0
      %3373 = vmatprep.subr.mxu0 0.0
      %3374 = vmatpush1.msra.mxu0 0.0
      %3375 = vmatprep.subr.mxu0 0.0
      %3376 = vmatpush1.msra.mxu0 0.0
      %3377 = vmatprep.subr.mxu0 0.0
      %3378 = vmatpush1.msra.mxu0 0.0
      %3379 = vmatprep.subr.mxu0 0.0
      %3380 = vmatpush1.msra.mxu0 0.0
      %3381 = vmatprep.subr.mxu0 0.0
      %3382 = vmatpush1.msra.mxu0 0.0
      %3383 = vmatprep.subr.mxu0 0.0
      %3384 = vmatpush1.msra.mxu0 0.0
      %3385 = vmatprep.subr.mxu0 0.0
      %3386 = vmatpush1.msra.mxu0 0.0
      %3387 = vmatprep.subr.mxu0 0.0
      %3388 = vmatpush1.msra.mxu0 0.0
      %3389 = vmatprep.mubr.f32.mxu0 0.0
      %v3390 = vand.u32 %v3096, 4294901760
      %v3391 = vsub.f32 %v3096, %v3390
      %v3392 = vand.u32 %v3391, 4294901760
      %3393 = vmatmul.mubr.f32.gmra.mrb[0].mxu0 %v3392
      %v3394 = vpop.f32.mrb[0].mxu0
      %v3395 = vadd.f32 %v3321, %v3394
      %v3396 = vpop.f32.mrb[0].mxu0
      %3397 = vdwg.mxu0
      %3398 = vmatprep.subr.mxu0 0.0
      %v3399 = vand.u32 %v3080, 4294901760
      %v3400 = vsub.f32 %v3080, %v3399
      %v3401 = vand.u32 %v3400, 4294901760
      %3402 = vmatpush1.msra.mxu0 %v3401
      %3403 = vmatprep.subr.mxu0 0.0
      %3404 = vmatpush1.msra.mxu0 0.0
      %3405 = vmatprep.subr.mxu0 0.0
      %3406 = vmatpush1.msra.mxu0 0.0
      %3407 = vmatprep.subr.mxu0 0.0
      %3408 = vmatpush1.msra.mxu0 0.0
      %3409 = vmatprep.subr.mxu0 0.0
      %3410 = vmatpush1.msra.mxu0 0.0
      %3411 = vmatprep.subr.mxu0 0.0
      %3412 = vmatpush1.msra.mxu0 0.0
      %3413 = vmatprep.subr.mxu0 0.0
      %3414 = vmatpush1.msra.mxu0 0.0
      %3415 = vmatprep.subr.mxu0 0.0
      %3416 = vmatpush1.msra.mxu0 0.0
      %3417 = vmatprep.subr.mxu0 0.0
      %3418 = vmatpush1.msra.mxu0 0.0
      %3419 = vmatprep.subr.mxu0 0.0
      %3420 = vmatpush1.msra.mxu0 0.0
      %3421 = vmatprep.subr.mxu0 0.0
      %3422 = vmatpush1.msra.mxu0 0.0
      %3423 = vmatprep.subr.mxu0 0.0
      %3424 = vmatpush1.msra.mxu0 0.0
      %3425 = vmatprep.subr.mxu0 0.0
      %3426 = vmatpush1.msra.mxu0 0.0
      %3427 = vmatprep.subr.mxu0 0.0
      %3428 = vmatpush1.msra.mxu0 0.0
      %3429 = vmatprep.subr.mxu0 0.0
      %3430 = vmatpush1.msra.mxu0 0.0
      %3431 = vmatprep.subr.mxu0 0.0
      %3432 = vmatpush1.msra.mxu0 0.0
      %3433 = vmatprep.subr.mxu0 0.0
      %3434 = vmatpush1.msra.mxu0 0.0
      %3435 = vmatprep.subr.mxu0 0.0
      %3436 = vmatpush1.msra.mxu0 0.0
      %3437 = vmatprep.subr.mxu0 0.0
      %3438 = vmatpush1.msra.mxu0 0.0
      %3439 = vmatprep.subr.mxu0 0.0
      %3440 = vmatpush1.msra.mxu0 0.0
      %3441 = vmatprep.subr.mxu0 0.0
      %3442 = vmatpush1.msra.mxu0 0.0
      %3443 = vmatprep.subr.mxu0 0.0
      %3444 = vmatpush1.msra.mxu0 0.0
      %3445 = vmatprep.subr.mxu0 0.0
      %3446 = vmatpush1.msra.mxu0 0.0
      %3447 = vmatprep.subr.mxu0 0.0
      %3448 = vmatpush1.msra.mxu0 0.0
      %3449 = vmatprep.subr.mxu0 0.0
      %3450 = vmatpush1.msra.mxu0 0.0
      %3451 = vmatprep.subr.mxu0 0.0
      %3452 = vmatpush1.msra.mxu0 0.0
      %3453 = vmatprep.subr.mxu0 0.0
      %3454 = vmatpush1.msra.mxu0 0.0
      %3455 = vmatprep.subr.mxu0 0.0
      %3456 = vmatpush1.msra.mxu0 0.0
      %3457 = vmatprep.subr.mxu0 0.0
      %3458 = vmatpush1.msra.mxu0 0.0
      %3459 = vmatprep.subr.mxu0 0.0
      %3460 = vmatpush1.msra.mxu0 0.0
      %3461 = vmatprep.subr.mxu0 0.0
      %3462 = vmatpush1.msra.mxu0 0.0
      %3463 = vmatprep.subr.mxu0 0.0
      %3464 = vmatpush1.msra.mxu0 0.0
      %3465 = vmatprep.mubr.f32.mxu0 0.0
      %v3466 = vand.u32 %v3096, 4294901760
      %3467 = vmatmul.mubr.f32.gmra.mrb[0].mxu0 %v3466
      %v3468 = vpop.f32.mrb[0].mxu0
      %v3469 = vadd.f32 %v3395, %v3468
      %v3470 = vpop.f32.mrb[0].mxu0
      %3471 = vdwg.mxu0
      %3472 = vmatprep.subr.mxu0 0.0
      %v3473 = vand.u32 %v3080, 4294901760
      %3474 = vmatpush1.msra.mxu0 %v3473
      %3475 = vmatprep.subr.mxu0 0.0
      %3476 = vmatpush1.msra.mxu0 0.0
      %3477 = vmatprep.subr.mxu0 0.0
      %3478 = vmatpush1.msra.mxu0 0.0
      %3479 = vmatprep.subr.mxu0 0.0
      %3480 = vmatpush1.msra.mxu0 0.0
      %3481 = vmatprep.subr.mxu0 0.0
      %3482 = vmatpush1.msra.mxu0 0.0
      %3483 = vmatprep.subr.mxu0 0.0
      %3484 = vmatpush1.msra.mxu0 0.0
      %3485 = vmatprep.subr.mxu0 0.0
      %3486 = vmatpush1.msra.mxu0 0.0
      %3487 = vmatprep.subr.mxu0 0.0
      %3488 = vmatpush1.msra.mxu0 0.0
      %3489 = vmatprep.subr.mxu0 0.0
      %3490 = vmatpush1.msra.mxu0 0.0
      %3491 = vmatprep.subr.mxu0 0.0
      %3492 = vmatpush1.msra.mxu0 0.0
      %3493 = vmatprep.subr.mxu0 0.0
      %3494 = vmatpush1.msra.mxu0 0.0
      %3495 = vmatprep.subr.mxu0 0.0
      %3496 = vmatpush1.msra.mxu0 0.0
      %3497 = vmatprep.subr.mxu0 0.0
      %3498 = vmatpush1.msra.mxu0 0.0
      %3499 = vmatprep.subr.mxu0 0.0
      %3500 = vmatpush1.msra.mxu0 0.0
      %3501 = vmatprep.subr.mxu0 0.0
      %3502 = vmatpush1.msra.mxu0 0.0
      %3503 = vmatprep.subr.mxu0 0.0
      %3504 = vmatpush1.msra.mxu0 0.0
      %3505 = vmatprep.subr.mxu0 0.0
      %3506 = vmatpush1.msra.mxu0 0.0
      %3507 = vmatprep.subr.mxu0 0.0
      %3508 = vmatpush1.msra.mxu0 0.0
      %3509 = vmatprep.subr.mxu0 0.0
      %3510 = vmatpush1.msra.mxu0 0.0
      %3511 = vmatprep.subr.mxu0 0.0
      %3512 = vmatpush1.msra.mxu0 0.0
      %3513 = vmatprep.subr.mxu0 0.0
      %3514 = vmatpush1.msra.mxu0 0.0
      %3515 = vmatprep.subr.mxu0 0.0
      %3516 = vmatpush1.msra.mxu0 0.0
      %3517 = vmatprep.subr.mxu0 0.0
      %3518 = vmatpush1.msra.mxu0 0.0
      %3519 = vmatprep.subr.mxu0 0.0
      %3520 = vmatpush1.msra.mxu0 0.0
      %3521 = vmatprep.subr.mxu0 0.0
      %3522 = vmatpush1.msra.mxu0 0.0
      %3523 = vmatprep.subr.mxu0 0.0
      %3524 = vmatpush1.msra.mxu0 0.0
      %3525 = vmatprep.subr.mxu0 0.0
      %3526 = vmatpush1.msra.mxu0 0.0
      %3527 = vmatprep.subr.mxu0 0.0
      %3528 = vmatpush1.msra.mxu0 0.0
      %3529 = vmatprep.subr.mxu0 0.0
      %3530 = vmatpush1.msra.mxu0 0.0
      %3531 = vmatprep.subr.mxu0 0.0
      %3532 = vmatpush1.msra.mxu0 0.0
      %3533 = vmatprep.subr.mxu0 0.0
      %3534 = vmatpush1.msra.mxu0 0.0
      %3535 = vmatprep.subr.mxu0 0.0
      %3536 = vmatpush1.msra.mxu0 0.0
      %3537 = vmatprep.mubr.f32.mxu0 0.0
      %v3538 = vand.u32 %v3096, 4294901760
      %3539 = vmatmul.mubr.f32.gmra.mrb[0].mxu0 %v3538
      %v3540 = vpop.f32.mrb[0].mxu0
      %v3541 = vadd.f32 %v3469, %v3540
      %v3542 = vpop.f32.mrb[0].mxu0
      %3543 = vdwg.mxu0
      %v3544 = vmax.f32 %v3541, 0.0
      %v3546 = vsel %vm3095, %v3089, 0
      %3548 = vmatprep.subr.mxu0 0.0
      %v3549 = vand.u32 %v3544, 4294901760
      %3550 = vmatpush1.msra.mxu0 %v3549
      %3551 = vmatprep.subr.mxu0 0.0
      %3552 = vmatpush1.msra.mxu0 0.0
      %3553 = vmatprep.subr.mxu0 0.0
      %3554 = vmatpush1.msra.mxu0 0.0
      %3555 = vmatprep.subr.mxu0 0.0
      %3556 = vmatpush1.msra.mxu0 0.0
      %3557 = vmatprep.subr.mxu0 0.0
      %3558 = vmatpush1.msra.mxu0 0.0
      %3559 = vmatprep.subr.mxu0 0.0
      %3560 = vmatpush1.msra.mxu0 0.0
      %3561 = vmatprep.subr.mxu0 0.0
      %3562 = vmatpush1.msra.mxu0 0.0
      %3563 = vmatprep.subr.mxu0 0.0
      %3564 = vmatpush1.msra.mxu0 0.0
      %3565 = vmatprep.subr.mxu0 0.0
      %3566 = vmatpush1.msra.mxu0 0.0
      %3567 = vmatprep.subr.mxu0 0.0
      %3568 = vmatpush1.msra.mxu0 0.0
      %3569 = vmatprep.subr.mxu0 0.0
      %3570 = vmatpush1.msra.mxu0 0.0
      %3571 = vmatprep.subr.mxu0 0.0
      %3572 = vmatpush1.msra.mxu0 0.0
      %3573 = vmatprep.subr.mxu0 0.0
      %3574 = vmatpush1.msra.mxu0 0.0
      %3575 = vmatprep.subr.mxu0 0.0
      %3576 = vmatpush1.msra.mxu0 0.0
      %3577 = vmatprep.subr.mxu0 0.0
      %3578 = vmatpush1.msra.mxu0 0.0
      %3579 = vmatprep.subr.mxu0 0.0
      %3580 = vmatpush1.msra.mxu0 0.0
      %3581 = vmatprep.subr.mxu0 0.0
      %3582 = vmatpush1.msra.mxu0 0.0
      %3583 = vmatprep.subr.mxu0 0.0
      %3584 = vmatpush1.msra.mxu0 0.0
      %3585 = vmatprep.subr.mxu0 0.0
      %3586 = vmatpush1.msra.mxu0 0.0
      %3587 = vmatprep.subr.mxu0 0.0
      %3588 = vmatpush1.msra.mxu0 0.0
      %3589 = vmatprep.subr.mxu0 0.0
      %3590 = vmatpush1.msra.mxu0 0.0
      %3591 = vmatprep.subr.mxu0 0.0
      %3592 = vmatpush1.msra.mxu0 0.0
      %3593 = vmatprep.subr.mxu0 0.0
      %3594 = vmatpush1.msra.mxu0 0.0
      %3595 = vmatprep.subr.mxu0 0.0
      %3596 = vmatpush1.msra.mxu0 0.0
      %3597 = vmatprep.subr.mxu0 0.0
      %3598 = vmatpush1.msra.mxu0 0.0
      %3599 = vmatprep.subr.mxu0 0.0
      %3600 = vmatpush1.msra.mxu0 0.0
      %3601 = vmatprep.subr.mxu0 0.0
      %3602 = vmatpush1.msra.mxu0 0.0
      %3603 = vmatprep.subr.mxu0 0.0
      %3604 = vmatpush1.msra.mxu0 0.0
      %3605 = vmatprep.subr.mxu0 0.0
      %3606 = vmatpush1.msra.mxu0 0.0
      %3607 = vmatprep.subr.mxu0 0.0
      %3608 = vmatpush1.msra.mxu0 0.0
      %3609 = vmatprep.subr.mxu0 0.0
      %3610 = vmatpush1.msra.mxu0 0.0
      %3611 = vmatprep.subr.mxu0 0.0
      %3612 = vmatpush1.msra.mxu0 0.0
      %3613 = vmatprep.mubr.f32.mxu0 0.0
      %v3614 = vand.u32 %v3546, 4294901760
      %v3615 = vsub.f32 %v3546, %v3614
      %v3616 = vand.u32 %v3615, 4294901760
      %v3617 = vsub.f32 %v3615, %v3616
      %v3618 = vand.u32 %v3617, 4294901760
      %3619 = vmatmul.mubr.f32.gmra.mrb[0].mxu0 %v3618
      %v3620 = vpop.f32.mrb[0].mxu0
      %v3621 = vadd.f32 %v3092, %v3620
      %v3622 = vpop.f32.mrb[0].mxu0
      %3623 = vdwg.mxu0
      %3624 = vmatprep.subr.mxu0 0.0
      %v3625 = vand.u32 %v3544, 4294901760
      %v3626 = vsub.f32 %v3544, %v3625
      %v3627 = vand.u32 %v3626, 4294901760
      %v3628 = vsub.f32 %v3626, %v3627
      %v3629 = vand.u32 %v3628, 4294901760
      %3630 = vmatpush1.msra.mxu0 %v3629
      %3631 = vmatprep.subr.mxu0 0.0
      %3632 = vmatpush1.msra.mxu0 0.0
      %3633 = vmatprep.subr.mxu0 0.0
      %3634 = vmatpush1.msra.mxu0 0.0
      %3635 = vmatprep.subr.mxu0 0.0
      %3636 = vmatpush1.msra.mxu0 0.0
      %3637 = vmatprep.subr.mxu0 0.0
      %3638 = vmatpush1.msra.mxu0 0.0
      %3639 = vmatprep.subr.mxu0 0.0
      %3640 = vmatpush1.msra.mxu0 0.0
      %3641 = vmatprep.subr.mxu0 0.0
      %3642 = vmatpush1.msra.mxu0 0.0
      %3643 = vmatprep.subr.mxu0 0.0
      %3644 = vmatpush1.msra.mxu0 0.0
      %3645 = vmatprep.subr.mxu0 0.0
      %3646 = vmatpush1.msra.mxu0 0.0
      %3647 = vmatprep.subr.mxu0 0.0
      %3648 = vmatpush1.msra.mxu0 0.0
      %3649 = vmatprep.subr.mxu0 0.0
      %3650 = vmatpush1.msra.mxu0 0.0
      %3651 = vmatprep.subr.mxu0 0.0
      %3652 = vmatpush1.msra.mxu0 0.0
      %3653 = vmatprep.subr.mxu0 0.0
      %3654 = vmatpush1.msra.mxu0 0.0
      %3655 = vmatprep.subr.mxu0 0.0
      %3656 = vmatpush1.msra.mxu0 0.0
      %3657 = vmatprep.subr.mxu0 0.0
      %3658 = vmatpush1.msra.mxu0 0.0
      %3659 = vmatprep.subr.mxu0 0.0
      %3660 = vmatpush1.msra.mxu0 0.0
      %3661 = vmatprep.subr.mxu0 0.0
      %3662 = vmatpush1.msra.mxu0 0.0
      %3663 = vmatprep.subr.mxu0 0.0
      %3664 = vmatpush1.msra.mxu0 0.0
      %3665 = vmatprep.subr.mxu0 0.0
      %3666 = vmatpush1.msra.mxu0 0.0
      %3667 = vmatprep.subr.mxu0 0.0
      %3668 = vmatpush1.msra.mxu0 0.0
      %3669 = vmatprep.subr.mxu0 0.0
      %3670 = vmatpush1.msra.mxu0 0.0
      %3671 = vmatprep.subr.mxu0 0.0
      %3672 = vmatpush1.msra.mxu0 0.0
      %3673 = vmatprep.subr.mxu0 0.0
      %3674 = vmatpush1.msra.mxu0 0.0
      %3675 = vmatprep.subr.mxu0 0.0
      %3676 = vmatpush1.msra.mxu0 0.0
      %3677 = vmatprep.subr.mxu0 0.0
      %3678 = vmatpush1.msra.mxu0 0.0
      %3679 = vmatprep.subr.mxu0 0.0
      %3680 = vmatpush1.msra.mxu0 0.0
      %3681 = vmatprep.subr.mxu0 0.0
      %3682 = vmatpush1.msra.mxu0 0.0
      %3683 = vmatprep.subr.mxu0 0.0
      %3684 = vmatpush1.msra.mxu0 0.0
      %3685 = vmatprep.subr.mxu0 0.0
      %3686 = vmatpush1.msra.mxu0 0.0
      %3687 = vmatprep.subr.mxu0 0.0
      %3688 = vmatpush1.msra.mxu0 0.0
      %3689 = vmatprep.subr.mxu0 0.0
      %3690 = vmatpush1.msra.mxu0 0.0
      %3691 = vmatprep.subr.mxu0 0.0
      %3692 = vmatpush1.msra.mxu0 0.0
      %3693 = vmatprep.mubr.f32.mxu0 0.0
      %v3694 = vand.u32 %v3546, 4294901760
      %3695 = vmatmul.mubr.f32.gmra.mrb[0].mxu0 %v3694
      %v3696 = vpop.f32.mrb[0].mxu0
      %v3697 = vadd.f32 %v3621, %v3696
      %v3698 = vpop.f32.mrb[0].mxu0
      %3699 = vdwg.mxu0
      %3700 = vmatprep.subr.mxu0 0.0
      %v3701 = vand.u32 %v3544, 4294901760
      %v3702 = vsub.f32 %v3544, %v3701
      %3703 = vmatpush1.msra.mxu0 %v3702
      %3704 = vmatprep.subr.mxu0 0.0
      %3705 = vmatpush1.msra.mxu0 0.0
      %3706 = vmatprep.subr.mxu0 0.0
      %3707 = vmatpush1.msra.mxu0 0.0
      %3708 = vmatprep.subr.mxu0 0.0
      %3709 = vmatpush1.msra.mxu0 0.0
      %3710 = vmatprep.subr.mxu0 0.0
      %3711 = vmatpush1.msra.mxu0 0.0
      %3712 = vmatprep.subr.mxu0 0.0
      %3713 = vmatpush1.msra.mxu0 0.0
      %3714 = vmatprep.subr.mxu0 0.0
      %3715 = vmatpush1.msra.mxu0 0.0
      %3716 = vmatprep.subr.mxu0 0.0
      %3717 = vmatpush1.msra.mxu0 0.0
      %3718 = vmatprep.subr.mxu0 0.0
      %3719 = vmatpush1.msra.mxu0 0.0
      %3720 = vmatprep.subr.mxu0 0.0
      %3721 = vmatpush1.msra.mxu0 0.0
      %3722 = vmatprep.subr.mxu0 0.0
      %3723 = vmatpush1.msra.mxu0 0.0
      %3724 = vmatprep.subr.mxu0 0.0
      %3725 = vmatpush1.msra.mxu0 0.0
      %3726 = vmatprep.subr.mxu0 0.0
      %3727 = vmatpush1.msra.mxu0 0.0
      %3728 = vmatprep.subr.mxu0 0.0
      %3729 = vmatpush1.msra.mxu0 0.0
      %3730 = vmatprep.subr.mxu0 0.0
      %3731 = vmatpush1.msra.mxu0 0.0
      %3732 = vmatprep.subr.mxu0 0.0
      %3733 = vmatpush1.msra.mxu0 0.0
      %3734 = vmatprep.subr.mxu0 0.0
      %3735 = vmatpush1.msra.mxu0 0.0
      %3736 = vmatprep.subr.mxu0 0.0
      %3737 = vmatpush1.msra.mxu0 0.0
      %3738 = vmatprep.subr.mxu0 0.0
      %3739 = vmatpush1.msra.mxu0 0.0
      %3740 = vmatprep.subr.mxu0 0.0
      %3741 = vmatpush1.msra.mxu0 0.0
      %3742 = vmatprep.subr.mxu0 0.0
      %3743 = vmatpush1.msra.mxu0 0.0
      %3744 = vmatprep.subr.mxu0 0.0
      %3745 = vmatpush1.msra.mxu0 0.0
      %3746 = vmatprep.subr.mxu0 0.0
      %3747 = vmatpush1.msra.mxu0 0.0
      %3748 = vmatprep.subr.mxu0 0.0
      %3749 = vmatpush1.msra.mxu0 0.0
      %3750 = vmatprep.subr.mxu0 0.0
      %3751 = vmatpush1.msra.mxu0 0.0
      %3752 = vmatprep.subr.mxu0 0.0
      %3753 = vmatpush1.msra.mxu0 0.0
      %3754 = vmatprep.subr.mxu0 0.0
      %3755 = vmatpush1.msra.mxu0 0.0
      %3756 = vmatprep.subr.mxu0 0.0
      %3757 = vmatpush1.msra.mxu0 0.0
      %3758 = vmatprep.subr.mxu0 0.0
      %3759 = vmatpush1.msra.mxu0 0.0
      %3760 = vmatprep.subr.mxu0 0.0
      %3761 = vmatpush1.msra.mxu0 0.0
      %3762 = vmatprep.subr.mxu0 0.0
      %3763 = vmatpush1.msra.mxu0 0.0
      %3764 = vmatprep.subr.mxu0 0.0
      %3765 = vmatpush1.msra.mxu0 0.0
      %3766 = vmatprep.mubr.f32.mxu0 0.0
      %v3767 = vand.u32 %v3546, 4294901760
      %v3768 = vsub.f32 %v3546, %v3767
      %3769 = vmatmul.mubr.f32.gmra.mrb[0].mxu0 %v3768
      %v3770 = vpop.f32.mrb[0].mxu0
      %v3771 = vadd.f32 %v3697, %v3770
      %v3772 = vpop.f32.mrb[0].mxu0
      %3773 = vdwg.mxu0
      %3774 = vmatprep.subr.mxu0 0.0
      %v3775 = vand.u32 %v3544, 4294901760
      %3776 = vmatpush1.msra.mxu0 %v3775
      %3777 = vmatprep.subr.mxu0 0.0
      %3778 = vmatpush1.msra.mxu0 0.0
      %3779 = vmatprep.subr.mxu0 0.0
      %3780 = vmatpush1.msra.mxu0 0.0
      %3781 = vmatprep.subr.mxu0 0.0
      %3782 = vmatpush1.msra.mxu0 0.0
      %3783 = vmatprep.subr.mxu0 0.0
      %3784 = vmatpush1.msra.mxu0 0.0
      %3785 = vmatprep.subr.mxu0 0.0
      %3786 = vmatpush1.msra.mxu0 0.0
      %3787 = vmatprep.subr.mxu0 0.0
      %3788 = vmatpush1.msra.mxu0 0.0
      %3789 = vmatprep.subr.mxu0 0.0
      %3790 = vmatpush1.msra.mxu0 0.0
      %3791 = vmatprep.subr.mxu0 0.0
      %3792 = vmatpush1.msra.mxu0 0.0
      %3793 = vmatprep.subr.mxu0 0.0
      %3794 = vmatpush1.msra.mxu0 0.0
      %3795 = vmatprep.subr.mxu0 0.0
      %3796 = vmatpush1.msra.mxu0 0.0
      %3797 = vmatprep.subr.mxu0 0.0
      %3798 = vmatpush1.msra.mxu0 0.0
      %3799 = vmatprep.subr.mxu0 0.0
      %3800 = vmatpush1.msra.mxu0 0.0
      %3801 = vmatprep.subr.mxu0 0.0
      %3802 = vmatpush1.msra.mxu0 0.0
      %3803 = vmatprep.subr.mxu0 0.0
      %3804 = vmatpush1.msra.mxu0 0.0
      %3805 = vmatprep.subr.mxu0 0.0
      %3806 = vmatpush1.msra.mxu0 0.0
      %3807 = vmatprep.subr.mxu0 0.0
      %3808 = vmatpush1.msra.mxu0 0.0
      %3809 = vmatprep.subr.mxu0 0.0
      %3810 = vmatpush1.msra.mxu0 0.0
      %3811 = vmatprep.subr.mxu0 0.0
      %3812 = vmatpush1.msra.mxu0 0.0
      %3813 = vmatprep.subr.mxu0 0.0
      %3814 = vmatpush1.msra.mxu0 0.0
      %3815 = vmatprep.subr.mxu0 0.0
      %3816 = vmatpush1.msra.mxu0 0.0
      %3817 = vmatprep.subr.mxu0 0.0
      %3818 = vmatpush1.msra.mxu0 0.0
      %3819 = vmatprep.subr.mxu0 0.0
      %3820 = vmatpush1.msra.mxu0 0.0
      %3821 = vmatprep.subr.mxu0 0.0
      %3822 = vmatpush1.msra.mxu0 0.0
      %3823 = vmatprep.subr.mxu0 0.0
      %3824 = vmatpush1.msra.mxu0 0.0
      %3825 = vmatprep.subr.mxu0 0.0
      %3826 = vmatpush1.msra.mxu0 0.0
      %3827 = vmatprep.subr.mxu0 0.0
      %3828 = vmatpush1.msra.mxu0 0.0
      %3829 = vmatprep.subr.mxu0 0.0
      %3830 = vmatpush1.msra.mxu0 0.0
      %3831 = vmatprep.subr.mxu0 0.0
      %3832 = vmatpush1.msra.mxu0 0.0
      %3833 = vmatprep.subr.mxu0 0.0
      %3834 = vmatpush1.msra.mxu0 0.0
      %3835 = vmatprep.subr.mxu0 0.0
      %3836 = vmatpush1.msra.mxu0 0.0
      %3837 = vmatprep.subr.mxu0 0.0
      %3838 = vmatpush1.msra.mxu0 0.0
      %3839 = vmatprep.mubr.f32.mxu0 0.0
      %v3840 = vand.u32 %v3546, 4294901760
      %v3841 = vsub.f32 %v3546, %v3840
      %v3842 = vand.u32 %v3841, 4294901760
      %3843 = vmatmul.mubr.f32.gmra.mrb[0].mxu0 %v3842
      %v3844 = vpop.f32.mrb[0].mxu0
      %v3845 = vadd.f32 %v3771, %v3844
      %v3846 = vpop.f32.mrb[0].mxu0
      %3847 = vdwg.mxu0
      %3848 = vmatprep.subr.mxu0 0.0
      %v3849 = vand.u32 %v3544, 4294901760
      %v3850 = vsub.f32 %v3544, %v3849
      %v3851 = vand.u32 %v3850, 4294901760
      %3852 = vmatpush1.msra.mxu0 %v3851
      %3853 = vmatprep.subr.mxu0 0.0
      %3854 = vmatpush1.msra.mxu0 0.0
      %3855 = vmatprep.subr.mxu0 0.0
      %3856 = vmatpush1.msra.mxu0 0.0
      %3857 = vmatprep.subr.mxu0 0.0
      %3858 = vmatpush1.msra.mxu0 0.0
      %3859 = vmatprep.subr.mxu0 0.0
      %3860 = vmatpush1.msra.mxu0 0.0
      %3861 = vmatprep.subr.mxu0 0.0
      %3862 = vmatpush1.msra.mxu0 0.0
      %3863 = vmatprep.subr.mxu0 0.0
      %3864 = vmatpush1.msra.mxu0 0.0
      %3865 = vmatprep.subr.mxu0 0.0
      %3866 = vmatpush1.msra.mxu0 0.0
      %3867 = vmatprep.subr.mxu0 0.0
      %3868 = vmatpush1.msra.mxu0 0.0
      %3869 = vmatprep.subr.mxu0 0.0
      %3870 = vmatpush1.msra.mxu0 0.0
      %3871 = vmatprep.subr.mxu0 0.0
      %3872 = vmatpush1.msra.mxu0 0.0
      %3873 = vmatprep.subr.mxu0 0.0
      %3874 = vmatpush1.msra.mxu0 0.0
      %3875 = vmatprep.subr.mxu0 0.0
      %3876 = vmatpush1.msra.mxu0 0.0
      %3877 = vmatprep.subr.mxu0 0.0
      %3878 = vmatpush1.msra.mxu0 0.0
      %3879 = vmatprep.subr.mxu0 0.0
      %3880 = vmatpush1.msra.mxu0 0.0
      %3881 = vmatprep.subr.mxu0 0.0
      %3882 = vmatpush1.msra.mxu0 0.0
      %3883 = vmatprep.subr.mxu0 0.0
      %3884 = vmatpush1.msra.mxu0 0.0
      %3885 = vmatprep.subr.mxu0 0.0
      %3886 = vmatpush1.msra.mxu0 0.0
      %3887 = vmatprep.subr.mxu0 0.0
      %3888 = vmatpush1.msra.mxu0 0.0
      %3889 = vmatprep.subr.mxu0 0.0
      %3890 = vmatpush1.msra.mxu0 0.0
      %3891 = vmatprep.subr.mxu0 0.0
      %3892 = vmatpush1.msra.mxu0 0.0
      %3893 = vmatprep.subr.mxu0 0.0
      %3894 = vmatpush1.msra.mxu0 0.0
      %3895 = vmatprep.subr.mxu0 0.0
      %3896 = vmatpush1.msra.mxu0 0.0
      %3897 = vmatprep.subr.mxu0 0.0
      %3898 = vmatpush1.msra.mxu0 0.0
      %3899 = vmatprep.subr.mxu0 0.0
      %3900 = vmatpush1.msra.mxu0 0.0
      %3901 = vmatprep.subr.mxu0 0.0
      %3902 = vmatpush1.msra.mxu0 0.0
      %3903 = vmatprep.subr.mxu0 0.0
      %3904 = vmatpush1.msra.mxu0 0.0
      %3905 = vmatprep.subr.mxu0 0.0
      %3906 = vmatpush1.msra.mxu0 0.0
      %3907 = vmatprep.subr.mxu0 0.0
      %3908 = vmatpush1.msra.mxu0 0.0
      %3909 = vmatprep.subr.mxu0 0.0
      %3910 = vmatpush1.msra.mxu0 0.0
      %3911 = vmatprep.subr.mxu0 0.0
      %3912 = vmatpush1.msra.mxu0 0.0
      %3913 = vmatprep.subr.mxu0 0.0
      %3914 = vmatpush1.msra.mxu0 0.0
      %3915 = vmatprep.mubr.f32.mxu0 0.0
      %v3916 = vand.u32 %v3546, 4294901760
      %3917 = vmatmul.mubr.f32.gmra.mrb[0].mxu0 %v3916
      %v3918 = vpop.f32.mrb[0].mxu0
      %v3919 = vadd.f32 %v3845, %v3918
      %v3920 = vpop.f32.mrb[0].mxu0
      %3921 = vdwg.mxu0
      %3922 = vmatprep.subr.mxu0 0.0
      %v3923 = vand.u32 %v3544, 4294901760
      %3924 = vmatpush1.msra.mxu0 %v3923
      %3925 = vmatprep.subr.mxu0 0.0
      %3926 = vmatpush1.msra.mxu0 0.0
      %3927 = vmatprep.subr.mxu0 0.0
      %3928 = vmatpush1.msra.mxu0 0.0
      %3929 = vmatprep.subr.mxu0 0.0
      %3930 = vmatpush1.msra.mxu0 0.0
      %3931 = vmatprep.subr.mxu0 0.0
      %3932 = vmatpush1.msra.mxu0 0.0
      %3933 = vmatprep.subr.mxu0 0.0
      %3934 = vmatpush1.msra.mxu0 0.0
      %3935 = vmatprep.subr.mxu0 0.0
      %3936 = vmatpush1.msra.mxu0 0.0
      %3937 = vmatprep.subr.mxu0 0.0
      %3938 = vmatpush1.msra.mxu0 0.0
      %3939 = vmatprep.subr.mxu0 0.0
      %3940 = vmatpush1.msra.mxu0 0.0
      %3941 = vmatprep.subr.mxu0 0.0
      %3942 = vmatpush1.msra.mxu0 0.0
      %3943 = vmatprep.subr.mxu0 0.0
      %3944 = vmatpush1.msra.mxu0 0.0
      %3945 = vmatprep.subr.mxu0 0.0
      %3946 = vmatpush1.msra.mxu0 0.0
      %3947 = vmatprep.subr.mxu0 0.0
      %3948 = vmatpush1.msra.mxu0 0.0
      %3949 = vmatprep.subr.mxu0 0.0
      %3950 = vmatpush1.msra.mxu0 0.0
      %3951 = vmatprep.subr.mxu0 0.0
      %3952 = vmatpush1.msra.mxu0 0.0
      %3953 = vmatprep.subr.mxu0 0.0
      %3954 = vmatpush1.msra.mxu0 0.0
      %3955 = vmatprep.subr.mxu0 0.0
      %3956 = vmatpush1.msra.mxu0 0.0
      %3957 = vmatprep.subr.mxu0 0.0
      %3958 = vmatpush1.msra.mxu0 0.0
      %3959 = vmatprep.subr.mxu0 0.0
      %3960 = vmatpush1.msra.mxu0 0.0
      %3961 = vmatprep.subr.mxu0 0.0
      %3962 = vmatpush1.msra.mxu0 0.0
      %3963 = vmatprep.subr.mxu0 0.0
      %3964 = vmatpush1.msra.mxu0 0.0
      %3965 = vmatprep.subr.mxu0 0.0
      %3966 = vmatpush1.msra.mxu0 0.0
      %3967 = vmatprep.subr.mxu0 0.0
      %3968 = vmatpush1.msra.mxu0 0.0
      %3969 = vmatprep.subr.mxu0 0.0
      %3970 = vmatpush1.msra.mxu0 0.0
      %3971 = vmatprep.subr.mxu0 0.0
      %3972 = vmatpush1.msra.mxu0 0.0
      %3973 = vmatprep.subr.mxu0 0.0
      %3974 = vmatpush1.msra.mxu0 0.0
      %3975 = vmatprep.subr.mxu0 0.0
      %3976 = vmatpush1.msra.mxu0 0.0
      %3977 = vmatprep.subr.mxu0 0.0
      %3978 = vmatpush1.msra.mxu0 0.0
      %3979 = vmatprep.subr.mxu0 0.0
      %3980 = vmatpush1.msra.mxu0 0.0
      %3981 = vmatprep.subr.mxu0 0.0
      %3982 = vmatpush1.msra.mxu0 0.0
      %3983 = vmatprep.subr.mxu0 0.0
      %3984 = vmatpush1.msra.mxu0 0.0
      %3985 = vmatprep.subr.mxu0 0.0
      %3986 = vmatpush1.msra.mxu0 0.0
      %3987 = vmatprep.mubr.f32.mxu0 0.0
      %v3988 = vand.u32 %v3546, 4294901760
      %3989 = vmatmul.mubr.f32.gmra.mrb[0].mxu0 %v3988
      %v3990 = vpop.f32.mrb[0].mxu0
      %v3991 = vadd.f32 %v3919, %v3990
      %v3992 = vpop.f32.mrb[0].mxu0
      %3993 = vdwg.mxu0
      %v3994 = vadd.f32 %v3991, %v139
      %3995 = vst.msk [vmem:[%s138] sm:$0xf] %vm601, %v3994
      %p3996 = scmp.lt.s32.totalorder %s13, 1
      %s3997 = scalar_select %p3996, %s13, 1
      %s3998 = smul.addr %s3997, 4
      %s3999 = scalar_lea.vmem %s2, %s3998
      // Predicated region
      $region29: #{grapher_forward.1} parent=27 // pred_check
        %p4000 = pneg %p78
      $region30: #{grapher_forward.1} parent=27 // pred_check_branch
        %4002 = sbr.rel (%p4000) target = $region32
      $region31: #{grapher_forward.1} parent=27 // pred_region
        _
      $region32: #{grapher_forward.1} parent=27 // pred_fallthru
        _
    $region28: #{grapher_forward.1} parent=5 // pred_fallthru
      _
    %p4003 = scmp.le.s32.totalorder 2, %s8
    // Predicated region
    $region33: #{grapher_forward.1} parent=5 // pred_check
      %p4004 = pneg %p4003
    $region34: #{grapher_forward.1} parent=5 // pred_check_branch
      %4006 = sbr.rel (%p4004) target = $region36
    $region35: #{grapher_forward.1} parent=5 // pred_region
      %s4007 = ssub.s32 %s8, 2
      // Predicated region
      $region37: #{grapher_forward.1} parent=35 // pred_check
        %p4008 = pneg %p84
      $region38: #{grapher_forward.1} parent=35 // pred_check_branch
        %4010 = sbr.rel (%p4008) target = $region40
      $region39: #{grapher_forward.1} parent=35 // pred_region
        %p4011 = scmp.lt.s32.totalorder %s14, 1
        %s4012 = scalar_select %p4011, %s14, 1
        %s4013 = smul.addr %s4012, 4
        %s4014 = scalar_lea.vmem %s2, %s4013
      $region40: #{grapher_forward.1} parent=35 // pred_fallthru
        _
    $region36: #{grapher_forward.1} parent=5 // pred_fallthru
      _
  $region6: #{grapher_forward.1} parent=0 // loop_footer
    %s12 = sadd.s32 1, %s8
  $region7: #{grapher_forward.1} parent=0 // loop_footer_branch
    %7 = sbr.rel target = $region3
  $region8: #{grapher_forward.1} parent=0 // loop_exit
    _

</llo_original>
